<compile_context>
chip_gen: v5e
topology: v5e:2x2
jax: 0.10.0
libtpu: 0.0.40
codegen_flags: <defaults>
</compile_context>

<pallas_src>
import jax
import jax.numpy as jnp
from jax import lax
from jax.experimental import pallas as pl
from jax.experimental.pallas import tpu as pltpu  # noqa: F401  (TPU backend)

# ---- "args" ----------------------------------------------------------------
B, T, S = 2, 8, 8          # batch, target length, source length
D = 64                     # decoder_embed_dim
H, HD = 4, 16              # decoder_attention_heads, head_dim
FFN = 128                  # decoder_ffn_embed_dim
L = 2                      # predictor_layers
PAD = 1                    # padding_idx
MAXPOS = 32                # max_target_positions
EPS = 1e-5
NEG = -1e9                 # stand-in for float('-inf') key-padding masking


# ---- in-kernel helpers ------------------------------------------------------
def _layer_norm(x, g, b):
    # x: (N, D) f32, g/b: (1, D) f32
    mu = jnp.mean(x, axis=-1, keepdims=True)
    var = jnp.mean((x - mu) ** 2, axis=-1, keepdims=True)
    return (x - mu) * lax.rsqrt(var + EPS) * g + b


def _attention(q, k, v, mask_add, wo, bo, need_probs):
    """fairseq MultiheadAttention (eval), batch folded into rows.

    q        : (B*T, D) f32   (q-scaling already folded into the projection)
    k, v     : (B*Sk, D) f32
    mask_add : (B*T, B*Sk) f32 additive mask: 0 inside own batch block on
               non-padded keys, -1e9 elsewhere (cross-batch + key padding).
    wo       : (D, D) bf16, bo: (1, D) f32
    Heads stay in lanes; per-head score/ctx matmuls use static 16-lane slices.
    """
    qb = q.astype(jnp.bfloat16)
    kb = k.astype(jnp.bfloat16)
    vb = v.astype(jnp.bfloat16)

    ctx_heads = []
    probs_acc = None
    for h in range(H):
        sl = slice(h * HD, (h + 1) * HD)
        s = jnp.einsum('td,sd->ts', qb[:, sl], kb[:, sl],
                       preferred_element_type=jnp.float32)          # (BT, BSk) f32
        s = s + mask_add
        m = jnp.max(s, axis=-1, keepdims=True)
        e = jnp.exp(s - m)                                           # exactly 0 at -1e9
        den = jnp.sum(e, axis=-1, keepdims=True)
        if need_probs:
            p = e / den                                              # exact (returned)
            probs_acc = p if probs_acc is None else probs_acc + p
        else:
            p = e * pl.reciprocal(den, approx=True)                  # EUP slot
        ctx_heads.append(jnp.dot(p.astype(jnp.bfloat16), vb[:, sl],
                                 preferred_element_type=jnp.float32))  # (BT, HD)

    ctx = jnp.concatenate(ctx_heads, axis=-1)                        # (BT, H*HD) = (BT, D)
    out = jnp.dot(ctx.astype(jnp.bfloat16), wo,
                  preferred_element_type=jnp.float32) + bo           # fused out-proj
    if need_probs:
        return out, probs_acc * (1.0 / H)                            # head-mean probs
    return out, None


# ---- the decoder kernel (single step: whole batch) --------------------------
def decoder_kernel(x_ref, enc_ref, smask_ref, cmask_ref,
                   s_wqkv_ref, s_bqkv_ref, s_wo_ref, s_bo_ref,
                   c_wq_ref, c_bq_ref, c_wkv_ref, c_bkv_ref, c_wo_ref, c_bo_ref,
                   lng_ref, lnb_ref,
                   f1w_ref, f1b_ref, f2w_ref, f2b_ref,
                   flg_ref, flb_ref,
                   out_ref, attn_ref, inner_ref):
    x = x_ref[...]                                    # (B*T, D) f32, pos-emb already added
    enc = enc_ref[...].astype(jnp.bfloat16)           # (B*S, D) bf16, hoisted for all layers
    smask = smask_ref[...]                            # (B*T, B*T) additive
    cmask = cmask_ref[...]                            # (B*T, B*S) additive

    for l in range(L):
        need_attn = (l == L - 1)                      # alignment layer

        # --- self-attention block (pre-norm) ---
        residual = x
        h = _layer_norm(x, lng_ref[l, 0:1], lnb_ref[l, 0:1]).astype(jnp.bfloat16)
        qkv = jnp.dot(h, s_wqkv_ref[l],
                      preferred_element_type=jnp.float32) + s_bqkv_ref[l]   # (BT, 3D)
        sa, _ = _attention(qkv[:, :D], qkv[:, D:2 * D], qkv[:, 2 * D:], smask,
                           s_wo_ref[l], s_bo_ref[l], need_probs=False)
        x = residual + sa

        # --- encoder (cross) attention block ---
        residual = x
        h = _layer_norm(x, lng_ref[l, 1:2], lnb_ref[l, 1:2]).astype(jnp.bfloat16)
        q = jnp.dot(h, c_wq_ref[l],
                    preferred_element_type=jnp.float32) + c_bq_ref[l]       # (BT, D)
        kv = jnp.dot(enc, c_wkv_ref[l],
                     preferred_element_type=jnp.float32) + c_bkv_ref[l]     # (BS, 2D)
        ca, probs = _attention(q, kv[:, :D], kv[:, D:], cmask,
                               c_wo_ref[l], c_bo_ref[l], need_probs=need_attn)
        x = residual + ca

        # --- feed-forward block ---
        residual = x
        h = _layer_norm(x, lng_ref[l, 2:3], lnb_ref[l, 2:3]).astype(jnp.bfloat16)
        h = jnp.maximum(
            jnp.dot(h, f1w_ref[l], preferred_element_type=jnp.float32) + f1b_ref[l],
            0.0)                                                            # ReLU
        h = jnp.dot(h.astype(jnp.bfloat16), f2w_ref[l],
                    preferred_element_type=jnp.float32) + f2b_ref[l]
        x = residual + h

        inner_ref[l] = x                              # inner_states[l]
        if need_attn:
            attn_ref[...] = probs                     # head-mean cross-attn probs

    # final decoder LayerNorm (decoder_normalize_before=True)
    out_ref[...] = _layer_norm(x, flg_ref[...], flb_ref[...])


# ---- wrapper (glue in plain JAX) --------------------------------------------
@jax.jit
def multi_att_decoder(inputs, decoder_padding_mask, encoder_out, encoder_padding_mask, params):
    # pos_tokens = mask*padding_idx + (1-mask)*(padding_idx+1)
    m = decoder_padding_mask.astype(jnp.int32)
    pos_tokens = m * PAD + (1 - m) * (PAD + 1)
    # fairseq make_positions + learned nn.Embedding lookup (gather = glue)
    nonpad = (pos_tokens != PAD).astype(jnp.int32)
    positions = jnp.cumsum(nonpad, axis=1) * nonpad + PAD
    pos_emb = params["pos_table"][positions]                         # (B, T, D)

    # forward_embedding (eval: dropout identity, layernorm_embedding disabled)
    x0 = (inputs + pos_emb).reshape(B * T, D)                        # done in XLA (fused)
    enc = encoder_out.reshape(B * S, D)

    # precomputed additive masks: block-diagonal over batch + key padding
    dec_pad = decoder_padding_mask.reshape(B * T).astype(jnp.float32)
    enc_pad = encoder_padding_mask.reshape(B * S).astype(jnp.float32)
    same_tt = jnp.kron(jnp.eye(B, dtype=jnp.float32), jnp.ones((T, T), jnp.float32))
    same_ts = jnp.kron(jnp.eye(B, dtype=jnp.float32), jnp.ones((T, S), jnp.float32))
    self_mask = jnp.where((same_tt > 0.5) & (dec_pad[None, :] < 0.5),
                          0.0, NEG).astype(jnp.float32)              # (BT, BT)
    cross_mask = jnp.where((same_ts > 0.5) & (enc_pad[None, :] < 0.5),
                           0.0, NEG).astype(jnp.float32)             # (BT, BS)

    args = (x0, enc, self_mask, cross_mask,
            params["s_wqkv"], params["s_bqkv"], params["s_wo"], params["s_bo"],
            params["c_wq"], params["c_bq"], params["c_wkv"], params["c_bkv"],
            params["c_wo"], params["c_bo"],
            params["lng"], params["lnb"],
            params["f1w"], params["f1b"], params["f2w"], params["f2b"],
            params["flg"], params["flb"])

    out_shape = [
        jax.ShapeDtypeStruct((B * T, D), jnp.float32),               # out
        jax.ShapeDtypeStruct((B * T, B * S), jnp.float32),           # attn (batch-block-diag)
        jax.ShapeDtypeStruct((L, B * T, D), jnp.float32),            # inner states
    ]

    # Single kernel step, no grid: every operand is small and lives whole in
    # VMEM (total footprint << 1 MiB on all generations, incl. v7x's 64 MiB).
    out_flat, attn_full, inner = pl.pallas_call(decoder_kernel, out_shape=out_shape)(*args)

    out = out_flat.reshape(B, T, D)
    # cross-batch blocks of attn_full are exactly zero (exp underflow), so a
    # sum over the key-batch axis extracts the per-batch (T, S) blocks.
    attn = attn_full.reshape(B, T, B, S).sum(axis=2)                 # (B, T, S)
    # fairseq keeps inner_states time-first (T, B, D); transpose is glue.
    inner_states = [inner[l].reshape(B, T, D).swapaxes(0, 1) for l in range(L)]
    return out, {"attn": [attn], "inner_states": inner_states}


# ---- parameters -------------------------------------------------------------
def init_params(key):
    """Dense, torch-like parameter layout (Linear weights pre-transposed to (in,out))."""
    ks = jax.random.split(key, 9)

    def nrm(k, shape, scale=0.05):
        return (scale * jax.random.normal(k, shape)).astype(jnp.float32)

    pos_table = nrm(ks[0], (MAXPOS + PAD + 1, D))
    pos_table = pos_table.at[PAD].set(0.0)   # nn.Embedding padding_idx row is zero
    return dict(
        pos_table=pos_table,
        saw=nrm(ks[1], (L, 4, D, D)), sab=nrm(ks[2], (L, 4, D)),   # [q,k,v,out] per layer
        eaw=nrm(ks[3], (L, 4, D, D)), eab=nrm(ks[4], (L, 4, D)),
        lng=jnp.ones((L, 3, D), jnp.float32), lnb=jnp.zeros((L, 3, D), jnp.float32),
        f1w=nrm(ks[5], (L, D, FFN)), f1b=nrm(ks[6], (L, FFN)),
        f2w=nrm(ks[7], (L, FFN, D)), f2b=nrm(ks[8], (L, D)),
        flg=jnp.ones((1, D), jnp.float32), flb=jnp.zeros((1, D), jnp.float32),
    )
    # TODO(synk): output_projection (Linear D -> vq_num, bias=False) exists in
    # __init__ but is never called in forward(); intentionally not instantiated.


def pack_params(p):
    """One-time re-layout for the kernel: lane-dense fused projection weights,
    q-scaling folded into Wq/bq, bf16 matmul weights, f32 biases/LN params."""
    scale = float(HD) ** -0.5
    saw, sab, eaw, eab = p["saw"], p["sab"], p["eaw"], p["eab"]

    # self-attention: fused (D, 3D) qkv projection, q-scaling folded in
    s_wqkv = jnp.concatenate([saw[:, 0] * scale, saw[:, 1], saw[:, 2]],
                             axis=-1).astype(jnp.bfloat16)                 # (L, D, 3D)
    s_bqkv = jnp.concatenate([sab[:, 0] * scale, sab[:, 1], sab[:, 2]],
                             axis=-1).reshape(L, 1, 3 * D)                 # (L, 1, 3D)
    s_wo = saw[:, 3].astype(jnp.bfloat16)                                  # (L, D, D)
    s_bo = sab[:, 3].reshape(L, 1, D)

    # cross-attention: q projection (D, D) + fused (D, 2D) kv projection
    c_wq = (eaw[:, 0] * scale).astype(jnp.bfloat16)                        # (L, D, D)
    c_bq = (eab[:, 0] * scale).reshape(L, 1, D)
    c_wkv = jnp.concatenate([eaw[:, 1], eaw[:, 2]], axis=-1).astype(jnp.bfloat16)  # (L, D, 2D)
    c_bkv = jnp.concatenate([eab[:, 1], eab[:, 2]], axis=-1).reshape(L, 1, 2 * D)
    c_wo = eaw[:, 3].astype(jnp.bfloat16)                                  # (L, D, D)
    c_bo = eab[:, 3].reshape(L, 1, D)

    return dict(
        pos_table=p["pos_table"],
        s_wqkv=s_wqkv, s_bqkv=s_bqkv, s_wo=s_wo, s_bo=s_bo,
        c_wq=c_wq, c_bq=c_bq, c_wkv=c_wkv, c_bkv=c_bkv, c_wo=c_wo, c_bo=c_bo,
        lng=p["lng"], lnb=p["lnb"],
        f1w=p["f1w"].astype(jnp.bfloat16), f1b=p["f1b"].reshape(L, 1, FFN),
        f2w=p["f2w"].astype(jnp.bfloat16), f2b=p["f2b"].reshape(L, 1, D),
        flg=p["flg"], flb=p["flb"],
    )


if __name__ == "__main__":
    key = jax.random.PRNGKey(0)
    k_in, k_enc, k_p = jax.random.split(key, 3)
    inputs = jax.random.normal(k_in, (B, T, D), dtype=jnp.float32)
    encoder_out = jax.random.normal(k_enc, (B, S, D), dtype=jnp.float32)
    decoder_padding_mask = jnp.array(
        [[0, 0, 0, 0, 0, 0, 1, 1],
         [0, 0, 0, 0, 0, 1, 1, 1]], dtype=bool)
    encoder_padding_mask = jnp.array(
        [[0, 0, 0, 0, 0, 0, 0, 0],
         [0, 0, 0, 0, 0, 0, 1, 1]], dtype=bool)

    params = pack_params(init_params(k_p))
    out, extra = multi_att_decoder(inputs, decoder_padding_mask,
                                   encoder_out, encoder_padding_mask, params)
    jax.block_until_ready(out)
    jax.block_until_ready(extra["attn"][0])
    for st in extra["inner_states"]:
        jax.block_until_ready(st)
    print("KERNEL_OK")
</pallas_src>

<mosaic_0001>
module attributes {stable_mosaic.version = 11 : i64} {
  func.func @decoder_kernel(%arg0: memref<16x64xf32, #tpu.memory_space<vmem>>, %arg1: memref<16x64xf32, #tpu.memory_space<vmem>>, %arg2: memref<16x16xf32, #tpu.memory_space<vmem>>, %arg3: memref<16x16xf32, #tpu.memory_space<vmem>>, %arg4: memref<2x64x192xbf16, #tpu.memory_space<vmem>>, %arg5: memref<2x1x192xf32, #tpu.memory_space<vmem>>, %arg6: memref<2x64x64xbf16, #tpu.memory_space<vmem>>, %arg7: memref<2x1x64xf32, #tpu.memory_space<vmem>>, %arg8: memref<2x64x64xbf16, #tpu.memory_space<vmem>>, %arg9: memref<2x1x64xf32, #tpu.memory_space<vmem>>, %arg10: memref<2x64x128xbf16, #tpu.memory_space<vmem>>, %arg11: memref<2x1x128xf32, #tpu.memory_space<vmem>>, %arg12: memref<2x64x64xbf16, #tpu.memory_space<vmem>>, %arg13: memref<2x1x64xf32, #tpu.memory_space<vmem>>, %arg14: memref<2x3x64xf32, #tpu.memory_space<vmem>>, %arg15: memref<2x3x64xf32, #tpu.memory_space<vmem>>, %arg16: memref<2x64x128xbf16, #tpu.memory_space<vmem>>, %arg17: memref<2x1x128xf32, #tpu.memory_space<vmem>>, %arg18: memref<2x128x64xbf16, #tpu.memory_space<vmem>>, %arg19: memref<2x1x64xf32, #tpu.memory_space<vmem>>, %arg20: memref<1x64xf32, #tpu.memory_space<vmem>>, %arg21: memref<1x64xf32, #tpu.memory_space<vmem>>, %arg22: memref<16x64xf32, #tpu.memory_space<vmem>>, %arg23: memref<16x16xf32, #tpu.memory_space<vmem>>, %arg24: memref<2x16x64xf32, #tpu.memory_space<vmem>>) attributes {dimension_semantics = [], scalar_prefetch = 0 : i64, scratch_operands = 0 : i64, tpu.core_type = #tpu.core_type<tc>} {
    %c0 = arith.constant 0 : index
    %c0_0 = arith.constant 0 : index
    %0 = vector.load %arg0[%c0, %c0_0] : memref<16x64xf32, #tpu.memory_space<vmem>>, vector<16x64xf32>
    %c0_1 = arith.constant 0 : index
    %c0_2 = arith.constant 0 : index
    %1 = vector.load %arg1[%c0_1, %c0_2] : memref<16x64xf32, #tpu.memory_space<vmem>>, vector<16x64xf32>
    %2 = arith.truncf %1 : vector<16x64xf32> to vector<16x64xbf16>
    %c0_3 = arith.constant 0 : index
    %c0_4 = arith.constant 0 : index
    %3 = vector.load %arg2[%c0_3, %c0_4] : memref<16x16xf32, #tpu.memory_space<vmem>>, vector<16x16xf32>
    %c0_5 = arith.constant 0 : index
    %c0_6 = arith.constant 0 : index
    %4 = vector.load %arg3[%c0_5, %c0_6] : memref<16x16xf32, #tpu.memory_space<vmem>>, vector<16x16xf32>
    %c0_7 = arith.constant 0 : index
    %c0_8 = arith.constant 0 : index
    %c0_9 = arith.constant 0 : index
    %5 = vector.load %arg14[%c0_7, %c0_8, %c0_9] : memref<2x3x64xf32, #tpu.memory_space<vmem>>, vector<1x1x64xf32>
    %6 = vector.shape_cast %5 : vector<1x1x64xf32> to vector<1x64xf32>
    %c0_10 = arith.constant 0 : index
    %c0_11 = arith.constant 0 : index
    %c0_12 = arith.constant 0 : index
    %7 = vector.load %arg15[%c0_10, %c0_11, %c0_12] : memref<2x3x64xf32, #tpu.memory_space<vmem>>, vector<1x1x64xf32>
    %8 = vector.shape_cast %7 : vector<1x1x64xf32> to vector<1x64xf32>
    %cst = arith.constant dense<0.000000e+00> : vector<16xf32>
    %9 = vector.multi_reduction <add>, %0, %cst [1] : vector<16x64xf32> to vector<16xf32>
    %10 = vector.shape_cast %9 : vector<16xf32> to vector<16x1xf32>
    %cst_13 = arith.constant 6.400000e+01 : f32
    %11 = vector.broadcast %cst_13 : f32 to vector<16x1xf32>
    %12 = arith.divf %10, %11 : vector<16x1xf32>
    %13 = vector.broadcast %12 : vector<16x1xf32> to vector<16x64xf32>
    %14 = arith.subf %0, %13 : vector<16x64xf32>
    %15 = arith.mulf %14, %14 : vector<16x64xf32>
    %cst_14 = arith.constant dense<0.000000e+00> : vector<16xf32>
    %16 = vector.multi_reduction <add>, %15, %cst_14 [1] : vector<16x64xf32> to vector<16xf32>
    %17 = vector.shape_cast %16 : vector<16xf32> to vector<16x1xf32>
    %cst_15 = arith.constant 6.400000e+01 : f32
    %18 = vector.broadcast %cst_15 : f32 to vector<16x1xf32>
    %19 = arith.divf %17, %18 : vector<16x1xf32>
    %20 = vector.broadcast %12 : vector<16x1xf32> to vector<16x64xf32>
    %21 = arith.subf %0, %20 : vector<16x64xf32>
    %cst_16 = arith.constant 9.99999974E-6 : f32
    %22 = vector.broadcast %cst_16 : f32 to vector<16x1xf32>
    %23 = arith.addf %19, %22 : vector<16x1xf32>
    %24 = math.rsqrt %23 : vector<16x1xf32>
    %25 = vector.broadcast %24 : vector<16x1xf32> to vector<16x64xf32>
    %26 = arith.mulf %21, %25 : vector<16x64xf32>
    %27 = vector.broadcast %6 : vector<1x64xf32> to vector<16x64xf32>
    %28 = arith.mulf %26, %27 : vector<16x64xf32>
    %29 = vector.broadcast %8 : vector<1x64xf32> to vector<16x64xf32>
    %30 = arith.addf %28, %29 : vector<16x64xf32>
    %31 = arith.truncf %30 : vector<16x64xf32> to vector<16x64xbf16>
    %c0_17 = arith.constant 0 : index
    %c0_18 = arith.constant 0 : index
    %c0_19 = arith.constant 0 : index
    %32 = vector.load %arg4[%c0_17, %c0_18, %c0_19] : memref<2x64x192xbf16, #tpu.memory_space<vmem>>, vector<1x64x192xbf16>
    %33 = vector.shape_cast %32 : vector<1x64x192xbf16> to vector<64x192xbf16>
    %cst_20 = arith.constant dense<0.000000e+00> : vector<16x192xf32>
    %34 = tpu.matmul %31, %33, %cst_20 {dimension_numbers = #tpu.dot_dimension_numbers<[1], [0], [0], [1], [0, 0, 1, 1], [], []>} : vector<16x64xbf16>, vector<64x192xbf16>, vector<16x192xf32> -> vector<16x192xf32>
    %c0_21 = arith.constant 0 : index
    %c0_22 = arith.constant 0 : index
    %c0_23 = arith.constant 0 : index
    %35 = vector.load %arg5[%c0_21, %c0_22, %c0_23] : memref<2x1x192xf32, #tpu.memory_space<vmem>>, vector<1x1x192xf32>
    %36 = vector.shape_cast %35 : vector<1x1x192xf32> to vector<1x192xf32>
    %37 = vector.broadcast %36 : vector<1x192xf32> to vector<16x192xf32>
    %38 = arith.addf %34, %37 : vector<16x192xf32>
    %39 = vector.extract_strided_slice %38 {offsets = [0, 0], sizes = [16, 64], strides = [1, 1]} : vector<16x192xf32> to vector<16x64xf32>
    %40 = vector.extract_strided_slice %38 {offsets = [0, 64], sizes = [16, 64], strides = [1, 1]} : vector<16x192xf32> to vector<16x64xf32>
    %41 = vector.extract_strided_slice %38 {offsets = [0, 128], sizes = [16, 64], strides = [1, 1]} : vector<16x192xf32> to vector<16x64xf32>
    %c0_24 = arith.constant 0 : index
    %c0_25 = arith.constant 0 : index
    %c0_26 = arith.constant 0 : index
    %42 = vector.load %arg6[%c0_24, %c0_25, %c0_26] : memref<2x64x64xbf16, #tpu.memory_space<vmem>>, vector<1x64x64xbf16>
    %43 = vector.shape_cast %42 : vector<1x64x64xbf16> to vector<64x64xbf16>
    %c0_27 = arith.constant 0 : index
    %c0_28 = arith.constant 0 : index
    %c0_29 = arith.constant 0 : index
    %44 = vector.load %arg7[%c0_27, %c0_28, %c0_29] : memref<2x1x64xf32, #tpu.memory_space<vmem>>, vector<1x1x64xf32>
    %45 = vector.shape_cast %44 : vector<1x1x64xf32> to vector<1x64xf32>
    %46 = arith.truncf %39 : vector<16x64xf32> to vector<16x64xbf16>
    %47 = arith.truncf %40 : vector<16x64xf32> to vector<16x64xbf16>
    %48 = arith.truncf %41 : vector<16x64xf32> to vector<16x64xbf16>
    %49 = vector.extract_strided_slice %46 {offsets = [0, 0], sizes = [16, 16], strides = [1, 1]} : vector<16x64xbf16> to vector<16x16xbf16>
    %50 = vector.extract_strided_slice %47 {offsets = [0, 0], sizes = [16, 16], strides = [1, 1]} : vector<16x64xbf16> to vector<16x16xbf16>
    "tpu.trace_start"() <{level = 10 : i32, message = "td,sd->ts"}> : () -> ()
    %cst_30 = arith.constant dense<0.000000e+00> : vector<16x16xf32>
    %51 = tpu.matmul %49, %50, %cst_30 {dimension_numbers = #tpu.dot_dimension_numbers<[1], [1], [0], [0], [0, 0, 1, 0], [], []>} : vector<16x16xbf16>, vector<16x16xbf16>, vector<16x16xf32> -> vector<16x16xf32>
    "tpu.trace_stop"() : () -> ()
    %52 = arith.addf %51, %3 : vector<16x16xf32>
    %cst_31 = arith.constant dense<0xFF800000> : vector<16xf32>
    %53 = vector.multi_reduction <maximumf>, %52, %cst_31 [1] : vector<16x16xf32> to vector<16xf32>
    %54 = vector.shape_cast %53 : vector<16xf32> to vector<16x1xf32>
    %55 = vector.broadcast %54 : vector<16x1xf32> to vector<16x16xf32>
    %56 = arith.subf %52, %55 : vector<16x16xf32>
    %57 = math.exp %56 : vector<16x16xf32>
    %cst_32 = arith.constant dense<0.000000e+00> : vector<16xf32>
    %58 = vector.multi_reduction <add>, %57, %cst_32 [1] : vector<16x16xf32> to vector<16xf32>
    %59 = vector.shape_cast %58 : vector<16xf32> to vector<16x1xf32>
    %60 = tpu.reciprocal %59 {approx = true} : vector<16x1xf32> -> vector<16x1xf32>
    %61 = vector.broadcast %60 : vector<16x1xf32> to vector<16x16xf32>
    %62 = arith.mulf %57, %61 : vector<16x16xf32>
    %63 = arith.truncf %62 : vector<16x16xf32> to vector<16x16xbf16>
    %64 = vector.extract_strided_slice %48 {offsets = [0, 0], sizes = [16, 16], strides = [1, 1]} : vector<16x64xbf16> to vector<16x16xbf16>
    %cst_33 = arith.constant dense<0.000000e+00> : vector<16x16xf32>
    %65 = tpu.matmul %63, %64, %cst_33 {dimension_numbers = #tpu.dot_dimension_numbers<[1], [0], [0], [1], [0, 0, 1, 1], [], []>} : vector<16x16xbf16>, vector<16x16xbf16>, vector<16x16xf32> -> vector<16x16xf32>
    %66 = vector.extract_strided_slice %46 {offsets = [0, 16], sizes = [16, 16], strides = [1, 1]} : vector<16x64xbf16> to vector<16x16xbf16>
    %67 = vector.extract_strided_slice %47 {offsets = [0, 16], sizes = [16, 16], strides = [1, 1]} : vector<16x64xbf16> to vector<16x16xbf16>
    "tpu.trace_start"() <{level = 10 : i32, message = "td,sd->ts"}> : () -> ()
    %cst_34 = arith.constant dense<0.000000e+00> : vector<16x16xf32>
    %68 = tpu.matmul %66, %67, %cst_34 {dimension_numbers = #tpu.dot_dimension_numbers<[1], [1], [0], [0], [0, 0, 1, 0], [], []>} : vector<16x16xbf16>, vector<16x16xbf16>, vector<16x16xf32> -> vector<16x16xf32>
    "tpu.trace_stop"() : () -> ()
    %69 = arith.addf %68, %3 : vector<16x16xf32>
    %cst_35 = arith.constant dense<0xFF800000> : vector<16xf32>
    %70 = vector.multi_reduction <maximumf>, %69, %cst_35 [1] : vector<16x16xf32> to vector<16xf32>
    %71 = vector.shape_cast %70 : vector<16xf32> to vector<16x1xf32>
    %72 = vector.broadcast %71 : vector<16x1xf32> to vector<16x16xf32>
    %73 = arith.subf %69, %72 : vector<16x16xf32>
    %74 = math.exp %73 : vector<16x16xf32>
    %cst_36 = arith.constant dense<0.000000e+00> : vector<16xf32>
    %75 = vector.multi_reduction <add>, %74, %cst_36 [1] : vector<16x16xf32> to vector<16xf32>
    %76 = vector.shape_cast %75 : vector<16xf32> to vector<16x1xf32>
    %77 = tpu.reciprocal %76 {approx = true} : vector<16x1xf32> -> vector<16x1xf32>
    %78 = vector.broadcast %77 : vector<16x1xf32> to vector<16x16xf32>
    %79 = arith.mulf %74, %78 : vector<16x16xf32>
    %80 = arith.truncf %79 : vector<16x16xf32> to vector<16x16xbf16>
    %81 = vector.extract_strided_slice %48 {offsets = [0, 16], sizes = [16, 16], strides = [1, 1]} : vector<16x64xbf16> to vector<16x16xbf16>
    %cst_37 = arith.constant dense<0.000000e+00> : vector<16x16xf32>
    %82 = tpu.matmul %80, %81, %cst_37 {dimension_numbers = #tpu.dot_dimension_numbers<[1], [0], [0], [1], [0, 0, 1, 1], [], []>} : vector<16x16xbf16>, vector<16x16xbf16>, vector<16x16xf32> -> vector<16x16xf32>
    %83 = vector.extract_strided_slice %46 {offsets = [0, 32], sizes = [16, 16], strides = [1, 1]} : vector<16x64xbf16> to vector<16x16xbf16>
    %84 = vector.extract_strided_slice %47 {offsets = [0, 32], sizes = [16, 16], strides = [1, 1]} : vector<16x64xbf16> to vector<16x16xbf16>
    "tpu.trace_start"() <{level = 10 : i32, message = "td,sd->ts"}> : () -> ()
    %cst_38 = arith.constant dense<0.000000e+00> : vector<16x16xf32>
    %85 = tpu.matmul %83, %84, %cst_38 {dimension_numbers = #tpu.dot_dimension_numbers<[1], [1], [0], [0], [0, 0, 1, 0], [], []>} : vector<16x16xbf16>, vector<16x16xbf16>, vector<16x16xf32> -> vector<16x16xf32>
    "tpu.trace_stop"() : () -> ()
    %86 = arith.addf %85, %3 : vector<16x16xf32>
    %cst_39 = arith.constant dense<0xFF800000> : vector<16xf32>
    %87 = vector.multi_reduction <maximumf>, %86, %cst_39 [1] : vector<16x16xf32> to vector<16xf32>
    %88 = vector.shape_cast %87 : vector<16xf32> to vector<16x1xf32>
    %89 = vector.broadcast %88 : vector<16x1xf32> to vector<16x16xf32>
    %90 = arith.subf %86, %89 : vector<16x16xf32>
    %91 = math.exp %90 : vector<16x16xf32>
    %cst_40 = arith.constant dense<0.000000e+00> : vector<16xf32>
    %92 = vector.multi_reduction <add>, %91, %cst_40 [1] : vector<16x16xf32> to vector<16xf32>
    %93 = vector.shape_cast %92 : vector<16xf32> to vector<16x1xf32>
    %94 = tpu.reciprocal %93 {approx = true} : vector<16x1xf32> -> vector<16x1xf32>
    %95 = vector.broadcast %94 : vector<16x1xf32> to vector<16x16xf32>
    %96 = arith.mulf %91, %95 : vector<16x16xf32>
    %97 = arith.truncf %96 : vector<16x16xf32> to vector<16x16xbf16>
    %98 = vector.extract_strided_slice %48 {offsets = [0, 32], sizes = [16, 16], strides = [1, 1]} : vector<16x64xbf16> to vector<16x16xbf16>
    %cst_41 = arith.constant dense<0.000000e+00> : vector<16x16xf32>
    %99 = tpu.matmul %97, %98, %cst_41 {dimension_numbers = #tpu.dot_dimension_numbers<[1], [0], [0], [1], [0, 0, 1, 1], [], []>} : vector<16x16xbf16>, vector<16x16xbf16>, vector<16x16xf32> -> vector<16x16xf32>
    %100 = vector.extract_strided_slice %46 {offsets = [0, 48], sizes = [16, 16], strides = [1, 1]} : vector<16x64xbf16> to vector<16x16xbf16>
    %101 = vector.extract_strided_slice %47 {offsets = [0, 48], sizes = [16, 16], strides = [1, 1]} : vector<16x64xbf16> to vector<16x16xbf16>
    "tpu.trace_start"() <{level = 10 : i32, message = "td,sd->ts"}> : () -> ()
    %cst_42 = arith.constant dense<0.000000e+00> : vector<16x16xf32>
    %102 = tpu.matmul %100, %101, %cst_42 {dimension_numbers = #tpu.dot_dimension_numbers<[1], [1], [0], [0], [0, 0, 1, 0], [], []>} : vector<16x16xbf16>, vector<16x16xbf16>, vector<16x16xf32> -> vector<16x16xf32>
    "tpu.trace_stop"() : () -> ()
    %103 = arith.addf %102, %3 : vector<16x16xf32>
    %cst_43 = arith.constant dense<0xFF800000> : vector<16xf32>
    %104 = vector.multi_reduction <maximumf>, %103, %cst_43 [1] : vector<16x16xf32> to vector<16xf32>
    %105 = vector.shape_cast %104 : vector<16xf32> to vector<16x1xf32>
    %106 = vector.broadcast %105 : vector<16x1xf32> to vector<16x16xf32>
    %107 = arith.subf %103, %106 : vector<16x16xf32>
    %108 = math.exp %107 : vector<16x16xf32>
    %cst_44 = arith.constant dense<0.000000e+00> : vector<16xf32>
    %109 = vector.multi_reduction <add>, %108, %cst_44 [1] : vector<16x16xf32> to vector<16xf32>
    %110 = vector.shape_cast %109 : vector<16xf32> to vector<16x1xf32>
    %111 = tpu.reciprocal %110 {approx = true} : vector<16x1xf32> -> vector<16x1xf32>
    %112 = vector.broadcast %111 : vector<16x1xf32> to vector<16x16xf32>
    %113 = arith.mulf %108, %112 : vector<16x16xf32>
    %114 = arith.truncf %113 : vector<16x16xf32> to vector<16x16xbf16>
    %115 = vector.extract_strided_slice %48 {offsets = [0, 48], sizes = [16, 16], strides = [1, 1]} : vector<16x64xbf16> to vector<16x16xbf16>
    %cst_45 = arith.constant dense<0.000000e+00> : vector<16x16xf32>
    %116 = tpu.matmul %114, %115, %cst_45 {dimension_numbers = #tpu.dot_dimension_numbers<[1], [0], [0], [1], [0, 0, 1, 1], [], []>} : vector<16x16xbf16>, vector<16x16xbf16>, vector<16x16xf32> -> vector<16x16xf32>
    %117 = tpu.concatenate %65, %82, %99, %116 in 1 : vector<16x16xf32>, vector<16x16xf32>, vector<16x16xf32>, vector<16x16xf32> -> vector<16x64xf32>
    %118 = arith.truncf %117 : vector<16x64xf32> to vector<16x64xbf16>
    %cst_46 = arith.constant dense<0.000000e+00> : vector<16x64xf32>
    %119 = tpu.matmul %118, %43, %cst_46 {dimension_numbers = #tpu.dot_dimension_numbers<[1], [0], [0], [1], [0, 0, 1, 1], [], []>} : vector<16x64xbf16>, vector<64x64xbf16>, vector<16x64xf32> -> vector<16x64xf32>
    %120 = vector.broadcast %45 : vector<1x64xf32> to vector<16x64xf32>
    %121 = arith.addf %119, %120 : vector<16x64xf32>
    %122 = arith.addf %0, %121 : vector<16x64xf32>
    %c0_47 = arith.constant 0 : index
    %c1 = arith.constant 1 : index
    %c0_48 = arith.constant 0 : index
    %123 = vector.load %arg14[%c0_47, %c1, %c0_48] : memref<2x3x64xf32, #tpu.memory_space<vmem>>, vector<1x1x64xf32>
    %124 = vector.shape_cast %123 : vector<1x1x64xf32> to vector<1x64xf32>
    %c0_49 = arith.constant 0 : index
    %c1_50 = arith.constant 1 : index
    %c0_51 = arith.constant 0 : index
    %125 = vector.load %arg15[%c0_49, %c1_50, %c0_51] : memref<2x3x64xf32, #tpu.memory_space<vmem>>, vector<1x1x64xf32>
    %126 = vector.shape_cast %125 : vector<1x1x64xf32> to vector<1x64xf32>
    %cst_52 = arith.constant dense<0.000000e+00> : vector<16xf32>
    %127 = vector.multi_reduction <add>, %122, %cst_52 [1] : vector<16x64xf32> to vector<16xf32>
    %128 = vector.shape_cast %127 : vector<16xf32> to vector<16x1xf32>
    %cst_53 = arith.constant 6.400000e+01 : f32
    %129 = vector.broadcast %cst_53 : f32 to vector<16x1xf32>
    %130 = arith.divf %128, %129 : vector<16x1xf32>
    %131 = vector.broadcast %130 : vector<16x1xf32> to vector<16x64xf32>
    %132 = arith.subf %122, %131 : vector<16x64xf32>
    %133 = arith.mulf %132, %132 : vector<16x64xf32>
    %cst_54 = arith.constant dense<0.000000e+00> : vector<16xf32>
    %134 = vector.multi_reduction <add>, %133, %cst_54 [1] : vector<16x64xf32> to vector<16xf32>
    %135 = vector.shape_cast %134 : vector<16xf32> to vector<16x1xf32>
    %cst_55 = arith.constant 6.400000e+01 : f32
    %136 = vector.broadcast %cst_55 : f32 to vector<16x1xf32>
    %137 = arith.divf %135, %136 : vector<16x1xf32>
    %138 = vector.broadcast %130 : vector<16x1xf32> to vector<16x64xf32>
    %139 = arith.subf %122, %138 : vector<16x64xf32>
    %cst_56 = arith.constant 9.99999974E-6 : f32
    %140 = vector.broadcast %cst_56 : f32 to vector<16x1xf32>
    %141 = arith.addf %137, %140 : vector<16x1xf32>
    %142 = math.rsqrt %141 : vector<16x1xf32>
    %143 = vector.broadcast %142 : vector<16x1xf32> to vector<16x64xf32>
    %144 = arith.mulf %139, %143 : vector<16x64xf32>
    %145 = vector.broadcast %124 : vector<1x64xf32> to vector<16x64xf32>
    %146 = arith.mulf %144, %145 : vector<16x64xf32>
    %147 = vector.broadcast %126 : vector<1x64xf32> to vector<16x64xf32>
    %148 = arith.addf %146, %147 : vector<16x64xf32>
    %149 = arith.truncf %148 : vector<16x64xf32> to vector<16x64xbf16>
    %c0_57 = arith.constant 0 : index
    %c0_58 = arith.constant 0 : index
    %c0_59 = arith.constant 0 : index
    %150 = vector.load %arg8[%c0_57, %c0_58, %c0_59] : memref<2x64x64xbf16, #tpu.memory_space<vmem>>, vector<1x64x64xbf16>
    %151 = vector.shape_cast %150 : vector<1x64x64xbf16> to vector<64x64xbf16>
    %cst_60 = arith.constant dense<0.000000e+00> : vector<16x64xf32>
    %152 = tpu.matmul %149, %151, %cst_60 {dimension_numbers = #tpu.dot_dimension_numbers<[1], [0], [0], [1], [0, 0, 1, 1], [], []>} : vector<16x64xbf16>, vector<64x64xbf16>, vector<16x64xf32> -> vector<16x64xf32>
    %c0_61 = arith.constant 0 : index
    %c0_62 = arith.constant 0 : index
    %c0_63 = arith.constant 0 : index
    %153 = vector.load %arg9[%c0_61, %c0_62, %c0_63] : memref<2x1x64xf32, #tpu.memory_space<vmem>>, vector<1x1x64xf32>
    %154 = vector.shape_cast %153 : vector<1x1x64xf32> to vector<1x64xf32>
    %155 = vector.broadcast %154 : vector<1x64xf32> to vector<16x64xf32>
    %156 = arith.addf %152, %155 : vector<16x64xf32>
    %c0_64 = arith.constant 0 : index
    %c0_65 = arith.constant 0 : index
    %c0_66 = arith.constant 0 : index
    %157 = vector.load %arg10[%c0_64, %c0_65, %c0_66] : memref<2x64x128xbf16, #tpu.memory_space<vmem>>, vector<1x64x128xbf16>
    %158 = vector.shape_cast %157 : vector<1x64x128xbf16> to vector<64x128xbf16>
    %cst_67 = arith.constant dense<0.000000e+00> : vector<16x128xf32>
    %159 = tpu.matmul %2, %158, %cst_67 {dimension_numbers = #tpu.dot_dimension_numbers<[1], [0], [0], [1], [0, 0, 1, 1], [], []>} : vector<16x64xbf16>, vector<64x128xbf16>, vector<16x128xf32> -> vector<16x128xf32>
    %c0_68 = arith.constant 0 : index
    %c0_69 = arith.constant 0 : index
    %c0_70 = arith.constant 0 : index
    %160 = vector.load %arg11[%c0_68, %c0_69, %c0_70] : memref<2x1x128xf32, #tpu.memory_space<vmem>>, vector<1x1x128xf32>
    %161 = vector.shape_cast %160 : vector<1x1x128xf32> to vector<1x128xf32>
    %162 = vector.broadcast %161 : vector<1x128xf32> to vector<16x128xf32>
    %163 = arith.addf %159, %162 : vector<16x128xf32>
    %164 = vector.extract_strided_slice %163 {offsets = [0, 0], sizes = [16, 64], strides = [1, 1]} : vector<16x128xf32> to vector<16x64xf32>
    %165 = vector.extract_strided_slice %163 {offsets = [0, 64], sizes = [16, 64], strides = [1, 1]} : vector<16x128xf32> to vector<16x64xf32>
    %c0_71 = arith.constant 0 : index
    %c0_72 = arith.constant 0 : index
    %c0_73 = arith.constant 0 : index
    %166 = vector.load %arg12[%c0_71, %c0_72, %c0_73] : memref<2x64x64xbf16, #tpu.memory_space<vmem>>, vector<1x64x64xbf16>
    %167 = vector.shape_cast %166 : vector<1x64x64xbf16> to vector<64x64xbf16>
    %c0_74 = arith.constant 0 : index
    %c0_75 = arith.constant 0 : index
    %c0_76 = arith.constant 0 : index
    %168 = vector.load %arg13[%c0_74, %c0_75, %c0_76] : memref<2x1x64xf32, #tpu.memory_space<vmem>>, vector<1x1x64xf32>
    %169 = vector.shape_cast %168 : vector<1x1x64xf32> to vector<1x64xf32>
    %170 = arith.truncf %156 : vector<16x64xf32> to vector<16x64xbf16>
    %171 = arith.truncf %164 : vector<16x64xf32> to vector<16x64xbf16>
    %172 = arith.truncf %165 : vector<16x64xf32> to vector<16x64xbf16>
    %173 = vector.extract_strided_slice %170 {offsets = [0, 0], sizes = [16, 16], strides = [1, 1]} : vector<16x64xbf16> to vector<16x16xbf16>
    %174 = vector.extract_strided_slice %171 {offsets = [0, 0], sizes = [16, 16], strides = [1, 1]} : vector<16x64xbf16> to vector<16x16xbf16>
    "tpu.trace_start"() <{level = 10 : i32, message = "td,sd->ts"}> : () -> ()
    %cst_77 = arith.constant dense<0.000000e+00> : vector<16x16xf32>
    %175 = tpu.matmul %173, %174, %cst_77 {dimension_numbers = #tpu.dot_dimension_numbers<[1], [1], [0], [0], [0, 0, 1, 0], [], []>} : vector<16x16xbf16>, vector<16x16xbf16>, vector<16x16xf32> -> vector<16x16xf32>
    "tpu.trace_stop"() : () -> ()
    %176 = arith.addf %175, %4 : vector<16x16xf32>
    %cst_78 = arith.constant dense<0xFF800000> : vector<16xf32>
    %177 = vector.multi_reduction <maximumf>, %176, %cst_78 [1] : vector<16x16xf32> to vector<16xf32>
    %178 = vector.shape_cast %177 : vector<16xf32> to vector<16x1xf32>
    %179 = vector.broadcast %178 : vector<16x1xf32> to vector<16x16xf32>
    %180 = arith.subf %176, %179 : vector<16x16xf32>
    %181 = math.exp %180 : vector<16x16xf32>
    %cst_79 = arith.constant dense<0.000000e+00> : vector<16xf32>
    %182 = vector.multi_reduction <add>, %181, %cst_79 [1] : vector<16x16xf32> to vector<16xf32>
    %183 = vector.shape_cast %182 : vector<16xf32> to vector<16x1xf32>
    %184 = tpu.reciprocal %183 {approx = true} : vector<16x1xf32> -> vector<16x1xf32>
    %185 = vector.broadcast %184 : vector<16x1xf32> to vector<16x16xf32>
    %186 = arith.mulf %181, %185 : vector<16x16xf32>
    %187 = arith.truncf %186 : vector<16x16xf32> to vector<16x16xbf16>
    %188 = vector.extract_strided_slice %172 {offsets = [0, 0], sizes = [16, 16], strides = [1, 1]} : vector<16x64xbf16> to vector<16x16xbf16>
    %cst_80 = arith.constant dense<0.000000e+00> : vector<16x16xf32>
    %189 = tpu.matmul %187, %188, %cst_80 {dimension_numbers = #tpu.dot_dimension_numbers<[1], [0], [0], [1], [0, 0, 1, 1], [], []>} : vector<16x16xbf16>, vector<16x16xbf16>, vector<16x16xf32> -> vector<16x16xf32>
    %190 = vector.extract_strided_slice %170 {offsets = [0, 16], sizes = [16, 16], strides = [1, 1]} : vector<16x64xbf16> to vector<16x16xbf16>
    %191 = vector.extract_strided_slice %171 {offsets = [0, 16], sizes = [16, 16], strides = [1, 1]} : vector<16x64xbf16> to vector<16x16xbf16>
    "tpu.trace_start"() <{level = 10 : i32, message = "td,sd->ts"}> : () -> ()
    %cst_81 = arith.constant dense<0.000000e+00> : vector<16x16xf32>
    %192 = tpu.matmul %190, %191, %cst_81 {dimension_numbers = #tpu.dot_dimension_numbers<[1], [1], [0], [0], [0, 0, 1, 0], [], []>} : vector<16x16xbf16>, vector<16x16xbf16>, vector<16x16xf32> -> vector<16x16xf32>
    "tpu.trace_stop"() : () -> ()
    %193 = arith.addf %192, %4 : vector<16x16xf32>
    %cst_82 = arith.constant dense<0xFF800000> : vector<16xf32>
    %194 = vector.multi_reduction <maximumf>, %193, %cst_82 [1] : vector<16x16xf32> to vector<16xf32>
    %195 = vector.shape_cast %194 : vector<16xf32> to vector<16x1xf32>
    %196 = vector.broadcast %195 : vector<16x1xf32> to vector<16x16xf32>
    %197 = arith.subf %193, %196 : vector<16x16xf32>
    %198 = math.exp %197 : vector<16x16xf32>
    %cst_83 = arith.constant dense<0.000000e+00> : vector<16xf32>
    %199 = vector.multi_reduction <add>, %198, %cst_83 [1] : vector<16x16xf32> to vector<16xf32>
    %200 = vector.shape_cast %199 : vector<16xf32> to vector<16x1xf32>
    %201 = tpu.reciprocal %200 {approx = true} : vector<16x1xf32> -> vector<16x1xf32>
    %202 = vector.broadcast %201 : vector<16x1xf32> to vector<16x16xf32>
    %203 = arith.mulf %198, %202 : vector<16x16xf32>
    %204 = arith.truncf %203 : vector<16x16xf32> to vector<16x16xbf16>
    %205 = vector.extract_strided_slice %172 {offsets = [0, 16], sizes = [16, 16], strides = [1, 1]} : vector<16x64xbf16> to vector<16x16xbf16>
    %cst_84 = arith.constant dense<0.000000e+00> : vector<16x16xf32>
    %206 = tpu.matmul %204, %205, %cst_84 {dimension_numbers = #tpu.dot_dimension_numbers<[1], [0], [0], [1], [0, 0, 1, 1], [], []>} : vector<16x16xbf16>, vector<16x16xbf16>, vector<16x16xf32> -> vector<16x16xf32>
    %207 = vector.extract_strided_slice %170 {offsets = [0, 32], sizes = [16, 16], strides = [1, 1]} : vector<16x64xbf16> to vector<16x16xbf16>
    %208 = vector.extract_strided_slice %171 {offsets = [0, 32], sizes = [16, 16], strides = [1, 1]} : vector<16x64xbf16> to vector<16x16xbf16>
    "tpu.trace_start"() <{level = 10 : i32, message = "td,sd->ts"}> : () -> ()
    %cst_85 = arith.constant dense<0.000000e+00> : vector<16x16xf32>
    %209 = tpu.matmul %207, %208, %cst_85 {dimension_numbers = #tpu.dot_dimension_numbers<[1], [1], [0], [0], [0, 0, 1, 0], [], []>} : vector<16x16xbf16>, vector<16x16xbf16>, vector<16x16xf32> -> vector<16x16xf32>
    "tpu.trace_stop"() : () -> ()
    %210 = arith.addf %209, %4 : vector<16x16xf32>
    %cst_86 = arith.constant dense<0xFF800000> : vector<16xf32>
    %211 = vector.multi_reduction <maximumf>, %210, %cst_86 [1] : vector<16x16xf32> to vector<16xf32>
    %212 = vector.shape_cast %211 : vector<16xf32> to vector<16x1xf32>
    %213 = vector.broadcast %212 : vector<16x1xf32> to vector<16x16xf32>
    %214 = arith.subf %210, %213 : vector<16x16xf32>
    %215 = math.exp %214 : vector<16x16xf32>
    %cst_87 = arith.constant dense<0.000000e+00> : vector<16xf32>
    %216 = vector.multi_reduction <add>, %215, %cst_87 [1] : vector<16x16xf32> to vector<16xf32>
    %217 = vector.shape_cast %216 : vector<16xf32> to vector<16x1xf32>
    %218 = tpu.reciprocal %217 {approx = true} : vector<16x1xf32> -> vector<16x1xf32>
    %219 = vector.broadcast %218 : vector<16x1xf32> to vector<16x16xf32>
    %220 = arith.mulf %215, %219 : vector<16x16xf32>
    %221 = arith.truncf %220 : vector<16x16xf32> to vector<16x16xbf16>
    %222 = vector.extract_strided_slice %172 {offsets = [0, 32], sizes = [16, 16], strides = [1, 1]} : vector<16x64xbf16> to vector<16x16xbf16>
    %cst_88 = arith.constant dense<0.000000e+00> : vector<16x16xf32>
    %223 = tpu.matmul %221, %222, %cst_88 {dimension_numbers = #tpu.dot_dimension_numbers<[1], [0], [0], [1], [0, 0, 1, 1], [], []>} : vector<16x16xbf16>, vector<16x16xbf16>, vector<16x16xf32> -> vector<16x16xf32>
    %224 = vector.extract_strided_slice %170 {offsets = [0, 48], sizes = [16, 16], strides = [1, 1]} : vector<16x64xbf16> to vector<16x16xbf16>
    %225 = vector.extract_strided_slice %171 {offsets = [0, 48], sizes = [16, 16], strides = [1, 1]} : vector<16x64xbf16> to vector<16x16xbf16>
    "tpu.trace_start"() <{level = 10 : i32, message = "td,sd->ts"}> : () -> ()
    %cst_89 = arith.constant dense<0.000000e+00> : vector<16x16xf32>
    %226 = tpu.matmul %224, %225, %cst_89 {dimension_numbers = #tpu.dot_dimension_numbers<[1], [1], [0], [0], [0, 0, 1, 0], [], []>} : vector<16x16xbf16>, vector<16x16xbf16>, vector<16x16xf32> -> vector<16x16xf32>
    "tpu.trace_stop"() : () -> ()
    %227 = arith.addf %226, %4 : vector<16x16xf32>
    %cst_90 = arith.constant dense<0xFF800000> : vector<16xf32>
    %228 = vector.multi_reduction <maximumf>, %227, %cst_90 [1] : vector<16x16xf32> to vector<16xf32>
    %229 = vector.shape_cast %228 : vector<16xf32> to vector<16x1xf32>
    %230 = vector.broadcast %229 : vector<16x1xf32> to vector<16x16xf32>
    %231 = arith.subf %227, %230 : vector<16x16xf32>
    %232 = math.exp %231 : vector<16x16xf32>
    %cst_91 = arith.constant dense<0.000000e+00> : vector<16xf32>
    %233 = vector.multi_reduction <add>, %232, %cst_91 [1] : vector<16x16xf32> to vector<16xf32>
    %234 = vector.shape_cast %233 : vector<16xf32> to vector<16x1xf32>
    %235 = tpu.reciprocal %234 {approx = true} : vector<16x1xf32> -> vector<16x1xf32>
    %236 = vector.broadcast %235 : vector<16x1xf32> to vector<16x16xf32>
    %237 = arith.mulf %232, %236 : vector<16x16xf32>
    %238 = arith.truncf %237 : vector<16x16xf32> to vector<16x16xbf16>
    %239 = vector.extract_strided_slice %172 {offsets = [0, 48], sizes = [16, 16], strides = [1, 1]} : vector<16x64xbf16> to vector<16x16xbf16>
    %cst_92 = arith.constant dense<0.000000e+00> : vector<16x16xf32>
    %240 = tpu.matmul %238, %239, %cst_92 {dimension_numbers = #tpu.dot_dimension_numbers<[1], [0], [0], [1], [0, 0, 1, 1], [], []>} : vector<16x16xbf16>, vector<16x16xbf16>, vector<16x16xf32> -> vector<16x16xf32>
    %241 = tpu.concatenate %189, %206, %223, %240 in 1 : vector<16x16xf32>, vector<16x16xf32>, vector<16x16xf32>, vector<16x16xf32> -> vector<16x64xf32>
    %242 = arith.truncf %241 : vector<16x64xf32> to vector<16x64xbf16>
    %cst_93 = arith.constant dense<0.000000e+00> : vector<16x64xf32>
    %243 = tpu.matmul %242, %167, %cst_93 {dimension_numbers = #tpu.dot_dimension_numbers<[1], [0], [0], [1], [0, 0, 1, 1], [], []>} : vector<16x64xbf16>, vector<64x64xbf16>, vector<16x64xf32> -> vector<16x64xf32>
    %244 = vector.broadcast %169 : vector<1x64xf32> to vector<16x64xf32>
    %245 = arith.addf %243, %244 : vector<16x64xf32>
    %246 = arith.addf %122, %245 : vector<16x64xf32>
    %c0_94 = arith.constant 0 : index
    %c2 = arith.constant 2 : index
    %c0_95 = arith.constant 0 : index
    %247 = vector.load %arg14[%c0_94, %c2, %c0_95] : memref<2x3x64xf32, #tpu.memory_space<vmem>>, vector<1x1x64xf32>
    %248 = vector.shape_cast %247 : vector<1x1x64xf32> to vector<1x64xf32>
    %c0_96 = arith.constant 0 : index
    %c2_97 = arith.constant 2 : index
    %c0_98 = arith.constant 0 : index
    %249 = vector.load %arg15[%c0_96, %c2_97, %c0_98] : memref<2x3x64xf32, #tpu.memory_space<vmem>>, vector<1x1x64xf32>
    %250 = vector.shape_cast %249 : vector<1x1x64xf32> to vector<1x64xf32>
    %cst_99 = arith.constant dense<0.000000e+00> : vector<16xf32>
    %251 = vector.multi_reduction <add>, %246, %cst_99 [1] : vector<16x64xf32> to vector<16xf32>
    %252 = vector.shape_cast %251 : vector<16xf32> to vector<16x1xf32>
    %cst_100 = arith.constant 6.400000e+01 : f32
    %253 = vector.broadcast %cst_100 : f32 to vector<16x1xf32>
    %254 = arith.divf %252, %253 : vector<16x1xf32>
    %255 = vector.broadcast %254 : vector<16x1xf32> to vector<16x64xf32>
    %256 = arith.subf %246, %255 : vector<16x64xf32>
    %257 = arith.mulf %256, %256 : vector<16x64xf32>
    %cst_101 = arith.constant dense<0.000000e+00> : vector<16xf32>
    %258 = vector.multi_reduction <add>, %257, %cst_101 [1] : vector<16x64xf32> to vector<16xf32>
    %259 = vector.shape_cast %258 : vector<16xf32> to vector<16x1xf32>
    %cst_102 = arith.constant 6.400000e+01 : f32
    %260 = vector.broadcast %cst_102 : f32 to vector<16x1xf32>
    %261 = arith.divf %259, %260 : vector<16x1xf32>
    %262 = vector.broadcast %254 : vector<16x1xf32> to vector<16x64xf32>
    %263 = arith.subf %246, %262 : vector<16x64xf32>
    %cst_103 = arith.constant 9.99999974E-6 : f32
    %264 = vector.broadcast %cst_103 : f32 to vector<16x1xf32>
    %265 = arith.addf %261, %264 : vector<16x1xf32>
    %266 = math.rsqrt %265 : vector<16x1xf32>
    %267 = vector.broadcast %266 : vector<16x1xf32> to vector<16x64xf32>
    %268 = arith.mulf %263, %267 : vector<16x64xf32>
    %269 = vector.broadcast %248 : vector<1x64xf32> to vector<16x64xf32>
    %270 = arith.mulf %268, %269 : vector<16x64xf32>
    %271 = vector.broadcast %250 : vector<1x64xf32> to vector<16x64xf32>
    %272 = arith.addf %270, %271 : vector<16x64xf32>
    %273 = arith.truncf %272 : vector<16x64xf32> to vector<16x64xbf16>
    %c0_104 = arith.constant 0 : index
    %c0_105 = arith.constant 0 : index
    %c0_106 = arith.constant 0 : index
    %274 = vector.load %arg16[%c0_104, %c0_105, %c0_106] : memref<2x64x128xbf16, #tpu.memory_space<vmem>>, vector<1x64x128xbf16>
    %275 = vector.shape_cast %274 : vector<1x64x128xbf16> to vector<64x128xbf16>
    %cst_107 = arith.constant dense<0.000000e+00> : vector<16x128xf32>
    %276 = tpu.matmul %273, %275, %cst_107 {dimension_numbers = #tpu.dot_dimension_numbers<[1], [0], [0], [1], [0, 0, 1, 1], [], []>} : vector<16x64xbf16>, vector<64x128xbf16>, vector<16x128xf32> -> vector<16x128xf32>
    %c0_108 = arith.constant 0 : index
    %c0_109 = arith.constant 0 : index
    %c0_110 = arith.constant 0 : index
    %277 = vector.load %arg17[%c0_108, %c0_109, %c0_110] : memref<2x1x128xf32, #tpu.memory_space<vmem>>, vector<1x1x128xf32>
    %278 = vector.shape_cast %277 : vector<1x1x128xf32> to vector<1x128xf32>
    %279 = vector.broadcast %278 : vector<1x128xf32> to vector<16x128xf32>
    %280 = arith.addf %276, %279 : vector<16x128xf32>
    %cst_111 = arith.constant 0.000000e+00 : f32
    %281 = vector.broadcast %cst_111 : f32 to vector<16x128xf32>
    %282 = arith.maximumf %280, %281 : vector<16x128xf32>
    %283 = arith.truncf %282 : vector<16x128xf32> to vector<16x128xbf16>
    %c0_112 = arith.constant 0 : index
    %c0_113 = arith.constant 0 : index
    %c0_114 = arith.constant 0 : index
    %284 = vector.load %arg18[%c0_112, %c0_113, %c0_114] : memref<2x128x64xbf16, #tpu.memory_space<vmem>>, vector<1x128x64xbf16>
    %285 = vector.shape_cast %284 : vector<1x128x64xbf16> to vector<128x64xbf16>
    %cst_115 = arith.constant dense<0.000000e+00> : vector<16x64xf32>
    %286 = tpu.matmul %283, %285, %cst_115 {dimension_numbers = #tpu.dot_dimension_numbers<[1], [0], [0], [1], [0, 0, 1, 1], [], []>} : vector<16x128xbf16>, vector<128x64xbf16>, vector<16x64xf32> -> vector<16x64xf32>
    %c0_116 = arith.constant 0 : index
    %c0_117 = arith.constant 0 : index
    %c0_118 = arith.constant 0 : index
    %287 = vector.load %arg19[%c0_116, %c0_117, %c0_118] : memref<2x1x64xf32, #tpu.memory_space<vmem>>, vector<1x1x64xf32>
    %288 = vector.shape_cast %287 : vector<1x1x64xf32> to vector<1x64xf32>
    %289 = vector.broadcast %288 : vector<1x64xf32> to vector<16x64xf32>
    %290 = arith.addf %286, %289 : vector<16x64xf32>
    %291 = arith.addf %246, %290 : vector<16x64xf32>
    %c0_119 = arith.constant 0 : index
    %c0_120 = arith.constant 0 : index
    %c0_121 = arith.constant 0 : index
    %292 = vector.load %arg24[%c0_119, %c0_120, %c0_121] : memref<2x16x64xf32, #tpu.memory_space<vmem>>, vector<1x16x64xf32>
    %293 = vector.shape_cast %292 : vector<1x16x64xf32> to vector<16x64xf32>
    %294 = vector.shape_cast %291 : vector<16x64xf32> to vector<1x16x64xf32>
    tpu.vector_store %arg24[%c0_119, %c0_120, %c0_121], %294 {strides = array<i32>} : memref<2x16x64xf32, #tpu.memory_space<vmem>>, vector<1x16x64xf32>,
    %c1_122 = arith.constant 1 : index
    %c0_123 = arith.constant 0 : index
    %c0_124 = arith.constant 0 : index
    %295 = vector.load %arg14[%c1_122, %c0_123, %c0_124] : memref<2x3x64xf32, #tpu.memory_space<vmem>>, vector<1x1x64xf32>
    %296 = vector.shape_cast %295 : vector<1x1x64xf32> to vector<1x64xf32>
    %c1_125 = arith.constant 1 : index
    %c0_126 = arith.constant 0 : index
    %c0_127 = arith.constant 0 : index
    %297 = vector.load %arg15[%c1_125, %c0_126, %c0_127] : memref<2x3x64xf32, #tpu.memory_space<vmem>>, vector<1x1x64xf32>
    %298 = vector.shape_cast %297 : vector<1x1x64xf32> to vector<1x64xf32>
    %cst_128 = arith.constant dense<0.000000e+00> : vector<16xf32>
    %299 = vector.multi_reduction <add>, %291, %cst_128 [1] : vector<16x64xf32> to vector<16xf32>
    %300 = vector.shape_cast %299 : vector<16xf32> to vector<16x1xf32>
    %cst_129 = arith.constant 6.400000e+01 : f32
    %301 = vector.broadcast %cst_129 : f32 to vector<16x1xf32>
    %302 = arith.divf %300, %301 : vector<16x1xf32>
    %303 = vector.broadcast %302 : vector<16x1xf32> to vector<16x64xf32>
    %304 = arith.subf %291, %303 : vector<16x64xf32>
    %305 = arith.mulf %304, %304 : vector<16x64xf32>
    %cst_130 = arith.constant dense<0.000000e+00> : vector<16xf32>
    %306 = vector.multi_reduction <add>, %305, %cst_130 [1] : vector<16x64xf32> to vector<16xf32>
    %307 = vector.shape_cast %306 : vector<16xf32> to vector<16x1xf32>
    %cst_131 = arith.constant 6.400000e+01 : f32
    %308 = vector.broadcast %cst_131 : f32 to vector<16x1xf32>
    %309 = arith.divf %307, %308 : vector<16x1xf32>
    %310 = vector.broadcast %302 : vector<16x1xf32> to vector<16x64xf32>
    %311 = arith.subf %291, %310 : vector<16x64xf32>
    %cst_132 = arith.constant 9.99999974E-6 : f32
    %312 = vector.broadcast %cst_132 : f32 to vector<16x1xf32>
    %313 = arith.addf %309, %312 : vector<16x1xf32>
    %314 = math.rsqrt %313 : vector<16x1xf32>
    %315 = vector.broadcast %314 : vector<16x1xf32> to vector<16x64xf32>
    %316 = arith.mulf %311, %315 : vector<16x64xf32>
    %317 = vector.broadcast %296 : vector<1x64xf32> to vector<16x64xf32>
    %318 = arith.mulf %316, %317 : vector<16x64xf32>
    %319 = vector.broadcast %298 : vector<1x64xf32> to vector<16x64xf32>
    %320 = arith.addf %318, %319 : vector<16x64xf32>
    %321 = arith.truncf %320 : vector<16x64xf32> to vector<16x64xbf16>
    %c1_133 = arith.constant 1 : index
    %c0_134 = arith.constant 0 : index
    %c0_135 = arith.constant 0 : index
    %322 = vector.load %arg4[%c1_133, %c0_134, %c0_135] : memref<2x64x192xbf16, #tpu.memory_space<vmem>>, vector<1x64x192xbf16>
    %323 = vector.shape_cast %322 : vector<1x64x192xbf16> to vector<64x192xbf16>
    %cst_136 = arith.constant dense<0.000000e+00> : vector<16x192xf32>
    %324 = tpu.matmul %321, %323, %cst_136 {dimension_numbers = #tpu.dot_dimension_numbers<[1], [0], [0], [1], [0, 0, 1, 1], [], []>} : vector<16x64xbf16>, vector<64x192xbf16>, vector<16x192xf32> -> vector<16x192xf32>
    %c1_137 = arith.constant 1 : index
    %c0_138 = arith.constant 0 : index
    %c0_139 = arith.constant 0 : index
    %325 = vector.load %arg5[%c1_137, %c0_138, %c0_139] : memref<2x1x192xf32, #tpu.memory_space<vmem>>, vector<1x1x192xf32>
    %326 = vector.shape_cast %325 : vector<1x1x192xf32> to vector<1x192xf32>
    %327 = vector.broadcast %326 : vector<1x192xf32> to vector<16x192xf32>
    %328 = arith.addf %324, %327 : vector<16x192xf32>
    %329 = vector.extract_strided_slice %328 {offsets = [0, 0], sizes = [16, 64], strides = [1, 1]} : vector<16x192xf32> to vector<16x64xf32>
    %330 = vector.extract_strided_slice %328 {offsets = [0, 64], sizes = [16, 64], strides = [1, 1]} : vector<16x192xf32> to vector<16x64xf32>
    %331 = vector.extract_strided_slice %328 {offsets = [0, 128], sizes = [16, 64], strides = [1, 1]} : vector<16x192xf32> to vector<16x64xf32>
    %c1_140 = arith.constant 1 : index
    %c0_141 = arith.constant 0 : index
    %c0_142 = arith.constant 0 : index
    %332 = vector.load %arg6[%c1_140, %c0_141, %c0_142] : memref<2x64x64xbf16, #tpu.memory_space<vmem>>, vector<1x64x64xbf16>
    %333 = vector.shape_cast %332 : vector<1x64x64xbf16> to vector<64x64xbf16>
    %c1_143 = arith.constant 1 : index
    %c0_144 = arith.constant 0 : index
    %c0_145 = arith.constant 0 : index
    %334 = vector.load %arg7[%c1_143, %c0_144, %c0_145] : memref<2x1x64xf32, #tpu.memory_space<vmem>>, vector<1x1x64xf32>
    %335 = vector.shape_cast %334 : vector<1x1x64xf32> to vector<1x64xf32>
    %336 = arith.truncf %329 : vector<16x64xf32> to vector<16x64xbf16>
    %337 = arith.truncf %330 : vector<16x64xf32> to vector<16x64xbf16>
    %338 = arith.truncf %331 : vector<16x64xf32> to vector<16x64xbf16>
    %339 = vector.extract_strided_slice %336 {offsets = [0, 0], sizes = [16, 16], strides = [1, 1]} : vector<16x64xbf16> to vector<16x16xbf16>
    %340 = vector.extract_strided_slice %337 {offsets = [0, 0], sizes = [16, 16], strides = [1, 1]} : vector<16x64xbf16> to vector<16x16xbf16>
    "tpu.trace_start"() <{level = 10 : i32, message = "td,sd->ts"}> : () -> ()
    %cst_146 = arith.constant dense<0.000000e+00> : vector<16x16xf32>
    %341 = tpu.matmul %339, %340, %cst_146 {dimension_numbers = #tpu.dot_dimension_numbers<[1], [1], [0], [0], [0, 0, 1, 0], [], []>} : vector<16x16xbf16>, vector<16x16xbf16>, vector<16x16xf32> -> vector<16x16xf32>
    "tpu.trace_stop"() : () -> ()
    %342 = arith.addf %341, %3 : vector<16x16xf32>
    %cst_147 = arith.constant dense<0xFF800000> : vector<16xf32>
    %343 = vector.multi_reduction <maximumf>, %342, %cst_147 [1] : vector<16x16xf32> to vector<16xf32>
    %344 = vector.shape_cast %343 : vector<16xf32> to vector<16x1xf32>
    %345 = vector.broadcast %344 : vector<16x1xf32> to vector<16x16xf32>
    %346 = arith.subf %342, %345 : vector<16x16xf32>
    %347 = math.exp %346 : vector<16x16xf32>
    %cst_148 = arith.constant dense<0.000000e+00> : vector<16xf32>
    %348 = vector.multi_reduction <add>, %347, %cst_148 [1] : vector<16x16xf32> to vector<16xf32>
    %349 = vector.shape_cast %348 : vector<16xf32> to vector<16x1xf32>
    %350 = tpu.reciprocal %349 {approx = true} : vector<16x1xf32> -> vector<16x1xf32>
    %351 = vector.broadcast %350 : vector<16x1xf32> to vector<16x16xf32>
    %352 = arith.mulf %347, %351 : vector<16x16xf32>
    %353 = arith.truncf %352 : vector<16x16xf32> to vector<16x16xbf16>
    %354 = vector.extract_strided_slice %338 {offsets = [0, 0], sizes = [16, 16], strides = [1, 1]} : vector<16x64xbf16> to vector<16x16xbf16>
    %cst_149 = arith.constant dense<0.000000e+00> : vector<16x16xf32>
    %355 = tpu.matmul %353, %354, %cst_149 {dimension_numbers = #tpu.dot_dimension_numbers<[1], [0], [0], [1], [0, 0, 1, 1], [], []>} : vector<16x16xbf16>, vector<16x16xbf16>, vector<16x16xf32> -> vector<16x16xf32>
    %356 = vector.extract_strided_slice %336 {offsets = [0, 16], sizes = [16, 16], strides = [1, 1]} : vector<16x64xbf16> to vector<16x16xbf16>
    %357 = vector.extract_strided_slice %337 {offsets = [0, 16], sizes = [16, 16], strides = [1, 1]} : vector<16x64xbf16> to vector<16x16xbf16>
    "tpu.trace_start"() <{level = 10 : i32, message = "td,sd->ts"}> : () -> ()
    %cst_150 = arith.constant dense<0.000000e+00> : vector<16x16xf32>
    %358 = tpu.matmul %356, %357, %cst_150 {dimension_numbers = #tpu.dot_dimension_numbers<[1], [1], [0], [0], [0, 0, 1, 0], [], []>} : vector<16x16xbf16>, vector<16x16xbf16>, vector<16x16xf32> -> vector<16x16xf32>
    "tpu.trace_stop"() : () -> ()
    %359 = arith.addf %358, %3 : vector<16x16xf32>
    %cst_151 = arith.constant dense<0xFF800000> : vector<16xf32>
    %360 = vector.multi_reduction <maximumf>, %359, %cst_151 [1] : vector<16x16xf32> to vector<16xf32>
    %361 = vector.shape_cast %360 : vector<16xf32> to vector<16x1xf32>
    %362 = vector.broadcast %361 : vector<16x1xf32> to vector<16x16xf32>
    %363 = arith.subf %359, %362 : vector<16x16xf32>
    %364 = math.exp %363 : vector<16x16xf32>
    %cst_152 = arith.constant dense<0.000000e+00> : vector<16xf32>
    %365 = vector.multi_reduction <add>, %364, %cst_152 [1] : vector<16x16xf32> to vector<16xf32>
    %366 = vector.shape_cast %365 : vector<16xf32> to vector<16x1xf32>
    %367 = tpu.reciprocal %366 {approx = true} : vector<16x1xf32> -> vector<16x1xf32>
    %368 = vector.broadcast %367 : vector<16x1xf32> to vector<16x16xf32>
    %369 = arith.mulf %364, %368 : vector<16x16xf32>
    %370 = arith.truncf %369 : vector<16x16xf32> to vector<16x16xbf16>
    %371 = vector.extract_strided_slice %338 {offsets = [0, 16], sizes = [16, 16], strides = [1, 1]} : vector<16x64xbf16> to vector<16x16xbf16>
    %cst_153 = arith.constant dense<0.000000e+00> : vector<16x16xf32>
    %372 = tpu.matmul %370, %371, %cst_153 {dimension_numbers = #tpu.dot_dimension_numbers<[1], [0], [0], [1], [0, 0, 1, 1], [], []>} : vector<16x16xbf16>, vector<16x16xbf16>, vector<16x16xf32> -> vector<16x16xf32>
    %373 = vector.extract_strided_slice %336 {offsets = [0, 32], sizes = [16, 16], strides = [1, 1]} : vector<16x64xbf16> to vector<16x16xbf16>
    %374 = vector.extract_strided_slice %337 {offsets = [0, 32], sizes = [16, 16], strides = [1, 1]} : vector<16x64xbf16> to vector<16x16xbf16>
    "tpu.trace_start"() <{level = 10 : i32, message = "td,sd->ts"}> : () -> ()
    %cst_154 = arith.constant dense<0.000000e+00> : vector<16x16xf32>
    %375 = tpu.matmul %373, %374, %cst_154 {dimension_numbers = #tpu.dot_dimension_numbers<[1], [1], [0], [0], [0, 0, 1, 0], [], []>} : vector<16x16xbf16>, vector<16x16xbf16>, vector<16x16xf32> -> vector<16x16xf32>
    "tpu.trace_stop"() : () -> ()
    %376 = arith.addf %375, %3 : vector<16x16xf32>
    %cst_155 = arith.constant dense<0xFF800000> : vector<16xf32>
    %377 = vector.multi_reduction <maximumf>, %376, %cst_155 [1] : vector<16x16xf32> to vector<16xf32>
    %378 = vector.shape_cast %377 : vector<16xf32> to vector<16x1xf32>
    %379 = vector.broadcast %378 : vector<16x1xf32> to vector<16x16xf32>
    %380 = arith.subf %376, %379 : vector<16x16xf32>
    %381 = math.exp %380 : vector<16x16xf32>
    %cst_156 = arith.constant dense<0.000000e+00> : vector<16xf32>
    %382 = vector.multi_reduction <add>, %381, %cst_156 [1] : vector<16x16xf32> to vector<16xf32>
    %383 = vector.shape_cast %382 : vector<16xf32> to vector<16x1xf32>
    %384 = tpu.reciprocal %383 {approx = true} : vector<16x1xf32> -> vector<16x1xf32>
    %385 = vector.broadcast %384 : vector<16x1xf32> to vector<16x16xf32>
    %386 = arith.mulf %381, %385 : vector<16x16xf32>
    %387 = arith.truncf %386 : vector<16x16xf32> to vector<16x16xbf16>
    %388 = vector.extract_strided_slice %338 {offsets = [0, 32], sizes = [16, 16], strides = [1, 1]} : vector<16x64xbf16> to vector<16x16xbf16>
    %cst_157 = arith.constant dense<0.000000e+00> : vector<16x16xf32>
    %389 = tpu.matmul %387, %388, %cst_157 {dimension_numbers = #tpu.dot_dimension_numbers<[1], [0], [0], [1], [0, 0, 1, 1], [], []>} : vector<16x16xbf16>, vector<16x16xbf16>, vector<16x16xf32> -> vector<16x16xf32>
    %390 = vector.extract_strided_slice %336 {offsets = [0, 48], sizes = [16, 16], strides = [1, 1]} : vector<16x64xbf16> to vector<16x16xbf16>
    %391 = vector.extract_strided_slice %337 {offsets = [0, 48], sizes = [16, 16], strides = [1, 1]} : vector<16x64xbf16> to vector<16x16xbf16>
    "tpu.trace_start"() <{level = 10 : i32, message = "td,sd->ts"}> : () -> ()
    %cst_158 = arith.constant dense<0.000000e+00> : vector<16x16xf32>
    %392 = tpu.matmul %390, %391, %cst_158 {dimension_numbers = #tpu.dot_dimension_numbers<[1], [1], [0], [0], [0, 0, 1, 0], [], []>} : vector<16x16xbf16>, vector<16x16xbf16>, vector<16x16xf32> -> vector<16x16xf32>
    "tpu.trace_stop"() : () -> ()
    %393 = arith.addf %392, %3 : vector<16x16xf32>
    %cst_159 = arith.constant dense<0xFF800000> : vector<16xf32>
    %394 = vector.multi_reduction <maximumf>, %393, %cst_159 [1] : vector<16x16xf32> to vector<16xf32>
    %395 = vector.shape_cast %394 : vector<16xf32> to vector<16x1xf32>
    %396 = vector.broadcast %395 : vector<16x1xf32> to vector<16x16xf32>
    %397 = arith.subf %393, %396 : vector<16x16xf32>
    %398 = math.exp %397 : vector<16x16xf32>
    %cst_160 = arith.constant dense<0.000000e+00> : vector<16xf32>
    %399 = vector.multi_reduction <add>, %398, %cst_160 [1] : vector<16x16xf32> to vector<16xf32>
    %400 = vector.shape_cast %399 : vector<16xf32> to vector<16x1xf32>
    %401 = tpu.reciprocal %400 {approx = true} : vector<16x1xf32> -> vector<16x1xf32>
    %402 = vector.broadcast %401 : vector<16x1xf32> to vector<16x16xf32>
    %403 = arith.mulf %398, %402 : vector<16x16xf32>
    %404 = arith.truncf %403 : vector<16x16xf32> to vector<16x16xbf16>
    %405 = vector.extract_strided_slice %338 {offsets = [0, 48], sizes = [16, 16], strides = [1, 1]} : vector<16x64xbf16> to vector<16x16xbf16>
    %cst_161 = arith.constant dense<0.000000e+00> : vector<16x16xf32>
    %406 = tpu.matmul %404, %405, %cst_161 {dimension_numbers = #tpu.dot_dimension_numbers<[1], [0], [0], [1], [0, 0, 1, 1], [], []>} : vector<16x16xbf16>, vector<16x16xbf16>, vector<16x16xf32> -> vector<16x16xf32>
    %407 = tpu.concatenate %355, %372, %389, %406 in 1 : vector<16x16xf32>, vector<16x16xf32>, vector<16x16xf32>, vector<16x16xf32> -> vector<16x64xf32>
    %408 = arith.truncf %407 : vector<16x64xf32> to vector<16x64xbf16>
    %cst_162 = arith.constant dense<0.000000e+00> : vector<16x64xf32>
    %409 = tpu.matmul %408, %333, %cst_162 {dimension_numbers = #tpu.dot_dimension_numbers<[1], [0], [0], [1], [0, 0, 1, 1], [], []>} : vector<16x64xbf16>, vector<64x64xbf16>, vector<16x64xf32> -> vector<16x64xf32>
    %410 = vector.broadcast %335 : vector<1x64xf32> to vector<16x64xf32>
    %411 = arith.addf %409, %410 : vector<16x64xf32>
    %412 = arith.addf %291, %411 : vector<16x64xf32>
    %c1_163 = arith.constant 1 : index
    %c1_164 = arith.constant 1 : index
    %c0_165 = arith.constant 0 : index
    %413 = vector.load %arg14[%c1_163, %c1_164, %c0_165] : memref<2x3x64xf32, #tpu.memory_space<vmem>>, vector<1x1x64xf32>
    %414 = vector.shape_cast %413 : vector<1x1x64xf32> to vector<1x64xf32>
    %c1_166 = arith.constant 1 : index
    %c1_167 = arith.constant 1 : index
    %c0_168 = arith.constant 0 : index
    %415 = vector.load %arg15[%c1_166, %c1_167, %c0_168] : memref<2x3x64xf32, #tpu.memory_space<vmem>>, vector<1x1x64xf32>
    %416 = vector.shape_cast %415 : vector<1x1x64xf32> to vector<1x64xf32>
    %cst_169 = arith.constant dense<0.000000e+00> : vector<16xf32>
    %417 = vector.multi_reduction <add>, %412, %cst_169 [1] : vector<16x64xf32> to vector<16xf32>
    %418 = vector.shape_cast %417 : vector<16xf32> to vector<16x1xf32>
    %cst_170 = arith.constant 6.400000e+01 : f32
    %419 = vector.broadcast %cst_170 : f32 to vector<16x1xf32>
    %420 = arith.divf %418, %419 : vector<16x1xf32>
    %421 = vector.broadcast %420 : vector<16x1xf32> to vector<16x64xf32>
    %422 = arith.subf %412, %421 : vector<16x64xf32>
    %423 = arith.mulf %422, %422 : vector<16x64xf32>
    %cst_171 = arith.constant dense<0.000000e+00> : vector<16xf32>
    %424 = vector.multi_reduction <add>, %423, %cst_171 [1] : vector<16x64xf32> to vector<16xf32>
    %425 = vector.shape_cast %424 : vector<16xf32> to vector<16x1xf32>
    %cst_172 = arith.constant 6.400000e+01 : f32
    %426 = vector.broadcast %cst_172 : f32 to vector<16x1xf32>
    %427 = arith.divf %425, %426 : vector<16x1xf32>
    %428 = vector.broadcast %420 : vector<16x1xf32> to vector<16x64xf32>
    %429 = arith.subf %412, %428 : vector<16x64xf32>
    %cst_173 = arith.constant 9.99999974E-6 : f32
    %430 = vector.broadcast %cst_173 : f32 to vector<16x1xf32>
    %431 = arith.addf %427, %430 : vector<16x1xf32>
    %432 = math.rsqrt %431 : vector<16x1xf32>
    %433 = vector.broadcast %432 : vector<16x1xf32> to vector<16x64xf32>
    %434 = arith.mulf %429, %433 : vector<16x64xf32>
    %435 = vector.broadcast %414 : vector<1x64xf32> to vector<16x64xf32>
    %436 = arith.mulf %434, %435 : vector<16x64xf32>
    %437 = vector.broadcast %416 : vector<1x64xf32> to vector<16x64xf32>
    %438 = arith.addf %436, %437 : vector<16x64xf32>
    %439 = arith.truncf %438 : vector<16x64xf32> to vector<16x64xbf16>
    %c1_174 = arith.constant 1 : index
    %c0_175 = arith.constant 0 : index
    %c0_176 = arith.constant 0 : index
    %440 = vector.load %arg8[%c1_174, %c0_175, %c0_176] : memref<2x64x64xbf16, #tpu.memory_space<vmem>>, vector<1x64x64xbf16>
    %441 = vector.shape_cast %440 : vector<1x64x64xbf16> to vector<64x64xbf16>
    %cst_177 = arith.constant dense<0.000000e+00> : vector<16x64xf32>
    %442 = tpu.matmul %439, %441, %cst_177 {dimension_numbers = #tpu.dot_dimension_numbers<[1], [0], [0], [1], [0, 0, 1, 1], [], []>} : vector<16x64xbf16>, vector<64x64xbf16>, vector<16x64xf32> -> vector<16x64xf32>
    %c1_178 = arith.constant 1 : index
    %c0_179 = arith.constant 0 : index
    %c0_180 = arith.constant 0 : index
    %443 = vector.load %arg9[%c1_178, %c0_179, %c0_180] : memref<2x1x64xf32, #tpu.memory_space<vmem>>, vector<1x1x64xf32>
    %444 = vector.shape_cast %443 : vector<1x1x64xf32> to vector<1x64xf32>
    %445 = vector.broadcast %444 : vector<1x64xf32> to vector<16x64xf32>
    %446 = arith.addf %442, %445 : vector<16x64xf32>
    %c1_181 = arith.constant 1 : index
    %c0_182 = arith.constant 0 : index
    %c0_183 = arith.constant 0 : index
    %447 = vector.load %arg10[%c1_181, %c0_182, %c0_183] : memref<2x64x128xbf16, #tpu.memory_space<vmem>>, vector<1x64x128xbf16>
    %448 = vector.shape_cast %447 : vector<1x64x128xbf16> to vector<64x128xbf16>
    %cst_184 = arith.constant dense<0.000000e+00> : vector<16x128xf32>
    %449 = tpu.matmul %2, %448, %cst_184 {dimension_numbers = #tpu.dot_dimension_numbers<[1], [0], [0], [1], [0, 0, 1, 1], [], []>} : vector<16x64xbf16>, vector<64x128xbf16>, vector<16x128xf32> -> vector<16x128xf32>
    %c1_185 = arith.constant 1 : index
    %c0_186 = arith.constant 0 : index
    %c0_187 = arith.constant 0 : index
    %450 = vector.load %arg11[%c1_185, %c0_186, %c0_187] : memref<2x1x128xf32, #tpu.memory_space<vmem>>, vector<1x1x128xf32>
    %451 = vector.shape_cast %450 : vector<1x1x128xf32> to vector<1x128xf32>
    %452 = vector.broadcast %451 : vector<1x128xf32> to vector<16x128xf32>
    %453 = arith.addf %449, %452 : vector<16x128xf32>
    %454 = vector.extract_strided_slice %453 {offsets = [0, 0], sizes = [16, 64], strides = [1, 1]} : vector<16x128xf32> to vector<16x64xf32>
    %455 = vector.extract_strided_slice %453 {offsets = [0, 64], sizes = [16, 64], strides = [1, 1]} : vector<16x128xf32> to vector<16x64xf32>
    %c1_188 = arith.constant 1 : index
    %c0_189 = arith.constant 0 : index
    %c0_190 = arith.constant 0 : index
    %456 = vector.load %arg12[%c1_188, %c0_189, %c0_190] : memref<2x64x64xbf16, #tpu.memory_space<vmem>>, vector<1x64x64xbf16>
    %457 = vector.shape_cast %456 : vector<1x64x64xbf16> to vector<64x64xbf16>
    %c1_191 = arith.constant 1 : index
    %c0_192 = arith.constant 0 : index
    %c0_193 = arith.constant 0 : index
    %458 = vector.load %arg13[%c1_191, %c0_192, %c0_193] : memref<2x1x64xf32, #tpu.memory_space<vmem>>, vector<1x1x64xf32>
    %459 = vector.shape_cast %458 : vector<1x1x64xf32> to vector<1x64xf32>
    %460 = arith.truncf %446 : vector<16x64xf32> to vector<16x64xbf16>
    %461 = arith.truncf %454 : vector<16x64xf32> to vector<16x64xbf16>
    %462 = arith.truncf %455 : vector<16x64xf32> to vector<16x64xbf16>
    %463 = vector.extract_strided_slice %460 {offsets = [0, 0], sizes = [16, 16], strides = [1, 1]} : vector<16x64xbf16> to vector<16x16xbf16>
    %464 = vector.extract_strided_slice %461 {offsets = [0, 0], sizes = [16, 16], strides = [1, 1]} : vector<16x64xbf16> to vector<16x16xbf16>
    "tpu.trace_start"() <{level = 10 : i32, message = "td,sd->ts"}> : () -> ()
    %cst_194 = arith.constant dense<0.000000e+00> : vector<16x16xf32>
    %465 = tpu.matmul %463, %464, %cst_194 {dimension_numbers = #tpu.dot_dimension_numbers<[1], [1], [0], [0], [0, 0, 1, 0], [], []>} : vector<16x16xbf16>, vector<16x16xbf16>, vector<16x16xf32> -> vector<16x16xf32>
    "tpu.trace_stop"() : () -> ()
    %466 = arith.addf %465, %4 : vector<16x16xf32>
    %cst_195 = arith.constant dense<0xFF800000> : vector<16xf32>
    %467 = vector.multi_reduction <maximumf>, %466, %cst_195 [1] : vector<16x16xf32> to vector<16xf32>
    %468 = vector.shape_cast %467 : vector<16xf32> to vector<16x1xf32>
    %469 = vector.broadcast %468 : vector<16x1xf32> to vector<16x16xf32>
    %470 = arith.subf %466, %469 : vector<16x16xf32>
    %471 = math.exp %470 : vector<16x16xf32>
    %cst_196 = arith.constant dense<0.000000e+00> : vector<16xf32>
    %472 = vector.multi_reduction <add>, %471, %cst_196 [1] : vector<16x16xf32> to vector<16xf32>
    %473 = vector.shape_cast %472 : vector<16xf32> to vector<16x1xf32>
    %474 = vector.broadcast %473 : vector<16x1xf32> to vector<16x16xf32>
    %475 = arith.divf %471, %474 : vector<16x16xf32>
    %476 = arith.truncf %475 : vector<16x16xf32> to vector<16x16xbf16>
    %477 = vector.extract_strided_slice %462 {offsets = [0, 0], sizes = [16, 16], strides = [1, 1]} : vector<16x64xbf16> to vector<16x16xbf16>
    %cst_197 = arith.constant dense<0.000000e+00> : vector<16x16xf32>
    %478 = tpu.matmul %476, %477, %cst_197 {dimension_numbers = #tpu.dot_dimension_numbers<[1], [0], [0], [1], [0, 0, 1, 1], [], []>} : vector<16x16xbf16>, vector<16x16xbf16>, vector<16x16xf32> -> vector<16x16xf32>
    %479 = vector.extract_strided_slice %460 {offsets = [0, 16], sizes = [16, 16], strides = [1, 1]} : vector<16x64xbf16> to vector<16x16xbf16>
    %480 = vector.extract_strided_slice %461 {offsets = [0, 16], sizes = [16, 16], strides = [1, 1]} : vector<16x64xbf16> to vector<16x16xbf16>
    "tpu.trace_start"() <{level = 10 : i32, message = "td,sd->ts"}> : () -> ()
    %cst_198 = arith.constant dense<0.000000e+00> : vector<16x16xf32>
    %481 = tpu.matmul %479, %480, %cst_198 {dimension_numbers = #tpu.dot_dimension_numbers<[1], [1], [0], [0], [0, 0, 1, 0], [], []>} : vector<16x16xbf16>, vector<16x16xbf16>, vector<16x16xf32> -> vector<16x16xf32>
    "tpu.trace_stop"() : () -> ()
    %482 = arith.addf %481, %4 : vector<16x16xf32>
    %cst_199 = arith.constant dense<0xFF800000> : vector<16xf32>
    %483 = vector.multi_reduction <maximumf>, %482, %cst_199 [1] : vector<16x16xf32> to vector<16xf32>
    %484 = vector.shape_cast %483 : vector<16xf32> to vector<16x1xf32>
    %485 = vector.broadcast %484 : vector<16x1xf32> to vector<16x16xf32>
    %486 = arith.subf %482, %485 : vector<16x16xf32>
    %487 = math.exp %486 : vector<16x16xf32>
    %cst_200 = arith.constant dense<0.000000e+00> : vector<16xf32>
    %488 = vector.multi_reduction <add>, %487, %cst_200 [1] : vector<16x16xf32> to vector<16xf32>
    %489 = vector.shape_cast %488 : vector<16xf32> to vector<16x1xf32>
    %490 = vector.broadcast %489 : vector<16x1xf32> to vector<16x16xf32>
    %491 = arith.divf %487, %490 : vector<16x16xf32>
    %492 = arith.addf %475, %491 : vector<16x16xf32>
    %493 = arith.truncf %491 : vector<16x16xf32> to vector<16x16xbf16>
    %494 = vector.extract_strided_slice %462 {offsets = [0, 16], sizes = [16, 16], strides = [1, 1]} : vector<16x64xbf16> to vector<16x16xbf16>
    %cst_201 = arith.constant dense<0.000000e+00> : vector<16x16xf32>
    %495 = tpu.matmul %493, %494, %cst_201 {dimension_numbers = #tpu.dot_dimension_numbers<[1], [0], [0], [1], [0, 0, 1, 1], [], []>} : vector<16x16xbf16>, vector<16x16xbf16>, vector<16x16xf32> -> vector<16x16xf32>
    %496 = vector.extract_strided_slice %460 {offsets = [0, 32], sizes = [16, 16], strides = [1, 1]} : vector<16x64xbf16> to vector<16x16xbf16>
    %497 = vector.extract_strided_slice %461 {offsets = [0, 32], sizes = [16, 16], strides = [1, 1]} : vector<16x64xbf16> to vector<16x16xbf16>
    "tpu.trace_start"() <{level = 10 : i32, message = "td,sd->ts"}> : () -> ()
    %cst_202 = arith.constant dense<0.000000e+00> : vector<16x16xf32>
    %498 = tpu.matmul %496, %497, %cst_202 {dimension_numbers = #tpu.dot_dimension_numbers<[1], [1], [0], [0], [0, 0, 1, 0], [], []>} : vector<16x16xbf16>, vector<16x16xbf16>, vector<16x16xf32> -> vector<16x16xf32>
    "tpu.trace_stop"() : () -> ()
    %499 = arith.addf %498, %4 : vector<16x16xf32>
    %cst_203 = arith.constant dense<0xFF800000> : vector<16xf32>
    %500 = vector.multi_reduction <maximumf>, %499, %cst_203 [1] : vector<16x16xf32> to vector<16xf32>
    %501 = vector.shape_cast %500 : vector<16xf32> to vector<16x1xf32>
    %502 = vector.broadcast %501 : vector<16x1xf32> to vector<16x16xf32>
    %503 = arith.subf %499, %502 : vector<16x16xf32>
    %504 = math.exp %503 : vector<16x16xf32>
    %cst_204 = arith.constant dense<0.000000e+00> : vector<16xf32>
    %505 = vector.multi_reduction <add>, %504, %cst_204 [1] : vector<16x16xf32> to vector<16xf32>
    %506 = vector.shape_cast %505 : vector<16xf32> to vector<16x1xf32>
    %507 = vector.broadcast %506 : vector<16x1xf32> to vector<16x16xf32>
    %508 = arith.divf %504, %507 : vector<16x16xf32>
    %509 = arith.addf %492, %508 : vector<16x16xf32>
    %510 = arith.truncf %508 : vector<16x16xf32> to vector<16x16xbf16>
    %511 = vector.extract_strided_slice %462 {offsets = [0, 32], sizes = [16, 16], strides = [1, 1]} : vector<16x64xbf16> to vector<16x16xbf16>
    %cst_205 = arith.constant dense<0.000000e+00> : vector<16x16xf32>
    %512 = tpu.matmul %510, %511, %cst_205 {dimension_numbers = #tpu.dot_dimension_numbers<[1], [0], [0], [1], [0, 0, 1, 1], [], []>} : vector<16x16xbf16>, vector<16x16xbf16>, vector<16x16xf32> -> vector<16x16xf32>
    %513 = vector.extract_strided_slice %460 {offsets = [0, 48], sizes = [16, 16], strides = [1, 1]} : vector<16x64xbf16> to vector<16x16xbf16>
    %514 = vector.extract_strided_slice %461 {offsets = [0, 48], sizes = [16, 16], strides = [1, 1]} : vector<16x64xbf16> to vector<16x16xbf16>
    "tpu.trace_start"() <{level = 10 : i32, message = "td,sd->ts"}> : () -> ()
    %cst_206 = arith.constant dense<0.000000e+00> : vector<16x16xf32>
    %515 = tpu.matmul %513, %514, %cst_206 {dimension_numbers = #tpu.dot_dimension_numbers<[1], [1], [0], [0], [0, 0, 1, 0], [], []>} : vector<16x16xbf16>, vector<16x16xbf16>, vector<16x16xf32> -> vector<16x16xf32>
    "tpu.trace_stop"() : () -> ()
    %516 = arith.addf %515, %4 : vector<16x16xf32>
    %cst_207 = arith.constant dense<0xFF800000> : vector<16xf32>
    %517 = vector.multi_reduction <maximumf>, %516, %cst_207 [1] : vector<16x16xf32> to vector<16xf32>
    %518 = vector.shape_cast %517 : vector<16xf32> to vector<16x1xf32>
    %519 = vector.broadcast %518 : vector<16x1xf32> to vector<16x16xf32>
    %520 = arith.subf %516, %519 : vector<16x16xf32>
    %521 = math.exp %520 : vector<16x16xf32>
    %cst_208 = arith.constant dense<0.000000e+00> : vector<16xf32>
    %522 = vector.multi_reduction <add>, %521, %cst_208 [1] : vector<16x16xf32> to vector<16xf32>
    %523 = vector.shape_cast %522 : vector<16xf32> to vector<16x1xf32>
    %524 = vector.broadcast %523 : vector<16x1xf32> to vector<16x16xf32>
    %525 = arith.divf %521, %524 : vector<16x16xf32>
    %526 = arith.addf %509, %525 : vector<16x16xf32>
    %527 = arith.truncf %525 : vector<16x16xf32> to vector<16x16xbf16>
    %528 = vector.extract_strided_slice %462 {offsets = [0, 48], sizes = [16, 16], strides = [1, 1]} : vector<16x64xbf16> to vector<16x16xbf16>
    %cst_209 = arith.constant dense<0.000000e+00> : vector<16x16xf32>
    %529 = tpu.matmul %527, %528, %cst_209 {dimension_numbers = #tpu.dot_dimension_numbers<[1], [0], [0], [1], [0, 0, 1, 1], [], []>} : vector<16x16xbf16>, vector<16x16xbf16>, vector<16x16xf32> -> vector<16x16xf32>
    %530 = tpu.concatenate %478, %495, %512, %529 in 1 : vector<16x16xf32>, vector<16x16xf32>, vector<16x16xf32>, vector<16x16xf32> -> vector<16x64xf32>
    %531 = arith.truncf %530 : vector<16x64xf32> to vector<16x64xbf16>
    %cst_210 = arith.constant dense<0.000000e+00> : vector<16x64xf32>
    %532 = tpu.matmul %531, %457, %cst_210 {dimension_numbers = #tpu.dot_dimension_numbers<[1], [0], [0], [1], [0, 0, 1, 1], [], []>} : vector<16x64xbf16>, vector<64x64xbf16>, vector<16x64xf32> -> vector<16x64xf32>
    %533 = vector.broadcast %459 : vector<1x64xf32> to vector<16x64xf32>
    %534 = arith.addf %532, %533 : vector<16x64xf32>
    %cst_211 = arith.constant 2.500000e-01 : f32
    %535 = vector.broadcast %cst_211 : f32 to vector<16x16xf32>
    %536 = arith.mulf %526, %535 : vector<16x16xf32>
    %537 = arith.addf %412, %534 : vector<16x64xf32>
    %c1_212 = arith.constant 1 : index
    %c2_213 = arith.constant 2 : index
    %c0_214 = arith.constant 0 : index
    %538 = vector.load %arg14[%c1_212, %c2_213, %c0_214] : memref<2x3x64xf32, #tpu.memory_space<vmem>>, vector<1x1x64xf32>
    %539 = vector.shape_cast %538 : vector<1x1x64xf32> to vector<1x64xf32>
    %c1_215 = arith.constant 1 : index
    %c2_216 = arith.constant 2 : index
    %c0_217 = arith.constant 0 : index
    %540 = vector.load %arg15[%c1_215, %c2_216, %c0_217] : memref<2x3x64xf32, #tpu.memory_space<vmem>>, vector<1x1x64xf32>
    %541 = vector.shape_cast %540 : vector<1x1x64xf32> to vector<1x64xf32>
    %cst_218 = arith.constant dense<0.000000e+00> : vector<16xf32>
    %542 = vector.multi_reduction <add>, %537, %cst_218 [1] : vector<16x64xf32> to vector<16xf32>
    %543 = vector.shape_cast %542 : vector<16xf32> to vector<16x1xf32>
    %cst_219 = arith.constant 6.400000e+01 : f32
    %544 = vector.broadcast %cst_219 : f32 to vector<16x1xf32>
    %545 = arith.divf %543, %544 : vector<16x1xf32>
    %546 = vector.broadcast %545 : vector<16x1xf32> to vector<16x64xf32>
    %547 = arith.subf %537, %546 : vector<16x64xf32>
    %548 = arith.mulf %547, %547 : vector<16x64xf32>
    %cst_220 = arith.constant dense<0.000000e+00> : vector<16xf32>
    %549 = vector.multi_reduction <add>, %548, %cst_220 [1] : vector<16x64xf32> to vector<16xf32>
    %550 = vector.shape_cast %549 : vector<16xf32> to vector<16x1xf32>
    %cst_221 = arith.constant 6.400000e+01 : f32
    %551 = vector.broadcast %cst_221 : f32 to vector<16x1xf32>
    %552 = arith.divf %550, %551 : vector<16x1xf32>
    %553 = vector.broadcast %545 : vector<16x1xf32> to vector<16x64xf32>
    %554 = arith.subf %537, %553 : vector<16x64xf32>
    %cst_222 = arith.constant 9.99999974E-6 : f32
    %555 = vector.broadcast %cst_222 : f32 to vector<16x1xf32>
    %556 = arith.addf %552, %555 : vector<16x1xf32>
    %557 = math.rsqrt %556 : vector<16x1xf32>
    %558 = vector.broadcast %557 : vector<16x1xf32> to vector<16x64xf32>
    %559 = arith.mulf %554, %558 : vector<16x64xf32>
    %560 = vector.broadcast %539 : vector<1x64xf32> to vector<16x64xf32>
    %561 = arith.mulf %559, %560 : vector<16x64xf32>
    %562 = vector.broadcast %541 : vector<1x64xf32> to vector<16x64xf32>
    %563 = arith.addf %561, %562 : vector<16x64xf32>
    %564 = arith.truncf %563 : vector<16x64xf32> to vector<16x64xbf16>
    %c1_223 = arith.constant 1 : index
    %c0_224 = arith.constant 0 : index
    %c0_225 = arith.constant 0 : index
    %565 = vector.load %arg16[%c1_223, %c0_224, %c0_225] : memref<2x64x128xbf16, #tpu.memory_space<vmem>>, vector<1x64x128xbf16>
    %566 = vector.shape_cast %565 : vector<1x64x128xbf16> to vector<64x128xbf16>
    %cst_226 = arith.constant dense<0.000000e+00> : vector<16x128xf32>
    %567 = tpu.matmul %564, %566, %cst_226 {dimension_numbers = #tpu.dot_dimension_numbers<[1], [0], [0], [1], [0, 0, 1, 1], [], []>} : vector<16x64xbf16>, vector<64x128xbf16>, vector<16x128xf32> -> vector<16x128xf32>
    %c1_227 = arith.constant 1 : index
    %c0_228 = arith.constant 0 : index
    %c0_229 = arith.constant 0 : index
    %568 = vector.load %arg17[%c1_227, %c0_228, %c0_229] : memref<2x1x128xf32, #tpu.memory_space<vmem>>, vector<1x1x128xf32>
    %569 = vector.shape_cast %568 : vector<1x1x128xf32> to vector<1x128xf32>
    %570 = vector.broadcast %569 : vector<1x128xf32> to vector<16x128xf32>
    %571 = arith.addf %567, %570 : vector<16x128xf32>
    %cst_230 = arith.constant 0.000000e+00 : f32
    %572 = vector.broadcast %cst_230 : f32 to vector<16x128xf32>
    %573 = arith.maximumf %571, %572 : vector<16x128xf32>
    %574 = arith.truncf %573 : vector<16x128xf32> to vector<16x128xbf16>
    %c1_231 = arith.constant 1 : index
    %c0_232 = arith.constant 0 : index
    %c0_233 = arith.constant 0 : index
    %575 = vector.load %arg18[%c1_231, %c0_232, %c0_233] : memref<2x128x64xbf16, #tpu.memory_space<vmem>>, vector<1x128x64xbf16>
    %576 = vector.shape_cast %575 : vector<1x128x64xbf16> to vector<128x64xbf16>
    %cst_234 = arith.constant dense<0.000000e+00> : vector<16x64xf32>
    %577 = tpu.matmul %574, %576, %cst_234 {dimension_numbers = #tpu.dot_dimension_numbers<[1], [0], [0], [1], [0, 0, 1, 1], [], []>} : vector<16x128xbf16>, vector<128x64xbf16>, vector<16x64xf32> -> vector<16x64xf32>
    %c1_235 = arith.constant 1 : index
    %c0_236 = arith.constant 0 : index
    %c0_237 = arith.constant 0 : index
    %578 = vector.load %arg19[%c1_235, %c0_236, %c0_237] : memref<2x1x64xf32, #tpu.memory_space<vmem>>, vector<1x1x64xf32>
    %579 = vector.shape_cast %578 : vector<1x1x64xf32> to vector<1x64xf32>
    %580 = vector.broadcast %579 : vector<1x64xf32> to vector<16x64xf32>
    %581 = arith.addf %577, %580 : vector<16x64xf32>
    %582 = arith.addf %537, %581 : vector<16x64xf32>
    %c1_238 = arith.constant 1 : index
    %c0_239 = arith.constant 0 : index
    %c0_240 = arith.constant 0 : index
    %583 = vector.load %arg24[%c1_238, %c0_239, %c0_240] : memref<2x16x64xf32, #tpu.memory_space<vmem>>, vector<1x16x64xf32>
    %584 = vector.shape_cast %583 : vector<1x16x64xf32> to vector<16x64xf32>
    %585 = vector.shape_cast %582 : vector<16x64xf32> to vector<1x16x64xf32>
    tpu.vector_store %arg24[%c1_238, %c0_239, %c0_240], %585 {strides = array<i32>} : memref<2x16x64xf32, #tpu.memory_space<vmem>>, vector<1x16x64xf32>,
    %c0_241 = arith.constant 0 : index
    %c0_242 = arith.constant 0 : index
    %586 = vector.load %arg23[%c0_241, %c0_242] : memref<16x16xf32, #tpu.memory_space<vmem>>, vector<16x16xf32>
    tpu.vector_store %arg23[%c0_241, %c0_242], %536 {strides = array<i32>} : memref<16x16xf32, #tpu.memory_space<vmem>>, vector<16x16xf32>,
    %c0_243 = arith.constant 0 : index
    %c0_244 = arith.constant 0 : index
    %587 = vector.load %arg20[%c0_243, %c0_244] : memref<1x64xf32, #tpu.memory_space<vmem>>, vector<1x64xf32>
    %c0_245 = arith.constant 0 : index
    %c0_246 = arith.constant 0 : index
    %588 = vector.load %arg21[%c0_245, %c0_246] : memref<1x64xf32, #tpu.memory_space<vmem>>, vector<1x64xf32>
    %cst_247 = arith.constant dense<0.000000e+00> : vector<16xf32>
    %589 = vector.multi_reduction <add>, %582, %cst_247 [1] : vector<16x64xf32> to vector<16xf32>
    %590 = vector.shape_cast %589 : vector<16xf32> to vector<16x1xf32>
    %cst_248 = arith.constant 6.400000e+01 : f32
    %591 = vector.broadcast %cst_248 : f32 to vector<16x1xf32>
    %592 = arith.divf %590, %591 : vector<16x1xf32>
    %593 = vector.broadcast %592 : vector<16x1xf32> to vector<16x64xf32>
    %594 = arith.subf %582, %593 : vector<16x64xf32>
    %595 = arith.mulf %594, %594 : vector<16x64xf32>
    %cst_249 = arith.constant dense<0.000000e+00> : vector<16xf32>
    %596 = vector.multi_reduction <add>, %595, %cst_249 [1] : vector<16x64xf32> to vector<16xf32>
    %597 = vector.shape_cast %596 : vector<16xf32> to vector<16x1xf32>
    %cst_250 = arith.constant 6.400000e+01 : f32
    %598 = vector.broadcast %cst_250 : f32 to vector<16x1xf32>
    %599 = arith.divf %597, %598 : vector<16x1xf32>
    %600 = vector.broadcast %592 : vector<16x1xf32> to vector<16x64xf32>
    %601 = arith.subf %582, %600 : vector<16x64xf32>
    %cst_251 = arith.constant 9.99999974E-6 : f32
    %602 = vector.broadcast %cst_251 : f32 to vector<16x1xf32>
    %603 = arith.addf %599, %602 : vector<16x1xf32>
    %604 = math.rsqrt %603 : vector<16x1xf32>
    %605 = vector.broadcast %604 : vector<16x1xf32> to vector<16x64xf32>
    %606 = arith.mulf %601, %605 : vector<16x64xf32>
    %607 = vector.broadcast %587 : vector<1x64xf32> to vector<16x64xf32>
    %608 = arith.mulf %606, %607 : vector<16x64xf32>
    %609 = vector.broadcast %588 : vector<1x64xf32> to vector<16x64xf32>
    %610 = arith.addf %608, %609 : vector<16x64xf32>
    %c0_252 = arith.constant 0 : index
    %c0_253 = arith.constant 0 : index
    %611 = vector.load %arg22[%c0_252, %c0_253] : memref<16x64xf32, #tpu.memory_space<vmem>>, vector<16x64xf32>
    tpu.vector_store %arg22[%c0_252, %c0_253], %610 {strides = array<i32>} : memref<16x64xf32, #tpu.memory_space<vmem>>, vector<16x64xf32>,
    return
  }
}

</mosaic_0001>

<llo_original>
// kernel: multi_att_decoder.1
$region0: #{multi_att_decoder.1}
  #allocation0 [shape = 'u32[]', space=smem, size = 0x4, offset = 0x4, fixed_abs, tag = 'smem constant byte address 0x4 - core index']
  #allocation1 [shape = 'u32[72,128]{1,0:T(1,128)}', space=vmem, size = 0x9000, scoped, tag = 'internal scratch']
  %s0 = inlined_call_operand.vmem [shape: f32[16,64], index: 0, kind: input, shape index: {}]
  %s1 = inlined_call_operand.vmem [shape: f32[16,64], index: 1, kind: input, shape index: {}]
  %s2 = inlined_call_operand.vmem [shape: f32[16,16], index: 2, kind: input, shape index: {}]
  %s3 = inlined_call_operand.vmem [shape: f32[16,16], index: 3, kind: input, shape index: {}]
  %s4 = inlined_call_operand.vmem [shape: bf16[2,64,192], index: 4, kind: input, shape index: {}]
  %s5 = inlined_call_operand.vmem [shape: f32[2,1,192], index: 5, kind: input, shape index: {}]
  %s6 = inlined_call_operand.vmem [shape: bf16[2,64,64], index: 6, kind: input, shape index: {}]
  %s7 = inlined_call_operand.vmem [shape: f32[2,1,64], index: 7, kind: input, shape index: {}]
  %s8 = inlined_call_operand.vmem [shape: bf16[2,64,64], index: 8, kind: input, shape index: {}]
  %s9 = inlined_call_operand.vmem [shape: f32[2,1,64], index: 9, kind: input, shape index: {}]
  %s10 = inlined_call_operand.vmem [shape: bf16[2,64,128], index: 10, kind: input, shape index: {}]
  %s11 = inlined_call_operand.vmem [shape: f32[2,1,128], index: 11, kind: input, shape index: {}]
  %s12 = inlined_call_operand.vmem [shape: bf16[2,64,64], index: 12, kind: input, shape index: {}]
  %s13 = inlined_call_operand.vmem [shape: f32[2,1,64], index: 13, kind: input, shape index: {}]
  %s14 = inlined_call_operand.vmem [shape: f32[2,3,64], index: 14, kind: input, shape index: {}]
  %s15 = inlined_call_operand.vmem [shape: f32[2,3,64], index: 15, kind: input, shape index: {}]
  %s16 = inlined_call_operand.hbm [shape: bf16[2,64,128], index: 16, kind: input, shape index: {}]
  %s17 = inlined_call_operand.vmem [shape: f32[2,1,128], index: 17, kind: input, shape index: {}]
  %s18 = inlined_call_operand.vmem [shape: bf16[2,128,64], index: 18, kind: input, shape index: {}]
  %s19 = inlined_call_operand.vmem [shape: f32[2,1,64], index: 19, kind: input, shape index: {}]
  %s20 = inlined_call_operand.vmem [shape: f32[1,64], index: 20, kind: input, shape index: {}]
  %s21 = inlined_call_operand.vmem [shape: f32[1,64], index: 21, kind: input, shape index: {}]
  %s22 = inlined_call_operand.hbm [shape: f32[16,64], index: 22, kind: output, shape index: {0}]
  %s23 = inlined_call_operand.vmem [shape: f32[16,16], index: 23, kind: output, shape index: {1}]
  %s24 = inlined_call_operand.vmem [shape: f32[2,16,64], index: 24, kind: output, shape index: {2}]
  %25 = xla_tuple %s22, %s23, %s24
  %s26 = sld [smem:[#allocation0]]
  $region118: #{multi_att_decoder.1} parent=0
    _
  %s28 = ssub.s32 1, %s26
  %s29 = scalar_select 0, %s28, %s26
  $region1: #{multi_att_decoder.1} parent=0
    #allocation2 [shape = 'u8[32768]{0}', space=vmem, size = 0x8000, scoped, tag = 'input window, operand 16, single buffered']
    #allocation3 [shape = 's32[1]{0}', space=sflag, size = 0x4, scoped, tag = 'scoped memory for multi_att_decoder.1']
    #allocation4 [shape = 's32[1]{0}', space=sflag, size = 0x4, scoped, tag = 'scoped memory for multi_att_decoder.1']
    #allocation5 [shape = 'u8[8192]{0}', space=vmem, size = 0x2000, scoped, tag = 'output window, operand 0, single buffered']
    %30 = vsyncpa [#allocation3], 0
    %31 = vsyncpa [#allocation4], 0
    // Predicated region
    $region2: #{multi_att_decoder.1} parent=1 // pred_check
      _
    $region3: #{multi_att_decoder.1} parent=1 // pred_check_branch
      %33 = sbr.rel (0) target = $region5
    $region4: #{multi_att_decoder.1} parent=1 // pred_region
      _
    $region5: #{multi_att_decoder.1} parent=1 // pred_fallthru
      _
    // Predicated region
    $region6: #{multi_att_decoder.1} parent=1 // pred_check
      _
    $region7: #{multi_att_decoder.1} parent=1 // pred_check_branch
      %35 = sbr.rel (0) target = $region9
    $region8: #{multi_att_decoder.1} parent=1 // pred_region
      _
    $region9: #{multi_att_decoder.1} parent=1 // pred_fallthru
      _
    // Predicated region
    $region10: #{multi_att_decoder.1} parent=1 // pred_check
      _
    $region11: #{multi_att_decoder.1} parent=1 // pred_check_branch
      %37 = sbr.rel (0) target = $region13
    $region12: #{multi_att_decoder.1} parent=1 // pred_region
      _
    $region13: #{multi_att_decoder.1} parent=1 // pred_fallthru
      _
    // Predicated region
    $region14: #{multi_att_decoder.1} parent=1 // pred_check
      _
    $region15: #{multi_att_decoder.1} parent=1 // pred_check_branch
      %39 = sbr.rel (0) target = $region17
    $region16: #{multi_att_decoder.1} parent=1 // pred_region
      _
    $region17: #{multi_att_decoder.1} parent=1 // pred_fallthru
      _
    // Predicated region
    $region18: #{multi_att_decoder.1} parent=1 // pred_check
      _
    $region19: #{multi_att_decoder.1} parent=1 // pred_check_branch
      %41 = sbr.rel (0) target = $region21
    $region20: #{multi_att_decoder.1} parent=1 // pred_region
      _
    $region21: #{multi_att_decoder.1} parent=1 // pred_fallthru
      _
    // Predicated region
    $region22: #{multi_att_decoder.1} parent=1 // pred_check
      _
    $region23: #{multi_att_decoder.1} parent=1 // pred_check_branch
      %43 = sbr.rel (0) target = $region25
    $region24: #{multi_att_decoder.1} parent=1 // pred_region
      _
    $region25: #{multi_att_decoder.1} parent=1 // pred_fallthru
      _
    // Predicated region
    $region26: #{multi_att_decoder.1} parent=1 // pred_check
      _
    $region27: #{multi_att_decoder.1} parent=1 // pred_check_branch
      %45 = sbr.rel (0) target = $region29
    $region28: #{multi_att_decoder.1} parent=1 // pred_region
      _
    $region29: #{multi_att_decoder.1} parent=1 // pred_fallthru
      _
    // Predicated region
    $region30: #{multi_att_decoder.1} parent=1 // pred_check
      _
    $region31: #{multi_att_decoder.1} parent=1 // pred_check_branch
      %47 = sbr.rel (0) target = $region33
    $region32: #{multi_att_decoder.1} parent=1 // pred_region
      _
    $region33: #{multi_att_decoder.1} parent=1 // pred_fallthru
      _
    // Predicated region
    $region34: #{multi_att_decoder.1} parent=1 // pred_check
      _
    $region35: #{multi_att_decoder.1} parent=1 // pred_check_branch
      %49 = sbr.rel (0) target = $region37
    $region36: #{multi_att_decoder.1} parent=1 // pred_region
      _
    $region37: #{multi_att_decoder.1} parent=1 // pred_fallthru
      _
    // Predicated region
    $region38: #{multi_att_decoder.1} parent=1 // pred_check
      _
    $region39: #{multi_att_decoder.1} parent=1 // pred_check_branch
      %51 = sbr.rel (0) target = $region41
    $region40: #{multi_att_decoder.1} parent=1 // pred_region
      _
    $region41: #{multi_att_decoder.1} parent=1 // pred_fallthru
      _
    // Predicated region
    $region42: #{multi_att_decoder.1} parent=1 // pred_check
      _
    $region43: #{multi_att_decoder.1} parent=1 // pred_check_branch
      %53 = sbr.rel (0) target = $region45
    $region44: #{multi_att_decoder.1} parent=1 // pred_region
      _
    $region45: #{multi_att_decoder.1} parent=1 // pred_fallthru
      _
    // Predicated region
    $region46: #{multi_att_decoder.1} parent=1 // pred_check
      _
    $region47: #{multi_att_decoder.1} parent=1 // pred_check_branch
      %55 = sbr.rel (0) target = $region49
    $region48: #{multi_att_decoder.1} parent=1 // pred_region
      _
    $region49: #{multi_att_decoder.1} parent=1 // pred_fallthru
      _
    // Predicated region
    $region50: #{multi_att_decoder.1} parent=1 // pred_check
      _
    $region51: #{multi_att_decoder.1} parent=1 // pred_check_branch
      %57 = sbr.rel (0) target = $region53
    $region52: #{multi_att_decoder.1} parent=1 // pred_region
      _
    $region53: #{multi_att_decoder.1} parent=1 // pred_fallthru
      _
    // Predicated region
    $region54: #{multi_att_decoder.1} parent=1 // pred_check
      _
    $region55: #{multi_att_decoder.1} parent=1 // pred_check_branch
      %59 = sbr.rel (0) target = $region57
    $region56: #{multi_att_decoder.1} parent=1 // pred_region
      _
    $region57: #{multi_att_decoder.1} parent=1 // pred_fallthru
      _
    // Predicated region
    $region58: #{multi_att_decoder.1} parent=1 // pred_check
      _
    $region59: #{multi_att_decoder.1} parent=1 // pred_check_branch
      %61 = sbr.rel (0) target = $region61
    $region60: #{multi_att_decoder.1} parent=1 // pred_region
      _
    $region61: #{multi_att_decoder.1} parent=1 // pred_fallthru
      _
    // Predicated region
    $region62: #{multi_att_decoder.1} parent=1 // pred_check
      _
    $region63: #{multi_att_decoder.1} parent=1 // pred_check_branch
      %63 = sbr.rel (0) target = $region65
    $region64: #{multi_att_decoder.1} parent=1 // pred_region
      _
    $region65: #{multi_att_decoder.1} parent=1 // pred_fallthru
      _
    // Predicated region
    $region66: #{multi_att_decoder.1} parent=1 // pred_check
      _
    $region67: #{multi_att_decoder.1} parent=1 // pred_check_branch
      %65 = sbr.rel (0) target = $region69
    $region68: #{multi_att_decoder.1} parent=1 // pred_region
      %67 = vsyncadd [#allocation3], 0
      %s68 = sshll.u32 %s16, 4
      %s69 = int_to_ptr.hbm [resolvable:$true] %s68
      %s70 = sshll.u32 [#allocation2], 4
      %s71 = int_to_ptr.vmem [resolvable:$true] %s70
      %76 = dma.hbm_to_vmem [thread:$0]  %s69, 1024, %s71, [#allocation3], 64, 64, 4
    $region69: #{multi_att_decoder.1} parent=1 // pred_fallthru
      _
    // Predicated region
    $region70: #{multi_att_decoder.1} parent=1 // pred_check
      _
    $region71: #{multi_att_decoder.1} parent=1 // pred_check_branch
      %78 = sbr.rel (0) target = $region73
    $region72: #{multi_att_decoder.1} parent=1 // pred_region
      _
    $region73: #{multi_att_decoder.1} parent=1 // pred_fallthru
      _
    // Predicated region
    $region74: #{multi_att_decoder.1} parent=1 // pred_check
      _
    $region75: #{multi_att_decoder.1} parent=1 // pred_check_branch
      %80 = sbr.rel (0) target = $region77
    $region76: #{multi_att_decoder.1} parent=1 // pred_region
      _
    $region77: #{multi_att_decoder.1} parent=1 // pred_fallthru
      _
    // Predicated region
    $region78: #{multi_att_decoder.1} parent=1 // pred_check
      _
    $region79: #{multi_att_decoder.1} parent=1 // pred_check_branch
      %82 = sbr.rel (0) target = $region81
    $region80: #{multi_att_decoder.1} parent=1 // pred_region
      _
    $region81: #{multi_att_decoder.1} parent=1 // pred_fallthru
      _
    // Predicated region
    $region82: #{multi_att_decoder.1} parent=1 // pred_check
      _
    $region83: #{multi_att_decoder.1} parent=1 // pred_check_branch
      %84 = sbr.rel (0) target = $region85
    $region84: #{multi_att_decoder.1} parent=1 // pred_region
      _
    $region85: #{multi_att_decoder.1} parent=1 // pred_fallthru
      _
    // Predicated region
    $region86: #{multi_att_decoder.1} parent=1 // pred_check
      _
    $region87: #{multi_att_decoder.1} parent=1 // pred_check_branch
      %86 = sbr.rel (0) target = $region89
    $region88: #{multi_att_decoder.1} parent=1 // pred_region
      _
    $region89: #{multi_att_decoder.1} parent=1 // pred_fallthru
      _
    // Predicated region
    $region90: #{multi_att_decoder.1} parent=1 // pred_check
      _
    $region91: #{multi_att_decoder.1} parent=1 // pred_check_branch
      %88 = sbr.rel (0) target = $region93
    $region92: #{multi_att_decoder.1} parent=1 // pred_region
      %90 = dma.done [#allocation3], 1024
    $region93: #{multi_att_decoder.1} parent=1 // pred_fallthru
      _
    %v92 = vld [vmem:[%s0] sm:$0xff]
    %v93 = vld [vmem:[%s0 + $0x8] sm:$0xff]
    %v94 = vld [vmem:[%s1] sm:$0xff]
    %v95 = vld [vmem:[%s1 + $0x8] sm:$0xff]
    %v96 = vpack.c.bf16 %v95, %v94
    %v97 = vld [vmem:[%s2] sm:$0xff]
    %v98 = vld [vmem:[%s2 + $0x8] sm:$0xff]
    %v99 = vld [vmem:[%s3] sm:$0xff]
    %v100 = vld [vmem:[%s3 + $0x8] sm:$0xff]
    %v101 = vld [vmem:[%s14] sm:$0x1]
    %v102 = vld [vmem:[%s15] sm:$0x1]
    %vm103 = vcmask 523264
    %v104 = vsel %vm103, %v92, 0.0
    %105 = vadd.xlane.f32.xlu0 %v104
    %v106 = vpop.xlane.xlu0 %105
    %v107 = vsel %vm103, %v93, 0.0
    %108 = vadd.xlane.f32.xlu0 %v107
    %v109 = vpop.xlane.xlu0 %108
    %v110 = vrcp.pop 64.0
    %v111 = vmul.f32 64.0, %v110
    %v112 = vsub.f32 1.0, %v111
    %v113 = vmul.f32 %v110, %v112
    %v114 = vadd.f32 %v110, %v113
    %vm115 = vweird.f32 %v110
    %v116 = vsel %vm115, %v110, %v114
    %v117 = vmul.f32 %v106, %v116
    %v118 = vmul.f32 %v109, %v116
    %v119 = vsub.f32 %v92, %v117
    %v120 = vsub.f32 %v93, %v118
    %v121 = vmul.f32 %v119, %v119
    %v122 = vmul.f32 %v120, %v120
    %v123 = vsel %vm103, %v121, 0.0
    %124 = vadd.xlane.f32.xlu0 %v123
    %v125 = vpop.xlane.xlu0 %124
    %v126 = vsel %vm103, %v122, 0.0
    %127 = vadd.xlane.f32.xlu0 %v126
    %v128 = vpop.xlane.xlu0 %127
    %v129 = vmul.f32 %v125, %v116
    %v130 = vmul.f32 %v128, %v116
    %v131 = vadd.f32 %v129, 1e-05
    %v132 = vadd.f32 %v130, 1e-05
    %v133 = vrsqrt.pop %v131
    %v134 = vmul.f32 %v133, %v131
    %v135 = vmul.f32 %v134, %v133
    %v136 = vmul.f32 0.5, %v135
    %v137 = vsub.f32 1.5, %v136
    %v138 = vmul.f32 %v133, %v137
    %vm139 = vweird.f32 %v131
    %vm140 = vweird.f32 %v133
    %vm141 = vmor %vm139, %vm140
    %v142 = vsel %vm141, %v133, %v138
    %v143 = vrsqrt.pop %v132
    %v144 = vmul.f32 %v143, %v132
    %v145 = vmul.f32 %v144, %v143
    %v146 = vmul.f32 0.5, %v145
    %v147 = vsub.f32 1.5, %v146
    %v148 = vmul.f32 %v143, %v147
    %vm149 = vweird.f32 %v132
    %vm150 = vweird.f32 %v143
    %vm151 = vmor %vm149, %vm150
    %v152 = vsel %vm151, %v143, %v148
    %v153 = vmul.f32 %v119, %v142
    %v154 = vmul.f32 %v120, %v152
    %v155 = vperm.slane %v101, 0
    %v156 = vmul.f32 %v153, %v155
    %v157 = vmul.f32 %v154, %v155
    %v158 = vperm.slane %v102, 0
    %v159 = vadd.f32 %v156, %v158
    %v160 = vadd.f32 %v157, %v158
    %v161 = vpack.c.bf16 %v160, %v159
    %v162 = vld [vmem:[%s4] sm:$0xff]
    %v163 = vld [vmem:[%s4 + $0x8] sm:$0xff]
    %v164 = vld [vmem:[%s4 + $0x10] sm:$0xff]
    %v165 = vld [vmem:[%s4 + $0x18] sm:$0xff]
    %v166 = vld [vmem:[%s4 + $0x20] sm:$0xff]
    %v167 = vld [vmem:[%s4 + $0x28] sm:$0xff]
    %v168 = vld [vmem:[%s4 + $0x30] sm:$0xff]
    %v169 = vld [vmem:[%s4 + $0x38] sm:$0xff]
    %v170 = vld [vmem:[%s5] sm:$0x3]
    %v172 = vperm.slane %v170, 0
    %v173 = vperm.slane %v170, 1
    %v184 = vunpack.c.l.b16 %v162
    %v185 = vunpack.c.h.b16 %v162
    %v186 = vunpack.c.l.b16 %v163
    %v187 = vunpack.c.h.b16 %v163
    %v188 = vunpack.c.l.b16 %v164
    %v189 = vunpack.c.h.b16 %v164
    %v190 = vunpack.c.l.b16 %v165
    %v191 = vunpack.c.h.b16 %v165
    %v192 = vunpack.c.l.b16 %v166
    %v193 = vunpack.c.h.b16 %v166
    %v194 = vunpack.c.l.b16 %v167
    %v195 = vunpack.c.h.b16 %v167
    %v196 = vunpack.c.l.b16 %v168
    %v197 = vunpack.c.h.b16 %v168
    %v198 = vunpack.c.l.b16 %v169
    %v199 = vunpack.c.h.b16 %v169
    %v200 = vpack.c.b16 %v186, %v184
    %v201 = vpack.c.b16 %v187, %v185
    %v202 = vpack.c.b16 %v190, %v188
    %v203 = vpack.c.b16 %v191, %v189
    %v204 = vpack.c.b16 %v194, %v192
    %v205 = vpack.c.b16 %v195, %v193
    %v206 = vpack.c.b16 %v198, %v196
    %v207 = vpack.c.b16 %v199, %v197
    %v217 = vsel %vm103, %v161, 0
    %219 = vmatpush.bf16.msra.mxu0 0
    %220 = vmatpush.bf16.msra.mxu0 0
    %221 = vmatpush.bf16.msra.mxu0 0
    %222 = vmatpush.bf16.msra.mxu0 0
    %223 = vmatpush.bf16.msra.mxu0 %v206
    %224 = vmatpush.bf16.msra.mxu0 %v204
    %225 = vmatpush.bf16.msra.mxu0 %v202
    %226 = vmatpush.bf16.msra.mxu0 %v200
    %227 = vmatmul.bf16.gmra.mxu0 %v217
    %v228 = vpop.f32.mrf.mxu0
    %v229 = vadd.f32 %v172, %v228
    %v230 = vpop.f32.mrf.mxu0
    %v231 = vadd.f32 %v172, %v230
    %232 = vdwg.mxu0
    %233 = vmatpush.bf16.msra.mxu0 0
    %234 = vmatpush.bf16.msra.mxu0 0
    %235 = vmatpush.bf16.msra.mxu0 0
    %236 = vmatpush.bf16.msra.mxu0 0
    %237 = vmatpush.bf16.msra.mxu0 %v207
    %238 = vmatpush.bf16.msra.mxu0 %v205
    %239 = vmatpush.bf16.msra.mxu0 %v203
    %240 = vmatpush.bf16.msra.mxu0 %v201
    %241 = vmatmul.bf16.gmra.mxu0 %v217
    %v242 = vpop.f32.mrf.mxu0
    %v243 = vadd.f32 %v173, %v242
    %v244 = vpop.f32.mrf.mxu0
    %v245 = vadd.f32 %v173, %v244
    %246 = vdwg.mxu0
    %v247 = vld [vmem:[%s6] sm:$0xf]
    %v248 = vld [vmem:[%s6 + $0x4] sm:$0xf]
    %v249 = vld [vmem:[%s6 + $0x8] sm:$0xf]
    %v250 = vld [vmem:[%s6 + $0xc] sm:$0xf]
    %v251 = vld [vmem:[%s6 + $0x10] sm:$0xf]
    %v252 = vld [vmem:[%s6 + $0x14] sm:$0xf]
    %v253 = vld [vmem:[%s6 + $0x18] sm:$0xf]
    %v254 = vld [vmem:[%s6 + $0x1c] sm:$0xf]
    %v255 = vld [vmem:[%s7] sm:$0x1]
    %v256 = vpack.c.bf16 %v229, %v229
    %v257 = vpack.c.bf16 %v231, %v231
    %v258 = vpack.c.bf16 %v243, %v243
    %v259 = vpack.c.bf16 %v245, %v245
    %v262 = vunpack.c.l.b16 %v256
    %v263 = vunpack.c.l.b16 %v257
    %v264 = vpack.c.b16 %v263, %v262
    %265 = vrot.lane.b32.xlu0 %v264, 64
    %v266 = vpop.permute.xlu0 %265
    %vm267 = vcmask 130048
    %v269 = vsel %vm267, %v264, 0
    %v272 = vsel %vm267, %v266, 0
    %274 = vmatpush.bf16.xpose.msra.mxu0 0
    %275 = vmatpush.bf16.xpose.msra.mxu0 0
    %276 = vmatpush.bf16.xpose.msra.mxu0 0
    %277 = vmatpush.bf16.xpose.msra.mxu0 0
    %278 = vmatpush.bf16.xpose.msra.mxu0 0
    %279 = vmatpush.bf16.xpose.msra.mxu0 0
    %280 = vmatpush.bf16.xpose.msra.mxu0 0
    %281 = vmatpush.bf16.xpose.msra.mxu0 %v272
    %282 = vmatmul.bf16.gmra.mxu0 %v269
    %v283 = vpop.f32.mrf.mxu0
    %v284 = vadd.f32 %v97, %v283
    %v285 = vpop.f32.mrf.mxu0
    %v286 = vadd.f32 %v98, %v285
    %287 = vdwg.mxu0
    %v288 = vsel %vm267, %v284, -inf
    %289 = vmax.xlane.f32.xlu0 %v288
    %v290 = vpop.xlane.xlu0 %289
    %v291 = vsel %vm267, %v286, -inf
    %292 = vmax.xlane.f32.xlu0 %v291
    %v293 = vpop.xlane.xlu0 %292
    %v294 = vsub.f32 %v284, %v290
    %v295 = vsub.f32 %v286, %v293
    %v296 = vmul.f32 %v294, 1.442695
    %v297 = vpow.pop %v296
    %v298 = vmul.f32 %v295, 1.442695
    %v299 = vpow.pop %v298
    %v300 = vsel %vm267, %v297, 0.0
    %301 = vadd.xlane.f32.xlu0 %v300
    %v302 = vpop.xlane.xlu0 %301
    %v303 = vsel %vm267, %v299, 0.0
    %304 = vadd.xlane.f32.xlu0 %v303
    %v305 = vpop.xlane.xlu0 %304
    %v306 = vrcp.pop %v302
    %v307 = vrcp.pop %v305
    %v308 = vmul.f32 %v297, %v306
    %v309 = vmul.f32 %v299, %v307
    %v310 = vpack.c.bf16 %v309, %v308
    %v313 = vunpack.c.l.b16 %v258
    %v314 = vunpack.c.l.b16 %v259
    %v315 = vpack.c.b16 %v314, %v313
    %v318 = vsel %vm267, %v310, 0
    %320 = vmatpush.bf16.msra.mxu0 0
    %321 = vmatpush.bf16.msra.mxu0 0
    %322 = vmatpush.bf16.msra.mxu0 0
    %323 = vmatpush.bf16.msra.mxu0 0
    %324 = vmatpush.bf16.msra.mxu0 0
    %325 = vmatpush.bf16.msra.mxu0 0
    %326 = vmatpush.bf16.msra.mxu0 0
    %327 = vmatpush.bf16.msra.mxu0 %v315
    %328 = vmatmul.bf16.gmra.mxu0 %v318
    %v329 = vpop.f32.mrf.mxu0
    %v330 = vadd.f32 0.0, %v329
    %v331 = vpop.f32.mrf.mxu0
    %v332 = vadd.f32 0.0, %v331
    %333 = vdwg.mxu0
    %334 = vrot.lane.b32.xlu0 %v264, 112
    %v335 = vpop.permute.xlu0 %334
    %336 = vrot.lane.b32.xlu0 %v264, 48
    %v337 = vpop.permute.xlu0 %336
    %v339 = vsel %vm267, %v335, 0
    %v342 = vsel %vm267, %v337, 0
    %344 = vmatpush.bf16.xpose.msra.mxu0 0
    %345 = vmatpush.bf16.xpose.msra.mxu0 0
    %346 = vmatpush.bf16.xpose.msra.mxu0 0
    %347 = vmatpush.bf16.xpose.msra.mxu0 0
    %348 = vmatpush.bf16.xpose.msra.mxu0 0
    %349 = vmatpush.bf16.xpose.msra.mxu0 0
    %350 = vmatpush.bf16.xpose.msra.mxu0 0
    %351 = vmatpush.bf16.xpose.msra.mxu0 %v342
    %352 = vmatmul.bf16.gmra.mxu0 %v339
    %v353 = vpop.f32.mrf.mxu0
    %v354 = vadd.f32 %v97, %v353
    %v355 = vpop.f32.mrf.mxu0
    %v356 = vadd.f32 %v98, %v355
    %357 = vdwg.mxu0
    %v358 = vsel %vm267, %v354, -inf
    %359 = vmax.xlane.f32.xlu0 %v358
    %v360 = vpop.xlane.xlu0 %359
    %v361 = vsel %vm267, %v356, -inf
    %362 = vmax.xlane.f32.xlu0 %v361
    %v363 = vpop.xlane.xlu0 %362
    %v364 = vsub.f32 %v354, %v360
    %v365 = vsub.f32 %v356, %v363
    %v366 = vmul.f32 %v364, 1.442695
    %v367 = vpow.pop %v366
    %v368 = vmul.f32 %v365, 1.442695
    %v369 = vpow.pop %v368
    %v370 = vsel %vm267, %v367, 0.0
    %371 = vadd.xlane.f32.xlu0 %v370
    %v372 = vpop.xlane.xlu0 %371
    %v373 = vsel %vm267, %v369, 0.0
    %374 = vadd.xlane.f32.xlu0 %v373
    %v375 = vpop.xlane.xlu0 %374
    %v376 = vrcp.pop %v372
    %v377 = vrcp.pop %v375
    %v378 = vmul.f32 %v367, %v376
    %v379 = vmul.f32 %v369, %v377
    %v380 = vpack.c.bf16 %v379, %v378
    %381 = vrot.lane.b32.xlu0 %v315, 112
    %v382 = vpop.permute.xlu0 %381
    %v385 = vsel %vm267, %v380, 0
    %387 = vmatpush.bf16.msra.mxu0 0
    %388 = vmatpush.bf16.msra.mxu0 0
    %389 = vmatpush.bf16.msra.mxu0 0
    %390 = vmatpush.bf16.msra.mxu0 0
    %391 = vmatpush.bf16.msra.mxu0 0
    %392 = vmatpush.bf16.msra.mxu0 0
    %393 = vmatpush.bf16.msra.mxu0 0
    %394 = vmatpush.bf16.msra.mxu0 %v382
    %395 = vmatmul.bf16.gmra.mxu0 %v385
    %v396 = vpop.f32.mrf.mxu0
    %v397 = vadd.f32 0.0, %v396
    %v398 = vpop.f32.mrf.mxu0
    %v399 = vadd.f32 0.0, %v398
    %400 = vdwg.mxu0
    %401 = vrot.lane.b32.xlu0 %v264, 96
    %v402 = vpop.permute.xlu0 %401
    %403 = vrot.lane.b32.xlu0 %v264, 32
    %v404 = vpop.permute.xlu0 %403
    %v406 = vsel %vm267, %v402, 0
    %v409 = vsel %vm267, %v404, 0
    %411 = vmatpush.bf16.xpose.msra.mxu0 0
    %412 = vmatpush.bf16.xpose.msra.mxu0 0
    %413 = vmatpush.bf16.xpose.msra.mxu0 0
    %414 = vmatpush.bf16.xpose.msra.mxu0 0
    %415 = vmatpush.bf16.xpose.msra.mxu0 0
    %416 = vmatpush.bf16.xpose.msra.mxu0 0
    %417 = vmatpush.bf16.xpose.msra.mxu0 0
    %418 = vmatpush.bf16.xpose.msra.mxu0 %v409
    %419 = vmatmul.bf16.gmra.mxu0 %v406
    %v420 = vpop.f32.mrf.mxu0
    %v421 = vadd.f32 %v97, %v420
    %v422 = vpop.f32.mrf.mxu0
    %v423 = vadd.f32 %v98, %v422
    %424 = vdwg.mxu0
    %v425 = vsel %vm267, %v421, -inf
    %426 = vmax.xlane.f32.xlu0 %v425
    %v427 = vpop.xlane.xlu0 %426
    %v428 = vsel %vm267, %v423, -inf
    %429 = vmax.xlane.f32.xlu0 %v428
    %v430 = vpop.xlane.xlu0 %429
    %v431 = vsub.f32 %v421, %v427
    %v432 = vsub.f32 %v423, %v430
    %v433 = vmul.f32 %v431, 1.442695
    %v434 = vpow.pop %v433
    %v435 = vmul.f32 %v432, 1.442695
    %v436 = vpow.pop %v435
    %v437 = vsel %vm267, %v434, 0.0
    %438 = vadd.xlane.f32.xlu0 %v437
    %v439 = vpop.xlane.xlu0 %438
    %v440 = vsel %vm267, %v436, 0.0
    %441 = vadd.xlane.f32.xlu0 %v440
    %v442 = vpop.xlane.xlu0 %441
    %v443 = vrcp.pop %v439
    %v444 = vrcp.pop %v442
    %v445 = vmul.f32 %v434, %v443
    %v446 = vmul.f32 %v436, %v444
    %v447 = vpack.c.bf16 %v446, %v445
    %448 = vrot.lane.b32.xlu0 %v315, 96
    %v449 = vpop.permute.xlu0 %448
    %v452 = vsel %vm267, %v447, 0
    %454 = vmatpush.bf16.msra.mxu0 0
    %455 = vmatpush.bf16.msra.mxu0 0
    %456 = vmatpush.bf16.msra.mxu0 0
    %457 = vmatpush.bf16.msra.mxu0 0
    %458 = vmatpush.bf16.msra.mxu0 0
    %459 = vmatpush.bf16.msra.mxu0 0
    %460 = vmatpush.bf16.msra.mxu0 0
    %461 = vmatpush.bf16.msra.mxu0 %v449
    %462 = vmatmul.bf16.gmra.mxu0 %v452
    %v463 = vpop.f32.mrf.mxu0
    %v464 = vadd.f32 0.0, %v463
    %v465 = vpop.f32.mrf.mxu0
    %v466 = vadd.f32 0.0, %v465
    %467 = vdwg.mxu0
    %468 = vrot.lane.b32.xlu0 %v264, 80
    %v469 = vpop.permute.xlu0 %468
    %470 = vrot.lane.b32.xlu0 %v264, 16
    %v471 = vpop.permute.xlu0 %470
    %v473 = vsel %vm267, %v469, 0
    %v476 = vsel %vm267, %v471, 0
    %478 = vmatpush.bf16.xpose.msra.mxu0 0
    %479 = vmatpush.bf16.xpose.msra.mxu0 0
    %480 = vmatpush.bf16.xpose.msra.mxu0 0
    %481 = vmatpush.bf16.xpose.msra.mxu0 0
    %482 = vmatpush.bf16.xpose.msra.mxu0 0
    %483 = vmatpush.bf16.xpose.msra.mxu0 0
    %484 = vmatpush.bf16.xpose.msra.mxu0 0
    %485 = vmatpush.bf16.xpose.msra.mxu0 %v476
    %486 = vmatmul.bf16.gmra.mxu0 %v473
    %v487 = vpop.f32.mrf.mxu0
    %v488 = vadd.f32 %v97, %v487
    %v489 = vpop.f32.mrf.mxu0
    %v490 = vadd.f32 %v98, %v489
    %491 = vdwg.mxu0
    %v492 = vsel %vm267, %v488, -inf
    %493 = vmax.xlane.f32.xlu0 %v492
    %v494 = vpop.xlane.xlu0 %493
    %v495 = vsel %vm267, %v490, -inf
    %496 = vmax.xlane.f32.xlu0 %v495
    %v497 = vpop.xlane.xlu0 %496
    %v498 = vsub.f32 %v488, %v494
    %v499 = vsub.f32 %v490, %v497
    %v500 = vmul.f32 %v498, 1.442695
    %v501 = vpow.pop %v500
    %v502 = vmul.f32 %v499, 1.442695
    %v503 = vpow.pop %v502
    %v504 = vsel %vm267, %v501, 0.0
    %505 = vadd.xlane.f32.xlu0 %v504
    %v506 = vpop.xlane.xlu0 %505
    %v507 = vsel %vm267, %v503, 0.0
    %508 = vadd.xlane.f32.xlu0 %v507
    %v509 = vpop.xlane.xlu0 %508
    %v510 = vrcp.pop %v506
    %v511 = vrcp.pop %v509
    %v512 = vmul.f32 %v501, %v510
    %v513 = vmul.f32 %v503, %v511
    %v514 = vpack.c.bf16 %v513, %v512
    %515 = vrot.lane.b32.xlu0 %v315, 80
    %v516 = vpop.permute.xlu0 %515
    %v519 = vsel %vm267, %v514, 0
    %521 = vmatpush.bf16.msra.mxu0 0
    %522 = vmatpush.bf16.msra.mxu0 0
    %523 = vmatpush.bf16.msra.mxu0 0
    %524 = vmatpush.bf16.msra.mxu0 0
    %525 = vmatpush.bf16.msra.mxu0 0
    %526 = vmatpush.bf16.msra.mxu0 0
    %527 = vmatpush.bf16.msra.mxu0 0
    %528 = vmatpush.bf16.msra.mxu0 %v516
    %529 = vmatmul.bf16.gmra.mxu0 %v519
    %v530 = vpop.f32.mrf.mxu0
    %v531 = vadd.f32 0.0, %v530
    %v532 = vpop.f32.mrf.mxu0
    %v533 = vadd.f32 0.0, %v532
    %534 = vdwg.mxu0
    %537 = vrot.lane.b32.xlu0 %v397, 16
    %v538 = vpop.permute.xlu0 %537
    %539 = vrot.lane.b32.xlu0 %v399, 16
    %v540 = vpop.permute.xlu0 %539
    %545 = vrot.lane.b32.xlu0 %v464, 32
    %v546 = vpop.permute.xlu0 %545
    %547 = vrot.lane.b32.xlu0 %v466, 32
    %v548 = vpop.permute.xlu0 %547
    %553 = vrot.lane.b32.xlu0 %v531, 48
    %v554 = vpop.permute.xlu0 %553
    %555 = vrot.lane.b32.xlu0 %v533, 48
    %v556 = vpop.permute.xlu0 %555
    %v559 = vsel %vm267, %v330, %v538
    %v560 = vsel %vm267, %v332, %v540
    %vm561 = vcmask 261120
    %v562 = vsel %vm561, %v559, %v546
    %v563 = vsel %vm561, %v560, %v548
    %vm564 = vcmask 392192
    %v565 = vsel %vm564, %v562, %v554
    %v566 = vsel %vm564, %v563, %v556
    %v567 = vpack.c.bf16 %v566, %v565
    %v569 = vperm.slane %v255, 0
    %v579 = vunpack.c.l.b16 %v247
    %v580 = vunpack.c.l.b16 %v248
    %v581 = vunpack.c.l.b16 %v249
    %v582 = vunpack.c.l.b16 %v250
    %v583 = vunpack.c.l.b16 %v251
    %v584 = vunpack.c.l.b16 %v252
    %v585 = vunpack.c.l.b16 %v253
    %v586 = vunpack.c.l.b16 %v254
    %v587 = vpack.c.b16 %v580, %v579
    %v588 = vpack.c.b16 %v582, %v581
    %v589 = vpack.c.b16 %v584, %v583
    %v590 = vpack.c.b16 %v586, %v585
    %v596 = vsel %vm103, %v567, 0
    %598 = vmatpush.bf16.msra.mxu0 0
    %599 = vmatpush.bf16.msra.mxu0 0
    %600 = vmatpush.bf16.msra.mxu0 0
    %601 = vmatpush.bf16.msra.mxu0 0
    %602 = vmatpush.bf16.msra.mxu0 %v590
    %603 = vmatpush.bf16.msra.mxu0 %v589
    %604 = vmatpush.bf16.msra.mxu0 %v588
    %605 = vmatpush.bf16.msra.mxu0 %v587
    %606 = vmatmul.bf16.gmra.mxu0 %v596
    %v607 = vpop.f32.mrf.mxu0
    %v608 = vadd.f32 %v569, %v607
    %v609 = vpop.f32.mrf.mxu0
    %v610 = vadd.f32 %v569, %v609
    %611 = vdwg.mxu0
    %v612 = vadd.f32 %v92, %v608
    %v613 = vadd.f32 %v93, %v610
    %v614 = vld [vmem:[%s14 + $0x1] sm:$0x1]
    %v615 = vld [vmem:[%s15 + $0x1] sm:$0x1]
    %v616 = vsel %vm103, %v612, 0.0
    %617 = vadd.xlane.f32.xlu0 %v616
    %v618 = vpop.xlane.xlu0 %617
    %v619 = vsel %vm103, %v613, 0.0
    %620 = vadd.xlane.f32.xlu0 %v619
    %v621 = vpop.xlane.xlu0 %620
    %v622 = vmul.f32 %v618, %v116
    %v623 = vmul.f32 %v621, %v116
    %v624 = vsub.f32 %v612, %v622
    %v625 = vsub.f32 %v613, %v623
    %v626 = vmul.f32 %v624, %v624
    %v627 = vmul.f32 %v625, %v625
    %v628 = vsel %vm103, %v626, 0.0
    %629 = vadd.xlane.f32.xlu0 %v628
    %v630 = vpop.xlane.xlu0 %629
    %v631 = vsel %vm103, %v627, 0.0
    %632 = vadd.xlane.f32.xlu0 %v631
    %v633 = vpop.xlane.xlu0 %632
    %v634 = vmul.f32 %v630, %v116
    %v635 = vmul.f32 %v633, %v116
    %v636 = vadd.f32 %v634, 1e-05
    %v637 = vadd.f32 %v635, 1e-05
    %v638 = vrsqrt.pop %v636
    %v639 = vmul.f32 %v638, %v636
    %v640 = vmul.f32 %v639, %v638
    %v641 = vmul.f32 0.5, %v640
    %v642 = vsub.f32 1.5, %v641
    %v643 = vmul.f32 %v638, %v642
    %vm644 = vweird.f32 %v636
    %vm645 = vweird.f32 %v638
    %vm646 = vmor %vm644, %vm645
    %v647 = vsel %vm646, %v638, %v643
    %v648 = vrsqrt.pop %v637
    %v649 = vmul.f32 %v648, %v637
    %v650 = vmul.f32 %v649, %v648
    %v651 = vmul.f32 0.5, %v650
    %v652 = vsub.f32 1.5, %v651
    %v653 = vmul.f32 %v648, %v652
    %vm654 = vweird.f32 %v637
    %vm655 = vweird.f32 %v648
    %vm656 = vmor %vm654, %vm655
    %v657 = vsel %vm656, %v648, %v653
    %v658 = vmul.f32 %v624, %v647
    %v659 = vmul.f32 %v625, %v657
    %v660 = vperm.slane %v614, 0
    %v661 = vmul.f32 %v658, %v660
    %v662 = vmul.f32 %v659, %v660
    %v663 = vperm.slane %v615, 0
    %v664 = vadd.f32 %v661, %v663
    %v665 = vadd.f32 %v662, %v663
    %v666 = vpack.c.bf16 %v665, %v664
    %v667 = vld [vmem:[%s8] sm:$0xf]
    %v668 = vld [vmem:[%s8 + $0x4] sm:$0xf]
    %v669 = vld [vmem:[%s8 + $0x8] sm:$0xf]
    %v670 = vld [vmem:[%s8 + $0xc] sm:$0xf]
    %v671 = vld [vmem:[%s8 + $0x10] sm:$0xf]
    %v672 = vld [vmem:[%s8 + $0x14] sm:$0xf]
    %v673 = vld [vmem:[%s8 + $0x18] sm:$0xf]
    %v674 = vld [vmem:[%s8 + $0x1c] sm:$0xf]
    %v675 = vld [vmem:[%s9] sm:$0x1]
    %v677 = vperm.slane %v675, 0
    %v687 = vunpack.c.l.b16 %v667
    %v688 = vunpack.c.l.b16 %v668
    %v689 = vunpack.c.l.b16 %v669
    %v690 = vunpack.c.l.b16 %v670
    %v691 = vunpack.c.l.b16 %v671
    %v692 = vunpack.c.l.b16 %v672
    %v693 = vunpack.c.l.b16 %v673
    %v694 = vunpack.c.l.b16 %v674
    %v695 = vpack.c.b16 %v688, %v687
    %v696 = vpack.c.b16 %v690, %v689
    %v697 = vpack.c.b16 %v692, %v691
    %v698 = vpack.c.b16 %v694, %v693
    %v704 = vsel %vm103, %v666, 0
    %706 = vmatpush.bf16.msra.mxu0 0
    %707 = vmatpush.bf16.msra.mxu0 0
    %708 = vmatpush.bf16.msra.mxu0 0
    %709 = vmatpush.bf16.msra.mxu0 0
    %710 = vmatpush.bf16.msra.mxu0 %v698
    %711 = vmatpush.bf16.msra.mxu0 %v697
    %712 = vmatpush.bf16.msra.mxu0 %v696
    %713 = vmatpush.bf16.msra.mxu0 %v695
    %714 = vmatmul.bf16.gmra.mxu0 %v704
    %v715 = vpop.f32.mrf.mxu0
    %v716 = vadd.f32 %v677, %v715
    %v717 = vpop.f32.mrf.mxu0
    %v718 = vadd.f32 %v677, %v717
    %719 = vdwg.mxu0
    %v720 = vld [vmem:[%s10] sm:$0xf]
    %v721 = vld [vmem:[%s10 + $0x4] sm:$0xf]
    %v722 = vld [vmem:[%s10 + $0x8] sm:$0xf]
    %v723 = vld [vmem:[%s10 + $0xc] sm:$0xf]
    %v724 = vld [vmem:[%s10 + $0x10] sm:$0xf]
    %v725 = vld [vmem:[%s10 + $0x14] sm:$0xf]
    %v726 = vld [vmem:[%s10 + $0x18] sm:$0xf]
    %v727 = vld [vmem:[%s10 + $0x1c] sm:$0xf]
    %v728 = vld [vmem:[%s11] sm:$0x1]
    %v730 = vperm.slane %v728, 0
    %v740 = vunpack.c.l.b16 %v720
    %v741 = vunpack.c.l.b16 %v721
    %v742 = vunpack.c.l.b16 %v722
    %v743 = vunpack.c.l.b16 %v723
    %v744 = vunpack.c.l.b16 %v724
    %v745 = vunpack.c.l.b16 %v725
    %v746 = vunpack.c.l.b16 %v726
    %v747 = vunpack.c.l.b16 %v727
    %v748 = vpack.c.b16 %v741, %v740
    %v749 = vpack.c.b16 %v743, %v742
    %v750 = vpack.c.b16 %v745, %v744
    %v751 = vpack.c.b16 %v747, %v746
    %v757 = vsel %vm103, %v96, 0
    %759 = vmatpush.bf16.msra.mxu0 0
    %760 = vmatpush.bf16.msra.mxu0 0
    %761 = vmatpush.bf16.msra.mxu0 0
    %762 = vmatpush.bf16.msra.mxu0 0
    %763 = vmatpush.bf16.msra.mxu0 %v751
    %764 = vmatpush.bf16.msra.mxu0 %v750
    %765 = vmatpush.bf16.msra.mxu0 %v749
    %766 = vmatpush.bf16.msra.mxu0 %v748
    %767 = vmatmul.bf16.gmra.mxu0 %v757
    %v768 = vpop.f32.mrf.mxu0
    %v769 = vadd.f32 %v730, %v768
    %v770 = vpop.f32.mrf.mxu0
    %v771 = vadd.f32 %v730, %v770
    %772 = vdwg.mxu0
    %v773 = vld [vmem:[%s12] sm:$0xf]
    %v774 = vld [vmem:[%s12 + $0x4] sm:$0xf]
    %v775 = vld [vmem:[%s12 + $0x8] sm:$0xf]
    %v776 = vld [vmem:[%s12 + $0xc] sm:$0xf]
    %v777 = vld [vmem:[%s12 + $0x10] sm:$0xf]
    %v778 = vld [vmem:[%s12 + $0x14] sm:$0xf]
    %v779 = vld [vmem:[%s12 + $0x18] sm:$0xf]
    %v780 = vld [vmem:[%s12 + $0x1c] sm:$0xf]
    %v781 = vld [vmem:[%s13] sm:$0x1]
    %v782 = vpack.c.bf16 %v716, %v716
    %v783 = vpack.c.bf16 %v718, %v718
    %v784 = vpack.c.bf16 %v769, %v769
    %v785 = vpack.c.bf16 %v771, %v771
    %v788 = vunpack.c.l.b16 %v782
    %v789 = vunpack.c.l.b16 %v783
    %v790 = vpack.c.b16 %v789, %v788
    %v793 = vunpack.c.l.b16 %v784
    %v794 = vunpack.c.l.b16 %v785
    %v795 = vpack.c.b16 %v794, %v793
    %v797 = vsel %vm267, %v790, 0
    %v800 = vsel %vm267, %v795, 0
    %802 = vmatpush.bf16.xpose.msra.mxu0 0
    %803 = vmatpush.bf16.xpose.msra.mxu0 0
    %804 = vmatpush.bf16.xpose.msra.mxu0 0
    %805 = vmatpush.bf16.xpose.msra.mxu0 0
    %806 = vmatpush.bf16.xpose.msra.mxu0 0
    %807 = vmatpush.bf16.xpose.msra.mxu0 0
    %808 = vmatpush.bf16.xpose.msra.mxu0 0
    %809 = vmatpush.bf16.xpose.msra.mxu0 %v800
    %810 = vmatmul.bf16.gmra.mxu0 %v797
    %v811 = vpop.f32.mrf.mxu0
    %v812 = vadd.f32 %v99, %v811
    %v813 = vpop.f32.mrf.mxu0
    %v814 = vadd.f32 %v100, %v813
    %815 = vdwg.mxu0
    %v816 = vsel %vm267, %v812, -inf
    %817 = vmax.xlane.f32.xlu0 %v816
    %v818 = vpop.xlane.xlu0 %817
    %v819 = vsel %vm267, %v814, -inf
    %820 = vmax.xlane.f32.xlu0 %v819
    %v821 = vpop.xlane.xlu0 %820
    %v822 = vsub.f32 %v812, %v818
    %v823 = vsub.f32 %v814, %v821
    %v824 = vmul.f32 %v822, 1.442695
    %v825 = vpow.pop %v824
    %v826 = vmul.f32 %v823, 1.442695
    %v827 = vpow.pop %v826
    %v828 = vsel %vm267, %v825, 0.0
    %829 = vadd.xlane.f32.xlu0 %v828
    %v830 = vpop.xlane.xlu0 %829
    %v831 = vsel %vm267, %v827, 0.0
    %832 = vadd.xlane.f32.xlu0 %v831
    %v833 = vpop.xlane.xlu0 %832
    %v834 = vrcp.pop %v830
    %v835 = vrcp.pop %v833
    %v836 = vmul.f32 %v825, %v834
    %v837 = vmul.f32 %v827, %v835
    %v838 = vpack.c.bf16 %v837, %v836
    %839 = vrot.lane.b32.xlu0 %v795, 64
    %v840 = vpop.permute.xlu0 %839
    %v843 = vsel %vm267, %v838, 0
    %845 = vmatpush.bf16.msra.mxu0 0
    %846 = vmatpush.bf16.msra.mxu0 0
    %847 = vmatpush.bf16.msra.mxu0 0
    %848 = vmatpush.bf16.msra.mxu0 0
    %849 = vmatpush.bf16.msra.mxu0 0
    %850 = vmatpush.bf16.msra.mxu0 0
    %851 = vmatpush.bf16.msra.mxu0 0
    %852 = vmatpush.bf16.msra.mxu0 %v840
    %853 = vmatmul.bf16.gmra.mxu0 %v843
    %v854 = vpop.f32.mrf.mxu0
    %v855 = vadd.f32 0.0, %v854
    %v856 = vpop.f32.mrf.mxu0
    %v857 = vadd.f32 0.0, %v856
    %858 = vdwg.mxu0
    %859 = vrot.lane.b32.xlu0 %v790, 112
    %v860 = vpop.permute.xlu0 %859
    %861 = vrot.lane.b32.xlu0 %v795, 112
    %v862 = vpop.permute.xlu0 %861
    %v864 = vsel %vm267, %v860, 0
    %v867 = vsel %vm267, %v862, 0
    %869 = vmatpush.bf16.xpose.msra.mxu0 0
    %870 = vmatpush.bf16.xpose.msra.mxu0 0
    %871 = vmatpush.bf16.xpose.msra.mxu0 0
    %872 = vmatpush.bf16.xpose.msra.mxu0 0
    %873 = vmatpush.bf16.xpose.msra.mxu0 0
    %874 = vmatpush.bf16.xpose.msra.mxu0 0
    %875 = vmatpush.bf16.xpose.msra.mxu0 0
    %876 = vmatpush.bf16.xpose.msra.mxu0 %v867
    %877 = vmatmul.bf16.gmra.mxu0 %v864
    %v878 = vpop.f32.mrf.mxu0
    %v879 = vadd.f32 %v99, %v878
    %v880 = vpop.f32.mrf.mxu0
    %v881 = vadd.f32 %v100, %v880
    %882 = vdwg.mxu0
    %v883 = vsel %vm267, %v879, -inf
    %884 = vmax.xlane.f32.xlu0 %v883
    %v885 = vpop.xlane.xlu0 %884
    %v886 = vsel %vm267, %v881, -inf
    %887 = vmax.xlane.f32.xlu0 %v886
    %v888 = vpop.xlane.xlu0 %887
    %v889 = vsub.f32 %v879, %v885
    %v890 = vsub.f32 %v881, %v888
    %v891 = vmul.f32 %v889, 1.442695
    %v892 = vpow.pop %v891
    %v893 = vmul.f32 %v890, 1.442695
    %v894 = vpow.pop %v893
    %v895 = vsel %vm267, %v892, 0.0
    %896 = vadd.xlane.f32.xlu0 %v895
    %v897 = vpop.xlane.xlu0 %896
    %v898 = vsel %vm267, %v894, 0.0
    %899 = vadd.xlane.f32.xlu0 %v898
    %v900 = vpop.xlane.xlu0 %899
    %v901 = vrcp.pop %v897
    %v902 = vrcp.pop %v900
    %v903 = vmul.f32 %v892, %v901
    %v904 = vmul.f32 %v894, %v902
    %v905 = vpack.c.bf16 %v904, %v903
    %906 = vrot.lane.b32.xlu0 %v795, 48
    %v907 = vpop.permute.xlu0 %906
    %v910 = vsel %vm267, %v905, 0
    %912 = vmatpush.bf16.msra.mxu0 0
    %913 = vmatpush.bf16.msra.mxu0 0
    %914 = vmatpush.bf16.msra.mxu0 0
    %915 = vmatpush.bf16.msra.mxu0 0
    %916 = vmatpush.bf16.msra.mxu0 0
    %917 = vmatpush.bf16.msra.mxu0 0
    %918 = vmatpush.bf16.msra.mxu0 0
    %919 = vmatpush.bf16.msra.mxu0 %v907
    %920 = vmatmul.bf16.gmra.mxu0 %v910
    %v921 = vpop.f32.mrf.mxu0
    %v922 = vadd.f32 0.0, %v921
    %v923 = vpop.f32.mrf.mxu0
    %v924 = vadd.f32 0.0, %v923
    %925 = vdwg.mxu0
    %926 = vrot.lane.b32.xlu0 %v790, 96
    %v927 = vpop.permute.xlu0 %926
    %928 = vrot.lane.b32.xlu0 %v795, 96
    %v929 = vpop.permute.xlu0 %928
    %v931 = vsel %vm267, %v927, 0
    %v934 = vsel %vm267, %v929, 0
    %936 = vmatpush.bf16.xpose.msra.mxu0 0
    %937 = vmatpush.bf16.xpose.msra.mxu0 0
    %938 = vmatpush.bf16.xpose.msra.mxu0 0
    %939 = vmatpush.bf16.xpose.msra.mxu0 0
    %940 = vmatpush.bf16.xpose.msra.mxu0 0
    %941 = vmatpush.bf16.xpose.msra.mxu0 0
    %942 = vmatpush.bf16.xpose.msra.mxu0 0
    %943 = vmatpush.bf16.xpose.msra.mxu0 %v934
    %944 = vmatmul.bf16.gmra.mxu0 %v931
    %v945 = vpop.f32.mrf.mxu0
    %v946 = vadd.f32 %v99, %v945
    %v947 = vpop.f32.mrf.mxu0
    %v948 = vadd.f32 %v100, %v947
    %949 = vdwg.mxu0
    %v950 = vsel %vm267, %v946, -inf
    %951 = vmax.xlane.f32.xlu0 %v950
    %v952 = vpop.xlane.xlu0 %951
    %v953 = vsel %vm267, %v948, -inf
    %954 = vmax.xlane.f32.xlu0 %v953
    %v955 = vpop.xlane.xlu0 %954
    %v956 = vsub.f32 %v946, %v952
    %v957 = vsub.f32 %v948, %v955
    %v958 = vmul.f32 %v956, 1.442695
    %v959 = vpow.pop %v958
    %v960 = vmul.f32 %v957, 1.442695
    %v961 = vpow.pop %v960
    %v962 = vsel %vm267, %v959, 0.0
    %963 = vadd.xlane.f32.xlu0 %v962
    %v964 = vpop.xlane.xlu0 %963
    %v965 = vsel %vm267, %v961, 0.0
    %966 = vadd.xlane.f32.xlu0 %v965
    %v967 = vpop.xlane.xlu0 %966
    %v968 = vrcp.pop %v964
    %v969 = vrcp.pop %v967
    %v970 = vmul.f32 %v959, %v968
    %v971 = vmul.f32 %v961, %v969
    %v972 = vpack.c.bf16 %v971, %v970
    %973 = vrot.lane.b32.xlu0 %v795, 32
    %v974 = vpop.permute.xlu0 %973
    %v977 = vsel %vm267, %v972, 0
    %979 = vmatpush.bf16.msra.mxu0 0
    %980 = vmatpush.bf16.msra.mxu0 0
    %981 = vmatpush.bf16.msra.mxu0 0
    %982 = vmatpush.bf16.msra.mxu0 0
    %983 = vmatpush.bf16.msra.mxu0 0
    %984 = vmatpush.bf16.msra.mxu0 0
    %985 = vmatpush.bf16.msra.mxu0 0
    %986 = vmatpush.bf16.msra.mxu0 %v974
    %987 = vmatmul.bf16.gmra.mxu0 %v977
    %v988 = vpop.f32.mrf.mxu0
    %v989 = vadd.f32 0.0, %v988
    %v990 = vpop.f32.mrf.mxu0
    %v991 = vadd.f32 0.0, %v990
    %992 = vdwg.mxu0
    %993 = vrot.lane.b32.xlu0 %v790, 80
    %v994 = vpop.permute.xlu0 %993
    %995 = vrot.lane.b32.xlu0 %v795, 80
    %v996 = vpop.permute.xlu0 %995
    %v998 = vsel %vm267, %v994, 0
    %v1001 = vsel %vm267, %v996, 0
    %1003 = vmatpush.bf16.xpose.msra.mxu0 0
    %1004 = vmatpush.bf16.xpose.msra.mxu0 0
    %1005 = vmatpush.bf16.xpose.msra.mxu0 0
    %1006 = vmatpush.bf16.xpose.msra.mxu0 0
    %1007 = vmatpush.bf16.xpose.msra.mxu0 0
    %1008 = vmatpush.bf16.xpose.msra.mxu0 0
    %1009 = vmatpush.bf16.xpose.msra.mxu0 0
    %1010 = vmatpush.bf16.xpose.msra.mxu0 %v1001
    %1011 = vmatmul.bf16.gmra.mxu0 %v998
    %v1012 = vpop.f32.mrf.mxu0
    %v1013 = vadd.f32 %v99, %v1012
    %v1014 = vpop.f32.mrf.mxu0
    %v1015 = vadd.f32 %v100, %v1014
    %1016 = vdwg.mxu0
    %v1017 = vsel %vm267, %v1013, -inf
    %1018 = vmax.xlane.f32.xlu0 %v1017
    %v1019 = vpop.xlane.xlu0 %1018
    %v1020 = vsel %vm267, %v1015, -inf
    %1021 = vmax.xlane.f32.xlu0 %v1020
    %v1022 = vpop.xlane.xlu0 %1021
    %v1023 = vsub.f32 %v1013, %v1019
    %v1024 = vsub.f32 %v1015, %v1022
    %v1025 = vmul.f32 %v1023, 1.442695
    %v1026 = vpow.pop %v1025
    %v1027 = vmul.f32 %v1024, 1.442695
    %v1028 = vpow.pop %v1027
    %v1029 = vsel %vm267, %v1026, 0.0
    %1030 = vadd.xlane.f32.xlu0 %v1029
    %v1031 = vpop.xlane.xlu0 %1030
    %v1032 = vsel %vm267, %v1028, 0.0
    %1033 = vadd.xlane.f32.xlu0 %v1032
    %v1034 = vpop.xlane.xlu0 %1033
    %v1035 = vrcp.pop %v1031
    %v1036 = vrcp.pop %v1034
    %v1037 = vmul.f32 %v1026, %v1035
    %v1038 = vmul.f32 %v1028, %v1036
    %v1039 = vpack.c.bf16 %v1038, %v1037
    %1040 = vrot.lane.b32.xlu0 %v795, 16
    %v1041 = vpop.permute.xlu0 %1040
    %v1044 = vsel %vm267, %v1039, 0
    %1046 = vmatpush.bf16.msra.mxu0 0
    %1047 = vmatpush.bf16.msra.mxu0 0
    %1048 = vmatpush.bf16.msra.mxu0 0
    %1049 = vmatpush.bf16.msra.mxu0 0
    %1050 = vmatpush.bf16.msra.mxu0 0
    %1051 = vmatpush.bf16.msra.mxu0 0
    %1052 = vmatpush.bf16.msra.mxu0 0
    %1053 = vmatpush.bf16.msra.mxu0 %v1041
    %1054 = vmatmul.bf16.gmra.mxu0 %v1044
    %v1055 = vpop.f32.mrf.mxu0
    %v1056 = vadd.f32 0.0, %v1055
    %v1057 = vpop.f32.mrf.mxu0
    %v1058 = vadd.f32 0.0, %v1057
    %1059 = vdwg.mxu0
    %1062 = vrot.lane.b32.xlu0 %v922, 16
    %v1063 = vpop.permute.xlu0 %1062
    %1064 = vrot.lane.b32.xlu0 %v924, 16
    %v1065 = vpop.permute.xlu0 %1064
    %1070 = vrot.lane.b32.xlu0 %v989, 32
    %v1071 = vpop.permute.xlu0 %1070
    %1072 = vrot.lane.b32.xlu0 %v991, 32
    %v1073 = vpop.permute.xlu0 %1072
    %1078 = vrot.lane.b32.xlu0 %v1056, 48
    %v1079 = vpop.permute.xlu0 %1078
    %1080 = vrot.lane.b32.xlu0 %v1058, 48
    %v1081 = vpop.permute.xlu0 %1080
    %v1084 = vsel %vm267, %v855, %v1063
    %v1085 = vsel %vm267, %v857, %v1065
    %v1086 = vsel %vm561, %v1084, %v1071
    %v1087 = vsel %vm561, %v1085, %v1073
    %v1088 = vsel %vm564, %v1086, %v1079
    %v1089 = vsel %vm564, %v1087, %v1081
    %v1090 = vpack.c.bf16 %v1089, %v1088
    %v1092 = vperm.slane %v781, 0
    %v1102 = vunpack.c.l.b16 %v773
    %v1103 = vunpack.c.l.b16 %v774
    %v1104 = vunpack.c.l.b16 %v775
    %v1105 = vunpack.c.l.b16 %v776
    %v1106 = vunpack.c.l.b16 %v777
    %v1107 = vunpack.c.l.b16 %v778
    %v1108 = vunpack.c.l.b16 %v779
    %v1109 = vunpack.c.l.b16 %v780
    %v1110 = vpack.c.b16 %v1103, %v1102
    %v1111 = vpack.c.b16 %v1105, %v1104
    %v1112 = vpack.c.b16 %v1107, %v1106
    %v1113 = vpack.c.b16 %v1109, %v1108
    %v1119 = vsel %vm103, %v1090, 0
    %1121 = vmatpush.bf16.msra.mxu0 0
    %1122 = vmatpush.bf16.msra.mxu0 0
    %1123 = vmatpush.bf16.msra.mxu0 0
    %1124 = vmatpush.bf16.msra.mxu0 0
    %1125 = vmatpush.bf16.msra.mxu0 %v1113
    %1126 = vmatpush.bf16.msra.mxu0 %v1112
    %1127 = vmatpush.bf16.msra.mxu0 %v1111
    %1128 = vmatpush.bf16.msra.mxu0 %v1110
    %1129 = vmatmul.bf16.gmra.mxu0 %v1119
    %v1130 = vpop.f32.mrf.mxu0
    %v1131 = vadd.f32 %v1092, %v1130
    %v1132 = vpop.f32.mrf.mxu0
    %v1133 = vadd.f32 %v1092, %v1132
    %1134 = vdwg.mxu0
    %v1135 = vadd.f32 %v612, %v1131
    %v1136 = vadd.f32 %v613, %v1133
    %v1137 = vld [vmem:[%s14 + $0x2] sm:$0x1]
    %v1138 = vld [vmem:[%s15 + $0x2] sm:$0x1]
    %v1139 = vsel %vm103, %v1135, 0.0
    %1140 = vadd.xlane.f32.xlu0 %v1139
    %v1141 = vpop.xlane.xlu0 %1140
    %v1142 = vsel %vm103, %v1136, 0.0
    %1143 = vadd.xlane.f32.xlu0 %v1142
    %v1144 = vpop.xlane.xlu0 %1143
    %v1145 = vmul.f32 %v1141, %v116
    %v1146 = vmul.f32 %v1144, %v116
    %v1147 = vsub.f32 %v1135, %v1145
    %v1148 = vsub.f32 %v1136, %v1146
    %v1149 = vmul.f32 %v1147, %v1147
    %v1150 = vmul.f32 %v1148, %v1148
    %v1151 = vsel %vm103, %v1149, 0.0
    %1152 = vadd.xlane.f32.xlu0 %v1151
    %v1153 = vpop.xlane.xlu0 %1152
    %v1154 = vsel %vm103, %v1150, 0.0
    %1155 = vadd.xlane.f32.xlu0 %v1154
    %v1156 = vpop.xlane.xlu0 %1155
    %v1157 = vmul.f32 %v1153, %v116
    %v1158 = vmul.f32 %v1156, %v116
    %v1159 = vadd.f32 %v1157, 1e-05
    %v1160 = vadd.f32 %v1158, 1e-05
    %v1161 = vrsqrt.pop %v1159
    %v1162 = vmul.f32 %v1161, %v1159
    %v1163 = vmul.f32 %v1162, %v1161
    %v1164 = vmul.f32 0.5, %v1163
    %v1165 = vsub.f32 1.5, %v1164
    %v1166 = vmul.f32 %v1161, %v1165
    %vm1167 = vweird.f32 %v1159
    %vm1168 = vweird.f32 %v1161
    %vm1169 = vmor %vm1167, %vm1168
    %v1170 = vsel %vm1169, %v1161, %v1166
    %v1171 = vrsqrt.pop %v1160
    %v1172 = vmul.f32 %v1171, %v1160
    %v1173 = vmul.f32 %v1172, %v1171
    %v1174 = vmul.f32 0.5, %v1173
    %v1175 = vsub.f32 1.5, %v1174
    %v1176 = vmul.f32 %v1171, %v1175
    %vm1177 = vweird.f32 %v1160
    %vm1178 = vweird.f32 %v1171
    %vm1179 = vmor %vm1177, %vm1178
    %v1180 = vsel %vm1179, %v1171, %v1176
    %v1181 = vmul.f32 %v1147, %v1170
    %v1182 = vmul.f32 %v1148, %v1180
    %v1183 = vperm.slane %v1137, 0
    %v1184 = vmul.f32 %v1181, %v1183
    %v1185 = vmul.f32 %v1182, %v1183
    %v1186 = vperm.slane %v1138, 0
    %v1187 = vadd.f32 %v1184, %v1186
    %v1188 = vadd.f32 %v1185, %v1186
    %v1189 = vpack.c.bf16 %v1188, %v1187
    %v1190 = vld [vmem:[#allocation2] sm:$0xf]
    %v1191 = vld [vmem:[#allocation2 + $0x4] sm:$0xf]
    %v1192 = vld [vmem:[#allocation2 + $0x8] sm:$0xf]
    %v1193 = vld [vmem:[#allocation2 + $0xc] sm:$0xf]
    %v1194 = vld [vmem:[#allocation2 + $0x10] sm:$0xf]
    %v1195 = vld [vmem:[#allocation2 + $0x14] sm:$0xf]
    %v1196 = vld [vmem:[#allocation2 + $0x18] sm:$0xf]
    %v1197 = vld [vmem:[#allocation2 + $0x1c] sm:$0xf]
    %v1198 = vld [vmem:[%s17] sm:$0x1]
    %v1200 = vperm.slane %v1198, 0
    %v1210 = vunpack.c.l.b16 %v1190
    %v1211 = vunpack.c.l.b16 %v1191
    %v1212 = vunpack.c.l.b16 %v1192
    %v1213 = vunpack.c.l.b16 %v1193
    %v1214 = vunpack.c.l.b16 %v1194
    %v1215 = vunpack.c.l.b16 %v1195
    %v1216 = vunpack.c.l.b16 %v1196
    %v1217 = vunpack.c.l.b16 %v1197
    %v1218 = vpack.c.b16 %v1211, %v1210
    %v1219 = vpack.c.b16 %v1213, %v1212
    %v1220 = vpack.c.b16 %v1215, %v1214
    %v1221 = vpack.c.b16 %v1217, %v1216
    %v1227 = vsel %vm103, %v1189, 0
    %1229 = vmatpush.bf16.msra.mxu0 0
    %1230 = vmatpush.bf16.msra.mxu0 0
    %1231 = vmatpush.bf16.msra.mxu0 0
    %1232 = vmatpush.bf16.msra.mxu0 0
    %1233 = vmatpush.bf16.msra.mxu0 %v1221
    %1234 = vmatpush.bf16.msra.mxu0 %v1220
    %1235 = vmatpush.bf16.msra.mxu0 %v1219
    %1236 = vmatpush.bf16.msra.mxu0 %v1218
    %1237 = vmatmul.bf16.gmra.mxu0 %v1227
    %v1238 = vpop.f32.mrf.mxu0
    %v1239 = vadd.f32 %v1200, %v1238
    %v1240 = vpop.f32.mrf.mxu0
    %v1241 = vadd.f32 %v1200, %v1240
    %1242 = vdwg.mxu0
    %v1243 = vmax.f32 %v1239, 0.0
    %v1244 = vmax.f32 %v1241, 0.0
    %v1245 = vpack.c.bf16 %v1244, %v1243
    %v1246 = vld [vmem:[%s18] sm:$0xf]
    %v1247 = vld [vmem:[%s18 + $0x4] sm:$0xf]
    %v1248 = vld [vmem:[%s18 + $0x8] sm:$0xf]
    %v1249 = vld [vmem:[%s18 + $0xc] sm:$0xf]
    %v1250 = vld [vmem:[%s18 + $0x10] sm:$0xf]
    %v1251 = vld [vmem:[%s18 + $0x14] sm:$0xf]
    %v1252 = vld [vmem:[%s18 + $0x18] sm:$0xf]
    %v1253 = vld [vmem:[%s18 + $0x1c] sm:$0xf]
    %v1254 = vld [vmem:[%s18 + $0x20] sm:$0xf]
    %v1255 = vld [vmem:[%s18 + $0x24] sm:$0xf]
    %v1256 = vld [vmem:[%s18 + $0x28] sm:$0xf]
    %v1257 = vld [vmem:[%s18 + $0x2c] sm:$0xf]
    %v1258 = vld [vmem:[%s18 + $0x30] sm:$0xf]
    %v1259 = vld [vmem:[%s18 + $0x34] sm:$0xf]
    %v1260 = vld [vmem:[%s18 + $0x38] sm:$0xf]
    %v1261 = vld [vmem:[%s18 + $0x3c] sm:$0xf]
    %v1262 = vld [vmem:[%s19] sm:$0x1]
    %v1264 = vperm.slane %v1262, 0
    %v1282 = vunpack.c.l.b16 %v1246
    %v1283 = vunpack.c.l.b16 %v1247
    %v1284 = vunpack.c.l.b16 %v1248
    %v1285 = vunpack.c.l.b16 %v1249
    %v1286 = vunpack.c.l.b16 %v1250
    %v1287 = vunpack.c.l.b16 %v1251
    %v1288 = vunpack.c.l.b16 %v1252
    %v1289 = vunpack.c.l.b16 %v1253
    %v1290 = vunpack.c.l.b16 %v1254
    %v1291 = vunpack.c.l.b16 %v1255
    %v1292 = vunpack.c.l.b16 %v1256
    %v1293 = vunpack.c.l.b16 %v1257
    %v1294 = vunpack.c.l.b16 %v1258
    %v1295 = vunpack.c.l.b16 %v1259
    %v1296 = vunpack.c.l.b16 %v1260
    %v1297 = vunpack.c.l.b16 %v1261
    %v1298 = vpack.c.b16 %v1283, %v1282
    %v1299 = vpack.c.b16 %v1285, %v1284
    %v1300 = vpack.c.b16 %v1287, %v1286
    %v1301 = vpack.c.b16 %v1289, %v1288
    %v1302 = vpack.c.b16 %v1291, %v1290
    %v1303 = vpack.c.b16 %v1293, %v1292
    %v1304 = vpack.c.b16 %v1295, %v1294
    %v1305 = vpack.c.b16 %v1297, %v1296
    %1314 = vmatpush.bf16.msra.mxu0 %v1305
    %1315 = vmatpush.bf16.msra.mxu0 %v1304
    %1316 = vmatpush.bf16.msra.mxu0 %v1303
    %1317 = vmatpush.bf16.msra.mxu0 %v1302
    %1318 = vmatpush.bf16.msra.mxu0 %v1301
    %1319 = vmatpush.bf16.msra.mxu0 %v1300
    %1320 = vmatpush.bf16.msra.mxu0 %v1299
    %1321 = vmatpush.bf16.msra.mxu0 %v1298
    %1322 = vmatmul.bf16.gmra.mxu0 %v1245
    %v1323 = vpop.f32.mrf.mxu0
    %v1324 = vadd.f32 %v1264, %v1323
    %v1325 = vpop.f32.mrf.mxu0
    %v1326 = vadd.f32 %v1264, %v1325
    %1327 = vdwg.mxu0
    %v1328 = vadd.f32 %v1135, %v1324
    %v1329 = vadd.f32 %v1136, %v1326
    %1330 = vst.msk [vmem:[%s24] sm:$0xff] %vm103, %v1328
    %1331 = vst.msk [vmem:[%s24 + $0x8] sm:$0xff] %vm103, %v1329
    %s1332 = scalar_lea.vmem %s14, 4
    %v1333 = vld [vmem:[%s1332] sm:$0x1]
    %s1334 = scalar_lea.vmem %s15, 4
    %v1335 = vld [vmem:[%s1334] sm:$0x1]
    %v1336 = vsel %vm103, %v1328, 0.0
    %1337 = vadd.xlane.f32.xlu0 %v1336
    %v1338 = vpop.xlane.xlu0 %1337
    %v1339 = vsel %vm103, %v1329, 0.0
    %1340 = vadd.xlane.f32.xlu0 %v1339
    %v1341 = vpop.xlane.xlu0 %1340
    %v1342 = vmul.f32 %v1338, %v116
    %v1343 = vmul.f32 %v1341, %v116
    %v1344 = vsub.f32 %v1328, %v1342
    %v1345 = vsub.f32 %v1329, %v1343
    %v1346 = vmul.f32 %v1344, %v1344
    %v1347 = vmul.f32 %v1345, %v1345
    %v1348 = vsel %vm103, %v1346, 0.0
    %1349 = vadd.xlane.f32.xlu0 %v1348
    %v1350 = vpop.xlane.xlu0 %1349
    %v1351 = vsel %vm103, %v1347, 0.0
    %1352 = vadd.xlane.f32.xlu0 %v1351
    %v1353 = vpop.xlane.xlu0 %1352
    %v1354 = vmul.f32 %v1350, %v116
    %v1355 = vmul.f32 %v1353, %v116
    %v1356 = vadd.f32 %v1354, 1e-05
    %v1357 = vadd.f32 %v1355, 1e-05
    %v1358 = vrsqrt.pop %v1356
    %v1359 = vmul.f32 %v1358, %v1356
    %v1360 = vmul.f32 %v1359, %v1358
    %v1361 = vmul.f32 0.5, %v1360
    %v1362 = vsub.f32 1.5, %v1361
    %v1363 = vmul.f32 %v1358, %v1362
    %vm1364 = vweird.f32 %v1356
    %vm1365 = vweird.f32 %v1358
    %vm1366 = vmor %vm1364, %vm1365
    %v1367 = vsel %vm1366, %v1358, %v1363
    %v1368 = vrsqrt.pop %v1357
    %v1369 = vmul.f32 %v1368, %v1357
    %v1370 = vmul.f32 %v1369, %v1368
    %v1371 = vmul.f32 0.5, %v1370
    %v1372 = vsub.f32 1.5, %v1371
    %v1373 = vmul.f32 %v1368, %v1372
    %vm1374 = vweird.f32 %v1357
    %vm1375 = vweird.f32 %v1368
    %vm1376 = vmor %vm1374, %vm1375
    %v1377 = vsel %vm1376, %v1368, %v1373
    %v1378 = vmul.f32 %v1344, %v1367
    %v1379 = vmul.f32 %v1345, %v1377
    %v1380 = vperm.slane %v1333, 0
    %v1381 = vmul.f32 %v1378, %v1380
    %v1382 = vmul.f32 %v1379, %v1380
    %v1383 = vperm.slane %v1335, 0
    %v1384 = vadd.f32 %v1381, %v1383
    %v1385 = vadd.f32 %v1382, %v1383
    %v1386 = vpack.c.bf16 %v1385, %v1384
    %s1387 = scalar_lea.vmem %s4, 64
    %v1388 = vld [vmem:[%s1387] sm:$0xff]
    %v1389 = vld [vmem:[%s1387 + $0x8] sm:$0xff]
    %v1390 = vld [vmem:[%s1387 + $0x10] sm:$0xff]
    %v1391 = vld [vmem:[%s1387 + $0x18] sm:$0xff]
    %v1392 = vld [vmem:[%s1387 + $0x20] sm:$0xff]
    %v1393 = vld [vmem:[%s1387 + $0x28] sm:$0xff]
    %v1394 = vld [vmem:[%s1387 + $0x30] sm:$0xff]
    %v1395 = vld [vmem:[%s1387 + $0x38] sm:$0xff]
    %s1396 = scalar_lea.vmem %s5, 2
    %v1397 = vld [vmem:[%s1396] sm:$0x3]
    %v1399 = vperm.slane %v1397, 0
    %v1400 = vperm.slane %v1397, 1
    %v1411 = vunpack.c.l.b16 %v1388
    %v1412 = vunpack.c.h.b16 %v1388
    %v1413 = vunpack.c.l.b16 %v1389
    %v1414 = vunpack.c.h.b16 %v1389
    %v1415 = vunpack.c.l.b16 %v1390
    %v1416 = vunpack.c.h.b16 %v1390
    %v1417 = vunpack.c.l.b16 %v1391
    %v1418 = vunpack.c.h.b16 %v1391
    %v1419 = vunpack.c.l.b16 %v1392
    %v1420 = vunpack.c.h.b16 %v1392
    %v1421 = vunpack.c.l.b16 %v1393
    %v1422 = vunpack.c.h.b16 %v1393
    %v1423 = vunpack.c.l.b16 %v1394
    %v1424 = vunpack.c.h.b16 %v1394
    %v1425 = vunpack.c.l.b16 %v1395
    %v1426 = vunpack.c.h.b16 %v1395
    %v1427 = vpack.c.b16 %v1413, %v1411
    %v1428 = vpack.c.b16 %v1414, %v1412
    %v1429 = vpack.c.b16 %v1417, %v1415
    %v1430 = vpack.c.b16 %v1418, %v1416
    %v1431 = vpack.c.b16 %v1421, %v1419
    %v1432 = vpack.c.b16 %v1422, %v1420
    %v1433 = vpack.c.b16 %v1425, %v1423
    %v1434 = vpack.c.b16 %v1426, %v1424
    %v1444 = vsel %vm103, %v1386, 0
    %1446 = vmatpush.bf16.msra.mxu0 0
    %1447 = vmatpush.bf16.msra.mxu0 0
    %1448 = vmatpush.bf16.msra.mxu0 0
    %1449 = vmatpush.bf16.msra.mxu0 0
    %1450 = vmatpush.bf16.msra.mxu0 %v1433
    %1451 = vmatpush.bf16.msra.mxu0 %v1431
    %1452 = vmatpush.bf16.msra.mxu0 %v1429
    %1453 = vmatpush.bf16.msra.mxu0 %v1427
    %1454 = vmatmul.bf16.gmra.mxu0 %v1444
    %v1455 = vpop.f32.mrf.mxu0
    %v1456 = vadd.f32 %v1399, %v1455
    %v1457 = vpop.f32.mrf.mxu0
    %v1458 = vadd.f32 %v1399, %v1457
    %1459 = vdwg.mxu0
    %1460 = vmatpush.bf16.msra.mxu0 0
    %1461 = vmatpush.bf16.msra.mxu0 0
    %1462 = vmatpush.bf16.msra.mxu0 0
    %1463 = vmatpush.bf16.msra.mxu0 0
    %1464 = vmatpush.bf16.msra.mxu0 %v1434
    %1465 = vmatpush.bf16.msra.mxu0 %v1432
    %1466 = vmatpush.bf16.msra.mxu0 %v1430
    %1467 = vmatpush.bf16.msra.mxu0 %v1428
    %1468 = vmatmul.bf16.gmra.mxu0 %v1444
    %v1469 = vpop.f32.mrf.mxu0
    %v1470 = vadd.f32 %v1400, %v1469
    %v1471 = vpop.f32.mrf.mxu0
    %v1472 = vadd.f32 %v1400, %v1471
    %1473 = vdwg.mxu0
    %s1474 = scalar_lea.vmem %s6, 32
    %v1475 = vld [vmem:[%s1474] sm:$0xf]
    %v1476 = vld [vmem:[%s1474 + $0x4] sm:$0xf]
    %v1477 = vld [vmem:[%s1474 + $0x8] sm:$0xf]
    %v1478 = vld [vmem:[%s1474 + $0xc] sm:$0xf]
    %v1479 = vld [vmem:[%s1474 + $0x10] sm:$0xf]
    %v1480 = vld [vmem:[%s1474 + $0x14] sm:$0xf]
    %v1481 = vld [vmem:[%s1474 + $0x18] sm:$0xf]
    %v1482 = vld [vmem:[%s1474 + $0x1c] sm:$0xf]
    %s1483 = scalar_lea.vmem %s7, 1
    %v1484 = vld [vmem:[%s1483] sm:$0x1]
    %v1485 = vpack.c.bf16 %v1456, %v1456
    %v1486 = vpack.c.bf16 %v1458, %v1458
    %v1487 = vpack.c.bf16 %v1470, %v1470
    %v1488 = vpack.c.bf16 %v1472, %v1472
    %v1491 = vunpack.c.l.b16 %v1485
    %v1492 = vunpack.c.l.b16 %v1486
    %v1493 = vpack.c.b16 %v1492, %v1491
    %1494 = vrot.lane.b32.xlu0 %v1493, 64
    %v1495 = vpop.permute.xlu0 %1494
    %v1497 = vsel %vm267, %v1493, 0
    %v1500 = vsel %vm267, %v1495, 0
    %1502 = vmatpush.bf16.xpose.msra.mxu0 0
    %1503 = vmatpush.bf16.xpose.msra.mxu0 0
    %1504 = vmatpush.bf16.xpose.msra.mxu0 0
    %1505 = vmatpush.bf16.xpose.msra.mxu0 0
    %1506 = vmatpush.bf16.xpose.msra.mxu0 0
    %1507 = vmatpush.bf16.xpose.msra.mxu0 0
    %1508 = vmatpush.bf16.xpose.msra.mxu0 0
    %1509 = vmatpush.bf16.xpose.msra.mxu0 %v1500
    %1510 = vmatmul.bf16.gmra.mxu0 %v1497
    %v1511 = vpop.f32.mrf.mxu0
    %v1512 = vadd.f32 %v97, %v1511
    %v1513 = vpop.f32.mrf.mxu0
    %v1514 = vadd.f32 %v98, %v1513
    %1515 = vdwg.mxu0
    %v1516 = vsel %vm267, %v1512, -inf
    %1517 = vmax.xlane.f32.xlu0 %v1516
    %v1518 = vpop.xlane.xlu0 %1517
    %v1519 = vsel %vm267, %v1514, -inf
    %1520 = vmax.xlane.f32.xlu0 %v1519
    %v1521 = vpop.xlane.xlu0 %1520
    %v1522 = vsub.f32 %v1512, %v1518
    %v1523 = vsub.f32 %v1514, %v1521
    %v1524 = vmul.f32 %v1522, 1.442695
    %v1525 = vpow.pop %v1524
    %v1526 = vmul.f32 %v1523, 1.442695
    %v1527 = vpow.pop %v1526
    %v1528 = vsel %vm267, %v1525, 0.0
    %1529 = vadd.xlane.f32.xlu0 %v1528
    %v1530 = vpop.xlane.xlu0 %1529
    %v1531 = vsel %vm267, %v1527, 0.0
    %1532 = vadd.xlane.f32.xlu0 %v1531
    %v1533 = vpop.xlane.xlu0 %1532
    %v1534 = vrcp.pop %v1530
    %v1535 = vrcp.pop %v1533
    %v1536 = vmul.f32 %v1525, %v1534
    %v1537 = vmul.f32 %v1527, %v1535
    %v1538 = vpack.c.bf16 %v1537, %v1536
    %v1541 = vunpack.c.l.b16 %v1487
    %v1542 = vunpack.c.l.b16 %v1488
    %v1543 = vpack.c.b16 %v1542, %v1541
    %v1546 = vsel %vm267, %v1538, 0
    %1548 = vmatpush.bf16.msra.mxu0 0
    %1549 = vmatpush.bf16.msra.mxu0 0
    %1550 = vmatpush.bf16.msra.mxu0 0
    %1551 = vmatpush.bf16.msra.mxu0 0
    %1552 = vmatpush.bf16.msra.mxu0 0
    %1553 = vmatpush.bf16.msra.mxu0 0
    %1554 = vmatpush.bf16.msra.mxu0 0
    %1555 = vmatpush.bf16.msra.mxu0 %v1543
    %1556 = vmatmul.bf16.gmra.mxu0 %v1546
    %v1557 = vpop.f32.mrf.mxu0
    %v1558 = vadd.f32 0.0, %v1557
    %v1559 = vpop.f32.mrf.mxu0
    %v1560 = vadd.f32 0.0, %v1559
    %1561 = vdwg.mxu0
    %1562 = vrot.lane.b32.xlu0 %v1493, 112
    %v1563 = vpop.permute.xlu0 %1562
    %1564 = vrot.lane.b32.xlu0 %v1493, 48
    %v1565 = vpop.permute.xlu0 %1564
    %v1567 = vsel %vm267, %v1563, 0
    %v1570 = vsel %vm267, %v1565, 0
    %1572 = vmatpush.bf16.xpose.msra.mxu0 0
    %1573 = vmatpush.bf16.xpose.msra.mxu0 0
    %1574 = vmatpush.bf16.xpose.msra.mxu0 0
    %1575 = vmatpush.bf16.xpose.msra.mxu0 0
    %1576 = vmatpush.bf16.xpose.msra.mxu0 0
    %1577 = vmatpush.bf16.xpose.msra.mxu0 0
    %1578 = vmatpush.bf16.xpose.msra.mxu0 0
    %1579 = vmatpush.bf16.xpose.msra.mxu0 %v1570
    %1580 = vmatmul.bf16.gmra.mxu0 %v1567
    %v1581 = vpop.f32.mrf.mxu0
    %v1582 = vadd.f32 %v97, %v1581
    %v1583 = vpop.f32.mrf.mxu0
    %v1584 = vadd.f32 %v98, %v1583
    %1585 = vdwg.mxu0
    %v1586 = vsel %vm267, %v1582, -inf
    %1587 = vmax.xlane.f32.xlu0 %v1586
    %v1588 = vpop.xlane.xlu0 %1587
    %v1589 = vsel %vm267, %v1584, -inf
    %1590 = vmax.xlane.f32.xlu0 %v1589
    %v1591 = vpop.xlane.xlu0 %1590
    %v1592 = vsub.f32 %v1582, %v1588
    %v1593 = vsub.f32 %v1584, %v1591
    %v1594 = vmul.f32 %v1592, 1.442695
    %v1595 = vpow.pop %v1594
    %v1596 = vmul.f32 %v1593, 1.442695
    %v1597 = vpow.pop %v1596
    %v1598 = vsel %vm267, %v1595, 0.0
    %1599 = vadd.xlane.f32.xlu0 %v1598
    %v1600 = vpop.xlane.xlu0 %1599
    %v1601 = vsel %vm267, %v1597, 0.0
    %1602 = vadd.xlane.f32.xlu0 %v1601
    %v1603 = vpop.xlane.xlu0 %1602
    %v1604 = vrcp.pop %v1600
    %v1605 = vrcp.pop %v1603
    %v1606 = vmul.f32 %v1595, %v1604
    %v1607 = vmul.f32 %v1597, %v1605
    %v1608 = vpack.c.bf16 %v1607, %v1606
    %1609 = vrot.lane.b32.xlu0 %v1543, 112
    %v1610 = vpop.permute.xlu0 %1609
    %v1613 = vsel %vm267, %v1608, 0
    %1615 = vmatpush.bf16.msra.mxu0 0
    %1616 = vmatpush.bf16.msra.mxu0 0
    %1617 = vmatpush.bf16.msra.mxu0 0
    %1618 = vmatpush.bf16.msra.mxu0 0
    %1619 = vmatpush.bf16.msra.mxu0 0
    %1620 = vmatpush.bf16.msra.mxu0 0
    %1621 = vmatpush.bf16.msra.mxu0 0
    %1622 = vmatpush.bf16.msra.mxu0 %v1610
    %1623 = vmatmul.bf16.gmra.mxu0 %v1613
    %v1624 = vpop.f32.mrf.mxu0
    %v1625 = vadd.f32 0.0, %v1624
    %v1626 = vpop.f32.mrf.mxu0
    %v1627 = vadd.f32 0.0, %v1626
    %1628 = vdwg.mxu0
    %1629 = vrot.lane.b32.xlu0 %v1493, 96
    %v1630 = vpop.permute.xlu0 %1629
    %1631 = vrot.lane.b32.xlu0 %v1493, 32
    %v1632 = vpop.permute.xlu0 %1631
    %v1634 = vsel %vm267, %v1630, 0
    %v1637 = vsel %vm267, %v1632, 0
    %1639 = vmatpush.bf16.xpose.msra.mxu0 0
    %1640 = vmatpush.bf16.xpose.msra.mxu0 0
    %1641 = vmatpush.bf16.xpose.msra.mxu0 0
    %1642 = vmatpush.bf16.xpose.msra.mxu0 0
    %1643 = vmatpush.bf16.xpose.msra.mxu0 0
    %1644 = vmatpush.bf16.xpose.msra.mxu0 0
    %1645 = vmatpush.bf16.xpose.msra.mxu0 0
    %1646 = vmatpush.bf16.xpose.msra.mxu0 %v1637
    %1647 = vmatmul.bf16.gmra.mxu0 %v1634
    %v1648 = vpop.f32.mrf.mxu0
    %v1649 = vadd.f32 %v97, %v1648
    %v1650 = vpop.f32.mrf.mxu0
    %v1651 = vadd.f32 %v98, %v1650
    %1652 = vdwg.mxu0
    %v1653 = vsel %vm267, %v1649, -inf
    %1654 = vmax.xlane.f32.xlu0 %v1653
    %v1655 = vpop.xlane.xlu0 %1654
    %v1656 = vsel %vm267, %v1651, -inf
    %1657 = vmax.xlane.f32.xlu0 %v1656
    %v1658 = vpop.xlane.xlu0 %1657
    %v1659 = vsub.f32 %v1649, %v1655
    %v1660 = vsub.f32 %v1651, %v1658
    %v1661 = vmul.f32 %v1659, 1.442695
    %v1662 = vpow.pop %v1661
    %v1663 = vmul.f32 %v1660, 1.442695
    %v1664 = vpow.pop %v1663
    %v1665 = vsel %vm267, %v1662, 0.0
    %1666 = vadd.xlane.f32.xlu0 %v1665
    %v1667 = vpop.xlane.xlu0 %1666
    %v1668 = vsel %vm267, %v1664, 0.0
    %1669 = vadd.xlane.f32.xlu0 %v1668
    %v1670 = vpop.xlane.xlu0 %1669
    %v1671 = vrcp.pop %v1667
    %v1672 = vrcp.pop %v1670
    %v1673 = vmul.f32 %v1662, %v1671
    %v1674 = vmul.f32 %v1664, %v1672
    %v1675 = vpack.c.bf16 %v1674, %v1673
    %1676 = vrot.lane.b32.xlu0 %v1543, 96
    %v1677 = vpop.permute.xlu0 %1676
    %v1680 = vsel %vm267, %v1675, 0
    %1682 = vmatpush.bf16.msra.mxu0 0
    %1683 = vmatpush.bf16.msra.mxu0 0
    %1684 = vmatpush.bf16.msra.mxu0 0
    %1685 = vmatpush.bf16.msra.mxu0 0
    %1686 = vmatpush.bf16.msra.mxu0 0
    %1687 = vmatpush.bf16.msra.mxu0 0
    %1688 = vmatpush.bf16.msra.mxu0 0
    %1689 = vmatpush.bf16.msra.mxu0 %v1677
    %1690 = vmatmul.bf16.gmra.mxu0 %v1680
    %v1691 = vpop.f32.mrf.mxu0
    %v1692 = vadd.f32 0.0, %v1691
    %v1693 = vpop.f32.mrf.mxu0
    %v1694 = vadd.f32 0.0, %v1693
    %1695 = vdwg.mxu0
    %1696 = vrot.lane.b32.xlu0 %v1493, 80
    %v1697 = vpop.permute.xlu0 %1696
    %1698 = vrot.lane.b32.xlu0 %v1493, 16
    %v1699 = vpop.permute.xlu0 %1698
    %v1701 = vsel %vm267, %v1697, 0
    %v1704 = vsel %vm267, %v1699, 0
    %1706 = vmatpush.bf16.xpose.msra.mxu0 0
    %1707 = vmatpush.bf16.xpose.msra.mxu0 0
    %1708 = vmatpush.bf16.xpose.msra.mxu0 0
    %1709 = vmatpush.bf16.xpose.msra.mxu0 0
    %1710 = vmatpush.bf16.xpose.msra.mxu0 0
    %1711 = vmatpush.bf16.xpose.msra.mxu0 0
    %1712 = vmatpush.bf16.xpose.msra.mxu0 0
    %1713 = vmatpush.bf16.xpose.msra.mxu0 %v1704
    %1714 = vmatmul.bf16.gmra.mxu0 %v1701
    %v1715 = vpop.f32.mrf.mxu0
    %v1716 = vadd.f32 %v97, %v1715
    %v1717 = vpop.f32.mrf.mxu0
    %v1718 = vadd.f32 %v98, %v1717
    %1719 = vdwg.mxu0
    %v1720 = vsel %vm267, %v1716, -inf
    %1721 = vmax.xlane.f32.xlu0 %v1720
    %v1722 = vpop.xlane.xlu0 %1721
    %v1723 = vsel %vm267, %v1718, -inf
    %1724 = vmax.xlane.f32.xlu0 %v1723
    %v1725 = vpop.xlane.xlu0 %1724
    %v1726 = vsub.f32 %v1716, %v1722
    %v1727 = vsub.f32 %v1718, %v1725
    %v1728 = vmul.f32 %v1726, 1.442695
    %v1729 = vpow.pop %v1728
    %v1730 = vmul.f32 %v1727, 1.442695
    %v1731 = vpow.pop %v1730
    %v1732 = vsel %vm267, %v1729, 0.0
    %1733 = vadd.xlane.f32.xlu0 %v1732
    %v1734 = vpop.xlane.xlu0 %1733
    %v1735 = vsel %vm267, %v1731, 0.0
    %1736 = vadd.xlane.f32.xlu0 %v1735
    %v1737 = vpop.xlane.xlu0 %1736
    %v1738 = vrcp.pop %v1734
    %v1739 = vrcp.pop %v1737
    %v1740 = vmul.f32 %v1729, %v1738
    %v1741 = vmul.f32 %v1731, %v1739
    %v1742 = vpack.c.bf16 %v1741, %v1740
    %1743 = vrot.lane.b32.xlu0 %v1543, 80
    %v1744 = vpop.permute.xlu0 %1743
    %v1747 = vsel %vm267, %v1742, 0
    %1749 = vmatpush.bf16.msra.mxu0 0
    %1750 = vmatpush.bf16.msra.mxu0 0
    %1751 = vmatpush.bf16.msra.mxu0 0
    %1752 = vmatpush.bf16.msra.mxu0 0
    %1753 = vmatpush.bf16.msra.mxu0 0
    %1754 = vmatpush.bf16.msra.mxu0 0
    %1755 = vmatpush.bf16.msra.mxu0 0
    %1756 = vmatpush.bf16.msra.mxu0 %v1744
    %1757 = vmatmul.bf16.gmra.mxu0 %v1747
    %v1758 = vpop.f32.mrf.mxu0
    %v1759 = vadd.f32 0.0, %v1758
    %v1760 = vpop.f32.mrf.mxu0
    %v1761 = vadd.f32 0.0, %v1760
    %1762 = vdwg.mxu0
    %1765 = vrot.lane.b32.xlu0 %v1625, 16
    %v1766 = vpop.permute.xlu0 %1765
    %1767 = vrot.lane.b32.xlu0 %v1627, 16
    %v1768 = vpop.permute.xlu0 %1767
    %1773 = vrot.lane.b32.xlu0 %v1692, 32
    %v1774 = vpop.permute.xlu0 %1773
    %1775 = vrot.lane.b32.xlu0 %v1694, 32
    %v1776 = vpop.permute.xlu0 %1775
    %1781 = vrot.lane.b32.xlu0 %v1759, 48
    %v1782 = vpop.permute.xlu0 %1781
    %1783 = vrot.lane.b32.xlu0 %v1761, 48
    %v1784 = vpop.permute.xlu0 %1783
    %v1787 = vsel %vm267, %v1558, %v1766
    %v1788 = vsel %vm267, %v1560, %v1768
    %v1789 = vsel %vm561, %v1787, %v1774
    %v1790 = vsel %vm561, %v1788, %v1776
    %v1791 = vsel %vm564, %v1789, %v1782
    %v1792 = vsel %vm564, %v1790, %v1784
    %v1793 = vpack.c.bf16 %v1792, %v1791
    %v1795 = vperm.slane %v1484, 0
    %v1805 = vunpack.c.l.b16 %v1475
    %v1806 = vunpack.c.l.b16 %v1476
    %v1807 = vunpack.c.l.b16 %v1477
    %v1808 = vunpack.c.l.b16 %v1478
    %v1809 = vunpack.c.l.b16 %v1479
    %v1810 = vunpack.c.l.b16 %v1480
    %v1811 = vunpack.c.l.b16 %v1481
    %v1812 = vunpack.c.l.b16 %v1482
    %v1813 = vpack.c.b16 %v1806, %v1805
    %v1814 = vpack.c.b16 %v1808, %v1807
    %v1815 = vpack.c.b16 %v1810, %v1809
    %v1816 = vpack.c.b16 %v1812, %v1811
    %v1822 = vsel %vm103, %v1793, 0
    %1824 = vmatpush.bf16.msra.mxu0 0
    %1825 = vmatpush.bf16.msra.mxu0 0
    %1826 = vmatpush.bf16.msra.mxu0 0
    %1827 = vmatpush.bf16.msra.mxu0 0
    %1828 = vmatpush.bf16.msra.mxu0 %v1816
    %1829 = vmatpush.bf16.msra.mxu0 %v1815
    %1830 = vmatpush.bf16.msra.mxu0 %v1814
    %1831 = vmatpush.bf16.msra.mxu0 %v1813
    %1832 = vmatmul.bf16.gmra.mxu0 %v1822
    %v1833 = vpop.f32.mrf.mxu0
    %v1834 = vadd.f32 %v1795, %v1833
    %v1835 = vpop.f32.mrf.mxu0
    %v1836 = vadd.f32 %v1795, %v1835
    %1837 = vdwg.mxu0
    %v1838 = vadd.f32 %v1328, %v1834
    %v1839 = vadd.f32 %v1329, %v1836
    %v1840 = vld [vmem:[%s1332 + $0x1] sm:$0x1]
    %v1841 = vld [vmem:[%s1334 + $0x1] sm:$0x1]
    %v1842 = vsel %vm103, %v1838, 0.0
    %1843 = vadd.xlane.f32.xlu0 %v1842
    %v1844 = vpop.xlane.xlu0 %1843
    %v1845 = vsel %vm103, %v1839, 0.0
    %1846 = vadd.xlane.f32.xlu0 %v1845
    %v1847 = vpop.xlane.xlu0 %1846
    %v1848 = vmul.f32 %v1844, %v116
    %v1849 = vmul.f32 %v1847, %v116
    %v1850 = vsub.f32 %v1838, %v1848
    %v1851 = vsub.f32 %v1839, %v1849
    %v1852 = vmul.f32 %v1850, %v1850
    %v1853 = vmul.f32 %v1851, %v1851
    %v1854 = vsel %vm103, %v1852, 0.0
    %1855 = vadd.xlane.f32.xlu0 %v1854
    %v1856 = vpop.xlane.xlu0 %1855
    %v1857 = vsel %vm103, %v1853, 0.0
    %1858 = vadd.xlane.f32.xlu0 %v1857
    %v1859 = vpop.xlane.xlu0 %1858
    %v1860 = vmul.f32 %v1856, %v116
    %v1861 = vmul.f32 %v1859, %v116
    %v1862 = vadd.f32 %v1860, 1e-05
    %v1863 = vadd.f32 %v1861, 1e-05
    %v1864 = vrsqrt.pop %v1862
    %v1865 = vmul.f32 %v1864, %v1862
    %v1866 = vmul.f32 %v1865, %v1864
    %v1867 = vmul.f32 0.5, %v1866
    %v1868 = vsub.f32 1.5, %v1867
    %v1869 = vmul.f32 %v1864, %v1868
    %vm1870 = vweird.f32 %v1862
    %vm1871 = vweird.f32 %v1864
    %vm1872 = vmor %vm1870, %vm1871
    %v1873 = vsel %vm1872, %v1864, %v1869
    %v1874 = vrsqrt.pop %v1863
    %v1875 = vmul.f32 %v1874, %v1863
    %v1876 = vmul.f32 %v1875, %v1874
    %v1877 = vmul.f32 0.5, %v1876
    %v1878 = vsub.f32 1.5, %v1877
    %v1879 = vmul.f32 %v1874, %v1878
    %vm1880 = vweird.f32 %v1863
    %vm1881 = vweird.f32 %v1874
    %vm1882 = vmor %vm1880, %vm1881
    %v1883 = vsel %vm1882, %v1874, %v1879
    %v1884 = vmul.f32 %v1850, %v1873
    %v1885 = vmul.f32 %v1851, %v1883
    %v1886 = vperm.slane %v1840, 0
    %v1887 = vmul.f32 %v1884, %v1886
    %v1888 = vmul.f32 %v1885, %v1886
    %v1889 = vperm.slane %v1841, 0
    %v1890 = vadd.f32 %v1887, %v1889
    %v1891 = vadd.f32 %v1888, %v1889
    %v1892 = vpack.c.bf16 %v1891, %v1890
    %s1893 = scalar_lea.vmem %s8, 32
    %v1894 = vld [vmem:[%s1893] sm:$0xf]
    %v1895 = vld [vmem:[%s1893 + $0x4] sm:$0xf]
    %v1896 = vld [vmem:[%s1893 + $0x8] sm:$0xf]
    %v1897 = vld [vmem:[%s1893 + $0xc] sm:$0xf]
    %v1898 = vld [vmem:[%s1893 + $0x10] sm:$0xf]
    %v1899 = vld [vmem:[%s1893 + $0x14] sm:$0xf]
    %v1900 = vld [vmem:[%s1893 + $0x18] sm:$0xf]
    %v1901 = vld [vmem:[%s1893 + $0x1c] sm:$0xf]
    %s1902 = scalar_lea.vmem %s9, 1
    %v1903 = vld [vmem:[%s1902] sm:$0x1]
    %v1905 = vperm.slane %v1903, 0
    %v1915 = vunpack.c.l.b16 %v1894
    %v1916 = vunpack.c.l.b16 %v1895
    %v1917 = vunpack.c.l.b16 %v1896
    %v1918 = vunpack.c.l.b16 %v1897
    %v1919 = vunpack.c.l.b16 %v1898
    %v1920 = vunpack.c.l.b16 %v1899
    %v1921 = vunpack.c.l.b16 %v1900
    %v1922 = vunpack.c.l.b16 %v1901
    %v1923 = vpack.c.b16 %v1916, %v1915
    %v1924 = vpack.c.b16 %v1918, %v1917
    %v1925 = vpack.c.b16 %v1920, %v1919
    %v1926 = vpack.c.b16 %v1922, %v1921
    %v1932 = vsel %vm103, %v1892, 0
    %1934 = vmatpush.bf16.msra.mxu0 0
    %1935 = vmatpush.bf16.msra.mxu0 0
    %1936 = vmatpush.bf16.msra.mxu0 0
    %1937 = vmatpush.bf16.msra.mxu0 0
    %1938 = vmatpush.bf16.msra.mxu0 %v1926
    %1939 = vmatpush.bf16.msra.mxu0 %v1925
    %1940 = vmatpush.bf16.msra.mxu0 %v1924
    %1941 = vmatpush.bf16.msra.mxu0 %v1923
    %1942 = vmatmul.bf16.gmra.mxu0 %v1932
    %v1943 = vpop.f32.mrf.mxu0
    %v1944 = vadd.f32 %v1905, %v1943
    %v1945 = vpop.f32.mrf.mxu0
    %v1946 = vadd.f32 %v1905, %v1945
    %1947 = vdwg.mxu0
    %s1948 = scalar_lea.vmem %s10, 32
    %v1949 = vld [vmem:[%s1948] sm:$0xf]
    %v1950 = vld [vmem:[%s1948 + $0x4] sm:$0xf]
    %v1951 = vld [vmem:[%s1948 + $0x8] sm:$0xf]
    %v1952 = vld [vmem:[%s1948 + $0xc] sm:$0xf]
    %v1953 = vld [vmem:[%s1948 + $0x10] sm:$0xf]
    %v1954 = vld [vmem:[%s1948 + $0x14] sm:$0xf]
    %v1955 = vld [vmem:[%s1948 + $0x18] sm:$0xf]
    %v1956 = vld [vmem:[%s1948 + $0x1c] sm:$0xf]
    %s1957 = scalar_lea.vmem %s11, 1
    %v1958 = vld [vmem:[%s1957] sm:$0x1]
    %v1960 = vperm.slane %v1958, 0
    %v1970 = vunpack.c.l.b16 %v1949
    %v1971 = vunpack.c.l.b16 %v1950
    %v1972 = vunpack.c.l.b16 %v1951
    %v1973 = vunpack.c.l.b16 %v1952
    %v1974 = vunpack.c.l.b16 %v1953
    %v1975 = vunpack.c.l.b16 %v1954
    %v1976 = vunpack.c.l.b16 %v1955
    %v1977 = vunpack.c.l.b16 %v1956
    %v1978 = vpack.c.b16 %v1971, %v1970
    %v1979 = vpack.c.b16 %v1973, %v1972
    %v1980 = vpack.c.b16 %v1975, %v1974
    %v1981 = vpack.c.b16 %v1977, %v1976
    %1986 = vmatpush.bf16.msra.mxu0 0
    %1987 = vmatpush.bf16.msra.mxu0 0
    %1988 = vmatpush.bf16.msra.mxu0 0
    %1989 = vmatpush.bf16.msra.mxu0 0
    %1990 = vmatpush.bf16.msra.mxu0 %v1981
    %1991 = vmatpush.bf16.msra.mxu0 %v1980
    %1992 = vmatpush.bf16.msra.mxu0 %v1979
    %1993 = vmatpush.bf16.msra.mxu0 %v1978
    %1994 = vmatmul.bf16.gmra.mxu0 %v757
    %v1995 = vpop.f32.mrf.mxu0
    %v1996 = vadd.f32 %v1960, %v1995
    %v1997 = vpop.f32.mrf.mxu0
    %v1998 = vadd.f32 %v1960, %v1997
    %1999 = vdwg.mxu0
    %s2000 = scalar_lea.vmem %s12, 32
    %v2001 = vld [vmem:[%s2000] sm:$0xf]
    %v2002 = vld [vmem:[%s2000 + $0x4] sm:$0xf]
    %v2003 = vld [vmem:[%s2000 + $0x8] sm:$0xf]
    %v2004 = vld [vmem:[%s2000 + $0xc] sm:$0xf]
    %v2005 = vld [vmem:[%s2000 + $0x10] sm:$0xf]
    %v2006 = vld [vmem:[%s2000 + $0x14] sm:$0xf]
    %v2007 = vld [vmem:[%s2000 + $0x18] sm:$0xf]
    %v2008 = vld [vmem:[%s2000 + $0x1c] sm:$0xf]
    %s2009 = scalar_lea.vmem %s13, 1
    %v2010 = vld [vmem:[%s2009] sm:$0x1]
    %v2011 = vpack.c.bf16 %v1944, %v1944
    %v2012 = vpack.c.bf16 %v1946, %v1946
    %v2013 = vpack.c.bf16 %v1996, %v1996
    %v2014 = vpack.c.bf16 %v1998, %v1998
    %v2017 = vunpack.c.l.b16 %v2011
    %v2018 = vunpack.c.l.b16 %v2012
    %v2019 = vpack.c.b16 %v2018, %v2017
    %v2022 = vunpack.c.l.b16 %v2013
    %v2023 = vunpack.c.l.b16 %v2014
    %v2024 = vpack.c.b16 %v2023, %v2022
    %v2026 = vsel %vm267, %v2019, 0
    %v2029 = vsel %vm267, %v2024, 0
    %2031 = vmatpush.bf16.xpose.msra.mxu0 0
    %2032 = vmatpush.bf16.xpose.msra.mxu0 0
    %2033 = vmatpush.bf16.xpose.msra.mxu0 0
    %2034 = vmatpush.bf16.xpose.msra.mxu0 0
    %2035 = vmatpush.bf16.xpose.msra.mxu0 0
    %2036 = vmatpush.bf16.xpose.msra.mxu0 0
    %2037 = vmatpush.bf16.xpose.msra.mxu0 0
    %2038 = vmatpush.bf16.xpose.msra.mxu0 %v2029
    %2039 = vmatmul.bf16.gmra.mxu0 %v2026
    %v2040 = vpop.f32.mrf.mxu0
    %v2041 = vadd.f32 %v99, %v2040
    %v2042 = vpop.f32.mrf.mxu0
    %v2043 = vadd.f32 %v100, %v2042
    %2044 = vdwg.mxu0
    %v2045 = vsel %vm267, %v2041, -inf
    %2046 = vmax.xlane.f32.xlu0 %v2045
    %v2047 = vpop.xlane.xlu0 %2046
    %v2048 = vsel %vm267, %v2043, -inf
    %2049 = vmax.xlane.f32.xlu0 %v2048
    %v2050 = vpop.xlane.xlu0 %2049
    %v2051 = vsub.f32 %v2041, %v2047
    %v2052 = vsub.f32 %v2043, %v2050
    %v2053 = vmul.f32 %v2051, 1.442695
    %v2054 = vpow.pop %v2053
    %v2055 = vmul.f32 %v2052, 1.442695
    %v2056 = vpow.pop %v2055
    %v2057 = vsel %vm267, %v2054, 0.0
    %2058 = vadd.xlane.f32.xlu0 %v2057
    %v2059 = vpop.xlane.xlu0 %2058
    %v2060 = vsel %vm267, %v2056, 0.0
    %2061 = vadd.xlane.f32.xlu0 %v2060
    %v2062 = vpop.xlane.xlu0 %2061
    %v2063 = vrcp.pop %v2059
    %v2064 = vmul.f32 %v2059, %v2063
    %v2065 = vsub.f32 1.0, %v2064
    %v2066 = vmul.f32 %v2063, %v2065
    %v2067 = vadd.f32 %v2063, %v2066
    %vm2068 = vweird.f32 %v2059
    %vm2069 = vweird.f32 %v2063
    %vm2070 = vmor %vm2068, %vm2069
    %v2071 = vsel %vm2070, %v2063, %v2067
    %v2072 = vand.u32 2147483647, %v2059
    %vm2073 = vcmp.eq.f32.partialorder %v2072, 8.507059e+37
    %v2074 = vand.u32 %v2059, 2147483648
    %v2075 = vor.u32 1.1754944e-38, %v2074
    %v2076 = vsel %vm2073, %v2075, %v2071
    %v2077 = vmul.f32 %v2054, %v2076
    %v2078 = vrcp.pop %v2062
    %v2079 = vmul.f32 %v2062, %v2078
    %v2080 = vsub.f32 1.0, %v2079
    %v2081 = vmul.f32 %v2078, %v2080
    %v2082 = vadd.f32 %v2078, %v2081
    %vm2083 = vweird.f32 %v2062
    %vm2084 = vweird.f32 %v2078
    %vm2085 = vmor %vm2083, %vm2084
    %v2086 = vsel %vm2085, %v2078, %v2082
    %v2087 = vand.u32 2147483647, %v2062
    %vm2088 = vcmp.eq.f32.partialorder %v2087, 8.507059e+37
    %v2089 = vand.u32 %v2062, 2147483648
    %v2090 = vor.u32 1.1754944e-38, %v2089
    %v2091 = vsel %vm2088, %v2090, %v2086
    %v2092 = vmul.f32 %v2056, %v2091
    %v2093 = vpack.c.bf16 %v2092, %v2077
    %2094 = vrot.lane.b32.xlu0 %v2024, 64
    %v2095 = vpop.permute.xlu0 %2094
    %v2098 = vsel %vm267, %v2093, 0
    %2100 = vmatpush.bf16.msra.mxu0 0
    %2101 = vmatpush.bf16.msra.mxu0 0
    %2102 = vmatpush.bf16.msra.mxu0 0
    %2103 = vmatpush.bf16.msra.mxu0 0
    %2104 = vmatpush.bf16.msra.mxu0 0
    %2105 = vmatpush.bf16.msra.mxu0 0
    %2106 = vmatpush.bf16.msra.mxu0 0
    %2107 = vmatpush.bf16.msra.mxu0 %v2095
    %2108 = vmatmul.bf16.gmra.mxu0 %v2098
    %v2109 = vpop.f32.mrf.mxu0
    %v2110 = vadd.f32 0.0, %v2109
    %v2111 = vpop.f32.mrf.mxu0
    %v2112 = vadd.f32 0.0, %v2111
    %2113 = vdwg.mxu0
    %2114 = vrot.lane.b32.xlu0 %v2019, 112
    %v2115 = vpop.permute.xlu0 %2114
    %2116 = vrot.lane.b32.xlu0 %v2024, 112
    %v2117 = vpop.permute.xlu0 %2116
    %v2119 = vsel %vm267, %v2115, 0
    %v2122 = vsel %vm267, %v2117, 0
    %2124 = vmatpush.bf16.xpose.msra.mxu0 0
    %2125 = vmatpush.bf16.xpose.msra.mxu0 0
    %2126 = vmatpush.bf16.xpose.msra.mxu0 0
    %2127 = vmatpush.bf16.xpose.msra.mxu0 0
    %2128 = vmatpush.bf16.xpose.msra.mxu0 0
    %2129 = vmatpush.bf16.xpose.msra.mxu0 0
    %2130 = vmatpush.bf16.xpose.msra.mxu0 0
    %2131 = vmatpush.bf16.xpose.msra.mxu0 %v2122
    %2132 = vmatmul.bf16.gmra.mxu0 %v2119
    %v2133 = vpop.f32.mrf.mxu0
    %v2134 = vadd.f32 %v99, %v2133
    %v2135 = vpop.f32.mrf.mxu0
    %v2136 = vadd.f32 %v100, %v2135
    %2137 = vdwg.mxu0
    %v2138 = vsel %vm267, %v2134, -inf
    %2139 = vmax.xlane.f32.xlu0 %v2138
    %v2140 = vpop.xlane.xlu0 %2139
    %v2141 = vsel %vm267, %v2136, -inf
    %2142 = vmax.xlane.f32.xlu0 %v2141
    %v2143 = vpop.xlane.xlu0 %2142
    %v2144 = vsub.f32 %v2134, %v2140
    %v2145 = vsub.f32 %v2136, %v2143
    %v2146 = vmul.f32 %v2144, 1.442695
    %v2147 = vpow.pop %v2146
    %v2148 = vmul.f32 %v2145, 1.442695
    %v2149 = vpow.pop %v2148
    %v2150 = vsel %vm267, %v2147, 0.0
    %2151 = vadd.xlane.f32.xlu0 %v2150
    %v2152 = vpop.xlane.xlu0 %2151
    %v2153 = vsel %vm267, %v2149, 0.0
    %2154 = vadd.xlane.f32.xlu0 %v2153
    %v2155 = vpop.xlane.xlu0 %2154
    %v2156 = vrcp.pop %v2152
    %v2157 = vmul.f32 %v2152, %v2156
    %v2158 = vsub.f32 1.0, %v2157
    %v2159 = vmul.f32 %v2156, %v2158
    %v2160 = vadd.f32 %v2156, %v2159
    %vm2161 = vweird.f32 %v2152
    %vm2162 = vweird.f32 %v2156
    %vm2163 = vmor %vm2161, %vm2162
    %v2164 = vsel %vm2163, %v2156, %v2160
    %v2165 = vand.u32 2147483647, %v2152
    %vm2166 = vcmp.eq.f32.partialorder %v2165, 8.507059e+37
    %v2167 = vand.u32 %v2152, 2147483648
    %v2168 = vor.u32 1.1754944e-38, %v2167
    %v2169 = vsel %vm2166, %v2168, %v2164
    %v2170 = vmul.f32 %v2147, %v2169
    %v2171 = vrcp.pop %v2155
    %v2172 = vmul.f32 %v2155, %v2171
    %v2173 = vsub.f32 1.0, %v2172
    %v2174 = vmul.f32 %v2171, %v2173
    %v2175 = vadd.f32 %v2171, %v2174
    %vm2176 = vweird.f32 %v2155
    %vm2177 = vweird.f32 %v2171
    %vm2178 = vmor %vm2176, %vm2177
    %v2179 = vsel %vm2178, %v2171, %v2175
    %v2180 = vand.u32 2147483647, %v2155
    %vm2181 = vcmp.eq.f32.partialorder %v2180, 8.507059e+37
    %v2182 = vand.u32 %v2155, 2147483648
    %v2183 = vor.u32 1.1754944e-38, %v2182
    %v2184 = vsel %vm2181, %v2183, %v2179
    %v2185 = vmul.f32 %v2149, %v2184
    %v2186 = vadd.f32 %v2077, %v2170
    %v2187 = vadd.f32 %v2092, %v2185
    %v2188 = vpack.c.bf16 %v2185, %v2170
    %2189 = vrot.lane.b32.xlu0 %v2024, 48
    %v2190 = vpop.permute.xlu0 %2189
    %v2193 = vsel %vm267, %v2188, 0
    %2195 = vmatpush.bf16.msra.mxu0 0
    %2196 = vmatpush.bf16.msra.mxu0 0
    %2197 = vmatpush.bf16.msra.mxu0 0
    %2198 = vmatpush.bf16.msra.mxu0 0
    %2199 = vmatpush.bf16.msra.mxu0 0
    %2200 = vmatpush.bf16.msra.mxu0 0
    %2201 = vmatpush.bf16.msra.mxu0 0
    %2202 = vmatpush.bf16.msra.mxu0 %v2190
    %2203 = vmatmul.bf16.gmra.mxu0 %v2193
    %v2204 = vpop.f32.mrf.mxu0
    %v2205 = vadd.f32 0.0, %v2204
    %v2206 = vpop.f32.mrf.mxu0
    %v2207 = vadd.f32 0.0, %v2206
    %2208 = vdwg.mxu0
    %2209 = vrot.lane.b32.xlu0 %v2019, 96
    %v2210 = vpop.permute.xlu0 %2209
    %2211 = vrot.lane.b32.xlu0 %v2024, 96
    %v2212 = vpop.permute.xlu0 %2211
    %v2214 = vsel %vm267, %v2210, 0
    %v2217 = vsel %vm267, %v2212, 0
    %2219 = vmatpush.bf16.xpose.msra.mxu0 0
    %2220 = vmatpush.bf16.xpose.msra.mxu0 0
    %2221 = vmatpush.bf16.xpose.msra.mxu0 0
    %2222 = vmatpush.bf16.xpose.msra.mxu0 0
    %2223 = vmatpush.bf16.xpose.msra.mxu0 0
    %2224 = vmatpush.bf16.xpose.msra.mxu0 0
    %2225 = vmatpush.bf16.xpose.msra.mxu0 0
    %2226 = vmatpush.bf16.xpose.msra.mxu0 %v2217
    %2227 = vmatmul.bf16.gmra.mxu0 %v2214
    %v2228 = vpop.f32.mrf.mxu0
    %v2229 = vadd.f32 %v99, %v2228
    %v2230 = vpop.f32.mrf.mxu0
    %v2231 = vadd.f32 %v100, %v2230
    %2232 = vdwg.mxu0
    %v2233 = vsel %vm267, %v2229, -inf
    %2234 = vmax.xlane.f32.xlu0 %v2233
    %v2235 = vpop.xlane.xlu0 %2234
    %v2236 = vsel %vm267, %v2231, -inf
    %2237 = vmax.xlane.f32.xlu0 %v2236
    %v2238 = vpop.xlane.xlu0 %2237
    %v2239 = vsub.f32 %v2229, %v2235
    %v2240 = vsub.f32 %v2231, %v2238
    %v2241 = vmul.f32 %v2239, 1.442695
    %v2242 = vpow.pop %v2241
    %v2243 = vmul.f32 %v2240, 1.442695
    %v2244 = vpow.pop %v2243
    %v2245 = vsel %vm267, %v2242, 0.0
    %2246 = vadd.xlane.f32.xlu0 %v2245
    %v2247 = vpop.xlane.xlu0 %2246
    %v2248 = vsel %vm267, %v2244, 0.0
    %2249 = vadd.xlane.f32.xlu0 %v2248
    %v2250 = vpop.xlane.xlu0 %2249
    %v2251 = vrcp.pop %v2247
    %v2252 = vmul.f32 %v2247, %v2251
    %v2253 = vsub.f32 1.0, %v2252
    %v2254 = vmul.f32 %v2251, %v2253
    %v2255 = vadd.f32 %v2251, %v2254
    %vm2256 = vweird.f32 %v2247
    %vm2257 = vweird.f32 %v2251
    %vm2258 = vmor %vm2256, %vm2257
    %v2259 = vsel %vm2258, %v2251, %v2255
    %v2260 = vand.u32 2147483647, %v2247
    %vm2261 = vcmp.eq.f32.partialorder %v2260, 8.507059e+37
    %v2262 = vand.u32 %v2247, 2147483648
    %v2263 = vor.u32 1.1754944e-38, %v2262
    %v2264 = vsel %vm2261, %v2263, %v2259
    %v2265 = vmul.f32 %v2242, %v2264
    %v2266 = vrcp.pop %v2250
    %v2267 = vmul.f32 %v2250, %v2266
    %v2268 = vsub.f32 1.0, %v2267
    %v2269 = vmul.f32 %v2266, %v2268
    %v2270 = vadd.f32 %v2266, %v2269
    %vm2271 = vweird.f32 %v2250
    %vm2272 = vweird.f32 %v2266
    %vm2273 = vmor %vm2271, %vm2272
    %v2274 = vsel %vm2273, %v2266, %v2270
    %v2275 = vand.u32 2147483647, %v2250
    %vm2276 = vcmp.eq.f32.partialorder %v2275, 8.507059e+37
    %v2277 = vand.u32 %v2250, 2147483648
    %v2278 = vor.u32 1.1754944e-38, %v2277
    %v2279 = vsel %vm2276, %v2278, %v2274
    %v2280 = vmul.f32 %v2244, %v2279
    %v2281 = vadd.f32 %v2186, %v2265
    %v2282 = vadd.f32 %v2187, %v2280
    %v2283 = vpack.c.bf16 %v2280, %v2265
    %2284 = vrot.lane.b32.xlu0 %v2024, 32
    %v2285 = vpop.permute.xlu0 %2284
    %v2288 = vsel %vm267, %v2283, 0
    %2290 = vmatpush.bf16.msra.mxu0 0
    %2291 = vmatpush.bf16.msra.mxu0 0
    %2292 = vmatpush.bf16.msra.mxu0 0
    %2293 = vmatpush.bf16.msra.mxu0 0
    %2294 = vmatpush.bf16.msra.mxu0 0
    %2295 = vmatpush.bf16.msra.mxu0 0
    %2296 = vmatpush.bf16.msra.mxu0 0
    %2297 = vmatpush.bf16.msra.mxu0 %v2285
    %2298 = vmatmul.bf16.gmra.mxu0 %v2288
    %v2299 = vpop.f32.mrf.mxu0
    %v2300 = vadd.f32 0.0, %v2299
    %v2301 = vpop.f32.mrf.mxu0
    %v2302 = vadd.f32 0.0, %v2301
    %2303 = vdwg.mxu0
    %2304 = vrot.lane.b32.xlu0 %v2019, 80
    %v2305 = vpop.permute.xlu0 %2304
    %2306 = vrot.lane.b32.xlu0 %v2024, 80
    %v2307 = vpop.permute.xlu0 %2306
    %v2309 = vsel %vm267, %v2305, 0
    %v2312 = vsel %vm267, %v2307, 0
    %2314 = vmatpush.bf16.xpose.msra.mxu0 0
    %2315 = vmatpush.bf16.xpose.msra.mxu0 0
    %2316 = vmatpush.bf16.xpose.msra.mxu0 0
    %2317 = vmatpush.bf16.xpose.msra.mxu0 0
    %2318 = vmatpush.bf16.xpose.msra.mxu0 0
    %2319 = vmatpush.bf16.xpose.msra.mxu0 0
    %2320 = vmatpush.bf16.xpose.msra.mxu0 0
    %2321 = vmatpush.bf16.xpose.msra.mxu0 %v2312
    %2322 = vmatmul.bf16.gmra.mxu0 %v2309
    %v2323 = vpop.f32.mrf.mxu0
    %v2324 = vadd.f32 %v99, %v2323
    %v2325 = vpop.f32.mrf.mxu0
    %v2326 = vadd.f32 %v100, %v2325
    %2327 = vdwg.mxu0
    %v2328 = vsel %vm267, %v2324, -inf
    %2329 = vmax.xlane.f32.xlu0 %v2328
    %v2330 = vpop.xlane.xlu0 %2329
    %v2331 = vsel %vm267, %v2326, -inf
    %2332 = vmax.xlane.f32.xlu0 %v2331
    %v2333 = vpop.xlane.xlu0 %2332
    %v2334 = vsub.f32 %v2324, %v2330
    %v2335 = vsub.f32 %v2326, %v2333
    %v2336 = vmul.f32 %v2334, 1.442695
    %v2337 = vpow.pop %v2336
    %v2338 = vmul.f32 %v2335, 1.442695
    %v2339 = vpow.pop %v2338
    %v2340 = vsel %vm267, %v2337, 0.0
    %2341 = vadd.xlane.f32.xlu0 %v2340
    %v2342 = vpop.xlane.xlu0 %2341
    %v2343 = vsel %vm267, %v2339, 0.0
    %2344 = vadd.xlane.f32.xlu0 %v2343
    %v2345 = vpop.xlane.xlu0 %2344
    %v2346 = vrcp.pop %v2342
    %v2347 = vmul.f32 %v2342, %v2346
    %v2348 = vsub.f32 1.0, %v2347
    %v2349 = vmul.f32 %v2346, %v2348
    %v2350 = vadd.f32 %v2346, %v2349
    %vm2351 = vweird.f32 %v2342
    %vm2352 = vweird.f32 %v2346
    %vm2353 = vmor %vm2351, %vm2352
    %v2354 = vsel %vm2353, %v2346, %v2350
    %v2355 = vand.u32 2147483647, %v2342
    %vm2356 = vcmp.eq.f32.partialorder %v2355, 8.507059e+37
    %v2357 = vand.u32 %v2342, 2147483648
    %v2358 = vor.u32 1.1754944e-38, %v2357
    %v2359 = vsel %vm2356, %v2358, %v2354
    %v2360 = vmul.f32 %v2337, %v2359
    %v2361 = vrcp.pop %v2345
    %v2362 = vmul.f32 %v2345, %v2361
    %v2363 = vsub.f32 1.0, %v2362
    %v2364 = vmul.f32 %v2361, %v2363
    %v2365 = vadd.f32 %v2361, %v2364
    %vm2366 = vweird.f32 %v2345
    %vm2367 = vweird.f32 %v2361
    %vm2368 = vmor %vm2366, %vm2367
    %v2369 = vsel %vm2368, %v2361, %v2365
    %v2370 = vand.u32 2147483647, %v2345
    %vm2371 = vcmp.eq.f32.partialorder %v2370, 8.507059e+37
    %v2372 = vand.u32 %v2345, 2147483648
    %v2373 = vor.u32 1.1754944e-38, %v2372
    %v2374 = vsel %vm2371, %v2373, %v2369
    %v2375 = vmul.f32 %v2339, %v2374
    %v2376 = vadd.f32 %v2281, %v2360
    %v2377 = vadd.f32 %v2282, %v2375
    %v2378 = vpack.c.bf16 %v2375, %v2360
    %2379 = vrot.lane.b32.xlu0 %v2024, 16
    %v2380 = vpop.permute.xlu0 %2379
    %v2383 = vsel %vm267, %v2378, 0
    %2385 = vmatpush.bf16.msra.mxu0 0
    %2386 = vmatpush.bf16.msra.mxu0 0
    %2387 = vmatpush.bf16.msra.mxu0 0
    %2388 = vmatpush.bf16.msra.mxu0 0
    %2389 = vmatpush.bf16.msra.mxu0 0
    %2390 = vmatpush.bf16.msra.mxu0 0
    %2391 = vmatpush.bf16.msra.mxu0 0
    %2392 = vmatpush.bf16.msra.mxu0 %v2380
    %2393 = vmatmul.bf16.gmra.mxu0 %v2383
    %v2394 = vpop.f32.mrf.mxu0
    %v2395 = vadd.f32 0.0, %v2394
    %v2396 = vpop.f32.mrf.mxu0
    %v2397 = vadd.f32 0.0, %v2396
    %2398 = vdwg.mxu0
    %2401 = vrot.lane.b32.xlu0 %v2205, 16
    %v2402 = vpop.permute.xlu0 %2401
    %2403 = vrot.lane.b32.xlu0 %v2207, 16
    %v2404 = vpop.permute.xlu0 %2403
    %2409 = vrot.lane.b32.xlu0 %v2300, 32
    %v2410 = vpop.permute.xlu0 %2409
    %2411 = vrot.lane.b32.xlu0 %v2302, 32
    %v2412 = vpop.permute.xlu0 %2411
    %2417 = vrot.lane.b32.xlu0 %v2395, 48
    %v2418 = vpop.permute.xlu0 %2417
    %2419 = vrot.lane.b32.xlu0 %v2397, 48
    %v2420 = vpop.permute.xlu0 %2419
    %v2423 = vsel %vm267, %v2110, %v2402
    %v2424 = vsel %vm267, %v2112, %v2404
    %v2425 = vsel %vm561, %v2423, %v2410
    %v2426 = vsel %vm561, %v2424, %v2412
    %v2427 = vsel %vm564, %v2425, %v2418
    %v2428 = vsel %vm564, %v2426, %v2420
    %v2429 = vpack.c.bf16 %v2428, %v2427
    %v2431 = vperm.slane %v2010, 0
    %v2441 = vunpack.c.l.b16 %v2001
    %v2442 = vunpack.c.l.b16 %v2002
    %v2443 = vunpack.c.l.b16 %v2003
    %v2444 = vunpack.c.l.b16 %v2004
    %v2445 = vunpack.c.l.b16 %v2005
    %v2446 = vunpack.c.l.b16 %v2006
    %v2447 = vunpack.c.l.b16 %v2007
    %v2448 = vunpack.c.l.b16 %v2008
    %v2449 = vpack.c.b16 %v2442, %v2441
    %v2450 = vpack.c.b16 %v2444, %v2443
    %v2451 = vpack.c.b16 %v2446, %v2445
    %v2452 = vpack.c.b16 %v2448, %v2447
    %v2458 = vsel %vm103, %v2429, 0
    %2460 = vmatpush.bf16.msra.mxu0 0
    %2461 = vmatpush.bf16.msra.mxu0 0
    %2462 = vmatpush.bf16.msra.mxu0 0
    %2463 = vmatpush.bf16.msra.mxu0 0
    %2464 = vmatpush.bf16.msra.mxu0 %v2452
    %2465 = vmatpush.bf16.msra.mxu0 %v2451
    %2466 = vmatpush.bf16.msra.mxu0 %v2450
    %2467 = vmatpush.bf16.msra.mxu0 %v2449
    %2468 = vmatmul.bf16.gmra.mxu0 %v2458
    %v2469 = vpop.f32.mrf.mxu0
    %v2470 = vadd.f32 %v2431, %v2469
    %v2471 = vpop.f32.mrf.mxu0
    %v2472 = vadd.f32 %v2431, %v2471
    %2473 = vdwg.mxu0
    %v2474 = vmul.f32 %v2376, 0.25
    %v2475 = vmul.f32 %v2377, 0.25
    %v2476 = vadd.f32 %v1838, %v2470
    %v2477 = vadd.f32 %v1839, %v2472
    %v2478 = vld [vmem:[%s1332 + $0x2] sm:$0x1]
    %v2479 = vld [vmem:[%s1334 + $0x2] sm:$0x1]
    %v2480 = vsel %vm103, %v2476, 0.0
    %2481 = vadd.xlane.f32.xlu0 %v2480
    %v2482 = vpop.xlane.xlu0 %2481
    %v2483 = vsel %vm103, %v2477, 0.0
    %2484 = vadd.xlane.f32.xlu0 %v2483
    %v2485 = vpop.xlane.xlu0 %2484
    %v2486 = vmul.f32 %v2482, %v116
    %v2487 = vmul.f32 %v2485, %v116
    %v2488 = vsub.f32 %v2476, %v2486
    %v2489 = vsub.f32 %v2477, %v2487
    %v2490 = vmul.f32 %v2488, %v2488
    %v2491 = vmul.f32 %v2489, %v2489
    %v2492 = vsel %vm103, %v2490, 0.0
    %2493 = vadd.xlane.f32.xlu0 %v2492
    %v2494 = vpop.xlane.xlu0 %2493
    %v2495 = vsel %vm103, %v2491, 0.0
    %2496 = vadd.xlane.f32.xlu0 %v2495
    %v2497 = vpop.xlane.xlu0 %2496
    %v2498 = vmul.f32 %v2494, %v116
    %v2499 = vmul.f32 %v2497, %v116
    %v2500 = vadd.f32 %v2498, 1e-05
    %v2501 = vadd.f32 %v2499, 1e-05
    %v2502 = vrsqrt.pop %v2500
    %v2503 = vmul.f32 %v2502, %v2500
    %v2504 = vmul.f32 %v2503, %v2502
    %v2505 = vmul.f32 0.5, %v2504
    %v2506 = vsub.f32 1.5, %v2505
    %v2507 = vmul.f32 %v2502, %v2506
    %vm2508 = vweird.f32 %v2500
    %vm2509 = vweird.f32 %v2502
    %vm2510 = vmor %vm2508, %vm2509
    %v2511 = vsel %vm2510, %v2502, %v2507
    %v2512 = vrsqrt.pop %v2501
    %v2513 = vmul.f32 %v2512, %v2501
    %v2514 = vmul.f32 %v2513, %v2512
    %v2515 = vmul.f32 0.5, %v2514
    %v2516 = vsub.f32 1.5, %v2515
    %v2517 = vmul.f32 %v2512, %v2516
    %vm2518 = vweird.f32 %v2501
    %vm2519 = vweird.f32 %v2512
    %vm2520 = vmor %vm2518, %vm2519
    %v2521 = vsel %vm2520, %v2512, %v2517
    %v2522 = vmul.f32 %v2488, %v2511
    %v2523 = vmul.f32 %v2489, %v2521
    %v2524 = vperm.slane %v2478, 0
    %v2525 = vmul.f32 %v2522, %v2524
    %v2526 = vmul.f32 %v2523, %v2524
    %v2527 = vperm.slane %v2479, 0
    %v2528 = vadd.f32 %v2525, %v2527
    %v2529 = vadd.f32 %v2526, %v2527
    %v2530 = vpack.c.bf16 %v2529, %v2528
    %s2531 = scalar_lea.vmem [#allocation2], 32
    %v2532 = vld [vmem:[%s2531] sm:$0xf]
    %v2533 = vld [vmem:[%s2531 + $0x4] sm:$0xf]
    %v2534 = vld [vmem:[%s2531 + $0x8] sm:$0xf]
    %v2535 = vld [vmem:[%s2531 + $0xc] sm:$0xf]
    %v2536 = vld [vmem:[%s2531 + $0x10] sm:$0xf]
    %v2537 = vld [vmem:[%s2531 + $0x14] sm:$0xf]
    %v2538 = vld [vmem:[%s2531 + $0x18] sm:$0xf]
    %v2539 = vld [vmem:[%s2531 + $0x1c] sm:$0xf]
    %s2540 = scalar_lea.vmem %s17, 1
    %v2541 = vld [vmem:[%s2540] sm:$0x1]
    %v2543 = vperm.slane %v2541, 0
    %v2553 = vunpack.c.l.b16 %v2532
    %v2554 = vunpack.c.l.b16 %v2533
    %v2555 = vunpack.c.l.b16 %v2534
    %v2556 = vunpack.c.l.b16 %v2535
    %v2557 = vunpack.c.l.b16 %v2536
    %v2558 = vunpack.c.l.b16 %v2537
    %v2559 = vunpack.c.l.b16 %v2538
    %v2560 = vunpack.c.l.b16 %v2539
    %v2561 = vpack.c.b16 %v2554, %v2553
    %v2562 = vpack.c.b16 %v2556, %v2555
    %v2563 = vpack.c.b16 %v2558, %v2557
    %v2564 = vpack.c.b16 %v2560, %v2559
    %v2570 = vsel %vm103, %v2530, 0
    %2572 = vmatpush.bf16.msra.mxu0 0
    %2573 = vmatpush.bf16.msra.mxu0 0
    %2574 = vmatpush.bf16.msra.mxu0 0
    %2575 = vmatpush.bf16.msra.mxu0 0
    %2576 = vmatpush.bf16.msra.mxu0 %v2564
    %2577 = vmatpush.bf16.msra.mxu0 %v2563
    %2578 = vmatpush.bf16.msra.mxu0 %v2562
    %2579 = vmatpush.bf16.msra.mxu0 %v2561
    %2580 = vmatmul.bf16.gmra.mxu0 %v2570
    %v2581 = vpop.f32.mrf.mxu0
    %v2582 = vadd.f32 %v2543, %v2581
    %v2583 = vpop.f32.mrf.mxu0
    %v2584 = vadd.f32 %v2543, %v2583
    %2585 = vdwg.mxu0
    %v2586 = vmax.f32 %v2582, 0.0
    %v2587 = vmax.f32 %v2584, 0.0
    %v2588 = vpack.c.bf16 %v2587, %v2586
    %s2589 = scalar_lea.vmem %s18, 64
    %v2590 = vld [vmem:[%s2589] sm:$0xf]
    %v2591 = vld [vmem:[%s2589 + $0x4] sm:$0xf]
    %v2592 = vld [vmem:[%s2589 + $0x8] sm:$0xf]
    %v2593 = vld [vmem:[%s2589 + $0xc] sm:$0xf]
    %v2594 = vld [vmem:[%s2589 + $0x10] sm:$0xf]
    %v2595 = vld [vmem:[%s2589 + $0x14] sm:$0xf]
    %v2596 = vld [vmem:[%s2589 + $0x18] sm:$0xf]
    %v2597 = vld [vmem:[%s2589 + $0x1c] sm:$0xf]
    %v2598 = vld [vmem:[%s2589 + $0x20] sm:$0xf]
    %v2599 = vld [vmem:[%s2589 + $0x24] sm:$0xf]
    %v2600 = vld [vmem:[%s2589 + $0x28] sm:$0xf]
    %v2601 = vld [vmem:[%s2589 + $0x2c] sm:$0xf]
    %v2602 = vld [vmem:[%s2589 + $0x30] sm:$0xf]
    %v2603 = vld [vmem:[%s2589 + $0x34] sm:$0xf]
    %v2604 = vld [vmem:[%s2589 + $0x38] sm:$0xf]
    %v2605 = vld [vmem:[%s2589 + $0x3c] sm:$0xf]
    %s2606 = scalar_lea.vmem %s19, 1
    %v2607 = vld [vmem:[%s2606] sm:$0x1]
    %v2609 = vperm.slane %v2607, 0
    %v2627 = vunpack.c.l.b16 %v2590
    %v2628 = vunpack.c.l.b16 %v2591
    %v2629 = vunpack.c.l.b16 %v2592
    %v2630 = vunpack.c.l.b16 %v2593
    %v2631 = vunpack.c.l.b16 %v2594
    %v2632 = vunpack.c.l.b16 %v2595
    %v2633 = vunpack.c.l.b16 %v2596
    %v2634 = vunpack.c.l.b16 %v2597
    %v2635 = vunpack.c.l.b16 %v2598
    %v2636 = vunpack.c.l.b16 %v2599
    %v2637 = vunpack.c.l.b16 %v2600
    %v2638 = vunpack.c.l.b16 %v2601
    %v2639 = vunpack.c.l.b16 %v2602
    %v2640 = vunpack.c.l.b16 %v2603
    %v2641 = vunpack.c.l.b16 %v2604
    %v2642 = vunpack.c.l.b16 %v2605
    %v2643 = vpack.c.b16 %v2628, %v2627
    %v2644 = vpack.c.b16 %v2630, %v2629
    %v2645 = vpack.c.b16 %v2632, %v2631
    %v2646 = vpack.c.b16 %v2634, %v2633
    %v2647 = vpack.c.b16 %v2636, %v2635
    %v2648 = vpack.c.b16 %v2638, %v2637
    %v2649 = vpack.c.b16 %v2640, %v2639
    %v2650 = vpack.c.b16 %v2642, %v2641
    %2659 = vmatpush.bf16.msra.mxu0 %v2650
    %2660 = vmatpush.bf16.msra.mxu0 %v2649
    %2661 = vmatpush.bf16.msra.mxu0 %v2648
    %2662 = vmatpush.bf16.msra.mxu0 %v2647
    %2663 = vmatpush.bf16.msra.mxu0 %v2646
    %2664 = vmatpush.bf16.msra.mxu0 %v2645
    %2665 = vmatpush.bf16.msra.mxu0 %v2644
    %2666 = vmatpush.bf16.msra.mxu0 %v2643
    %2667 = vmatmul.bf16.gmra.mxu0 %v2588
    %v2668 = vpop.f32.mrf.mxu0
    %v2669 = vadd.f32 %v2609, %v2668
    %v2670 = vpop.f32.mrf.mxu0
    %v2671 = vadd.f32 %v2609, %v2670
    %2672 = vdwg.mxu0
    %v2673 = vadd.f32 %v2476, %v2669
    %v2674 = vadd.f32 %v2477, %v2671
    %s2675 = scalar_lea.vmem %s24, 16
    %2676 = vst.msk [vmem:[%s2675] sm:$0xff] %vm103, %v2673
    %2677 = vst.msk [vmem:[%s2675 + $0x8] sm:$0xff] %vm103, %v2674
    %2678 = vst.msk [vmem:[%s23] sm:$0xff] %vm267, %v2474
    %2679 = vst.msk [vmem:[%s23 + $0x8] sm:$0xff] %vm267, %v2475
    %v2680 = vld [vmem:[%s20] sm:$0x1]
    %v2681 = vld [vmem:[%s21] sm:$0x1]
    %v2682 = vsel %vm103, %v2673, 0.0
    %2683 = vadd.xlane.f32.xlu0 %v2682
    %v2684 = vpop.xlane.xlu0 %2683
    %v2685 = vsel %vm103, %v2674, 0.0
    %2686 = vadd.xlane.f32.xlu0 %v2685
    %v2687 = vpop.xlane.xlu0 %2686
    %v2688 = vmul.f32 %v2684, %v116
    %v2689 = vmul.f32 %v2687, %v116
    %v2690 = vsub.f32 %v2673, %v2688
    %v2691 = vsub.f32 %v2674, %v2689
    %v2692 = vmul.f32 %v2690, %v2690
    %v2693 = vmul.f32 %v2691, %v2691
    %v2694 = vsel %vm103, %v2692, 0.0
    %2695 = vadd.xlane.f32.xlu0 %v2694
    %v2696 = vpop.xlane.xlu0 %2695
    %v2697 = vsel %vm103, %v2693, 0.0
    %2698 = vadd.xlane.f32.xlu0 %v2697
    %v2699 = vpop.xlane.xlu0 %2698
    %v2700 = vmul.f32 %v2696, %v116
    %v2701 = vmul.f32 %v2699, %v116
    %v2702 = vadd.f32 %v2700, 1e-05
    %v2703 = vadd.f32 %v2701, 1e-05
    %v2704 = vrsqrt.pop %v2702
    %v2705 = vmul.f32 %v2704, %v2702
    %v2706 = vmul.f32 %v2705, %v2704
    %v2707 = vmul.f32 0.5, %v2706
    %v2708 = vsub.f32 1.5, %v2707
    %v2709 = vmul.f32 %v2704, %v2708
    %vm2710 = vweird.f32 %v2702
    %vm2711 = vweird.f32 %v2704
    %vm2712 = vmor %vm2710, %vm2711
    %v2713 = vsel %vm2712, %v2704, %v2709
    %v2714 = vrsqrt.pop %v2703
    %v2715 = vmul.f32 %v2714, %v2703
    %v2716 = vmul.f32 %v2715, %v2714
    %v2717 = vmul.f32 0.5, %v2716
    %v2718 = vsub.f32 1.5, %v2717
    %v2719 = vmul.f32 %v2714, %v2718
    %vm2720 = vweird.f32 %v2703
    %vm2721 = vweird.f32 %v2714
    %vm2722 = vmor %vm2720, %vm2721
    %v2723 = vsel %vm2722, %v2714, %v2719
    %v2724 = vmul.f32 %v2690, %v2713
    %v2725 = vmul.f32 %v2691, %v2723
    %v2727 = vperm.slane %v2680, 0
    %v2729 = vmul.f32 %v2724, %v2727
    %v2730 = vmul.f32 %v2725, %v2727
    %v2732 = vperm.slane %v2681, 0
    %v2734 = vadd.f32 %v2729, %v2732
    %v2735 = vadd.f32 %v2730, %v2732
    %2736 = vst.msk [vmem:[#allocation5] sm:$0xff] %vm103, %v2734
    %2737 = vst.msk [vmem:[#allocation5 + $0x8] sm:$0xff] %vm103, %v2735
    // Predicated region
    $region94: #{multi_att_decoder.1} parent=1 // pred_check
      _
    $region95: #{multi_att_decoder.1} parent=1 // pred_check_branch
      %2739 = sbr.rel (0) target = $region97
    $region96: #{multi_att_decoder.1} parent=1 // pred_region
      %2741 = vsyncadd [#allocation4], 0
      %s2742 = sshll.u32 [#allocation5], 4
      %s2743 = int_to_ptr.vmem [resolvable:$true] %s2742
      %s2744 = sshll.u32 %s22, 4
      %s2745 = int_to_ptr.hbm [resolvable:$true] %s2744
      %2750 = dma.vmem_to_hbm [thread:$0]  %s2743, 256, %s2745, [#allocation4], 128, 128, 8
    $region97: #{multi_att_decoder.1} parent=1 // pred_fallthru
      _
    // Predicated region
    $region98: #{multi_att_decoder.1} parent=1 // pred_check
      _
    $region99: #{multi_att_decoder.1} parent=1 // pred_check_branch
      %2752 = sbr.rel (0) target = $region101
    $region100: #{multi_att_decoder.1} parent=1 // pred_region
      _
    $region101: #{multi_att_decoder.1} parent=1 // pred_fallthru
      _
    // Predicated region
    $region102: #{multi_att_decoder.1} parent=1 // pred_check
      _
    $region103: #{multi_att_decoder.1} parent=1 // pred_check_branch
      %2754 = sbr.rel (0) target = $region105
    $region104: #{multi_att_decoder.1} parent=1 // pred_region
      _
    $region105: #{multi_att_decoder.1} parent=1 // pred_fallthru
      _
    // Predicated region
    $region106: #{multi_att_decoder.1} parent=1 // pred_check
      _
    $region107: #{multi_att_decoder.1} parent=1 // pred_check_branch
      %2756 = sbr.rel (0) target = $region109
    $region108: #{multi_att_decoder.1} parent=1 // pred_region
      %2758 = dma.done [#allocation4], 256
    $region109: #{multi_att_decoder.1} parent=1 // pred_fallthru
      _
    // Predicated region
    $region110: #{multi_att_decoder.1} parent=1 // pred_check
      _
    $region111: #{multi_att_decoder.1} parent=1 // pred_check_branch
      %2760 = sbr.rel (0) target = $region113
    $region112: #{multi_att_decoder.1} parent=1 // pred_region
      _
    $region113: #{multi_att_decoder.1} parent=1 // pred_fallthru
      _
    // Predicated region
    $region114: #{multi_att_decoder.1} parent=1 // pred_check
      _
    $region115: #{multi_att_decoder.1} parent=1 // pred_check_branch
      %2762 = sbr.rel (0) target = $region117
    $region116: #{multi_att_decoder.1} parent=1 // pred_region
      _
    $region117: #{multi_att_decoder.1} parent=1 // pred_fallthru
      _
    %2763 = vsyncpa [#allocation3], 1
    %2764 = vsyncpa [#allocation4], 1

</llo_original>
